<compile_context>
chip_gen: v7x
topology: tpu7x:2x2x1
jax: 0.10.0
libtpu: 0.0.40
codegen_flags: <defaults>
</compile_context>

<pallas_src>
import jax
import jax.numpy as jnp
from jax import lax
from jax.experimental import pallas as pl
from jax.experimental.pallas import tpu as pltpu


def _sigmoid(x):
    # Single EUP tanh push instead of exp + reciprocal.
    return 0.5 * (jnp.tanh(0.5 * x) + 1.0)


def _cell(pre_gates, h, c, whh, H):
    """One LSTM cell step. pre_gates already contains x@W_ih + b_ih + b_hh."""
    gates = pre_gates + jnp.dot(h.astype(whh.dtype), whh,
                                preferred_element_type=jnp.float32)
    i = _sigmoid(gates[:, 0 * H:1 * H])
    f = _sigmoid(gates[:, 1 * H:2 * H])
    g = jnp.tanh(gates[:, 2 * H:3 * H])
    o = _sigmoid(gates[:, 3 * H:4 * H])
    c_new = f * c + i * g
    h_new = o * jnp.tanh(c_new)
    return h_new, c_new


def bilstm_recurrence_kernel(gf_ref, gb_ref,          # (Tt, B, 4H) gate chunks
                             whhf_ref, whhb_ref,      # (H, 4H) bf16 recurrent W
                             fcwb_ref, fcwf_ref,      # (H, C)  bf16 fc halves
                             fcb_ref,                 # (B, C)  f32 fc bias
                             out_ref,                 # (B, C)  f32 logits
                             h_f, c_f, h_b, c_b):     # VMEM scratch (B, H) f32
    t = pl.program_id(0)
    n_chunks = pl.num_programs(0)
    Tt = gf_ref.shape[0]
    H = h_f.shape[1]

    @pl.when(t == 0)
    def _init():
        h_f[...] = jnp.zeros_like(h_f)
        c_f[...] = jnp.zeros_like(c_f)
        h_b[...] = jnp.zeros_like(h_b)
        c_b[...] = jnp.zeros_like(c_b)

    whh_f = whhf_ref[...]
    whh_b = whhb_ref[...]

    def step(k, carry):
        # Forward direction: time index t*Tt + k.
        hf, cf = _cell(gf_ref[k], h_f[...], c_f[...], whh_f, H)
        h_f[...] = hf
        c_f[...] = cf
        # Backward direction: gb_ref holds chunk (n_chunks-1-t); walk it in
        # reverse so the overall order is T-1 .. 0.
        hb, cb = _cell(gb_ref[Tt - 1 - k], h_b[...], c_b[...], whh_b, H)
        h_b[...] = hb
        c_b[...] = cb
        return carry

    # Fully unrolled: lets the scheduler interleave the two independent
    # directions' MXU pushes and EUP transcendentals.
    lax.fori_loop(0, Tt, step, 0, unroll=True)

    @pl.when(t == n_chunks - 1)
    def _finalize():
        acc = jnp.dot(h_b[...].astype(fcwb_ref.dtype), fcwb_ref[...],
                      preferred_element_type=jnp.float32)
        acc = acc + jnp.dot(h_f[...].astype(fcwf_ref.dtype), fcwf_ref[...],
                            preferred_element_type=jnp.float32)
        out_ref[...] = acc + fcb_ref[...]


def _round_up(n, m):
    return ((n + m - 1) // m) * m


def _pad_gate_matrix(w, H, Hp):
    """(4H, H) torch-layout weight -> (Hp, 4Hp), each gate at a 128-aligned col."""
    wT = w.T  # (H, 4H), columns grouped [i | f | g | o]
    out = jnp.zeros((Hp, 4 * Hp), jnp.float32)
    for g in range(4):
        out = out.at[:H, g * Hp:g * Hp + H].set(wT[:, g * H:(g + 1) * H])
    return out


def _pad_gate_bias(b, H, Hp):
    out = jnp.zeros((4 * Hp,), jnp.float32)
    for g in range(4):
        out = out.at[g * Hp:g * Hp + H].set(b[g * H:(g + 1) * H])
    return out


def _pick_chunk(T, target=16):
    for c in range(min(target, T), 0, -1):
        if T % c == 0:
            return c
    return 1


def bilstm_forward(tokens, params, compute_dtype=jnp.bfloat16):
    """tokens: (B, T) int32. Returns logits (B, C) float32."""
    emb = params["embedding"]                        # (V, H)
    H = emb.shape[1]
    C = params["fc_b"].shape[0]
    B, T = tokens.shape

    Hp = _round_up(H, 128)
    Bp = _round_up(B, 8)
    Cp = _round_up(C, 128)

    # Time-major embedding lookup directly (no (B,T,H) transpose pass).
    x = jnp.take(emb, tokens.T, axis=0).astype(jnp.float32)      # (T, B, H)
    x = jnp.pad(x, ((0, 0), (0, Bp - B), (0, Hp - H)))           # (T, Bp, Hp)

    # Gate-aligned, lane-padded weights. Padded gate columns see zero weights
    # and zero bias -> padded h/c positions stay exactly zero through time.
    wih_f = _pad_gate_matrix(params["w_ih_f"], H, Hp)
    whh_f = _pad_gate_matrix(params["w_hh_f"], H, Hp).astype(compute_dtype)
    b_f = _pad_gate_bias(params["b_ih_f"] + params["b_hh_f"], H, Hp)
    wih_b = _pad_gate_matrix(params["w_ih_b"], H, Hp)
    whh_b = _pad_gate_matrix(params["w_hh_b"], H, Hp).astype(compute_dtype)
    b_b = _pad_gate_bias(params["b_ih_b"] + params["b_hh_b"], H, Hp)

    # Hoisted input projection: one large bf16 matmul per direction (XLA glue),
    # f32 accumulation, biases folded in once.
    xc = x.astype(compute_dtype)
    gf = jnp.einsum("tbh,hg->tbg", xc, wih_f.astype(compute_dtype),
                    preferred_element_type=jnp.float32) + b_f[None, None, :]
    gb = jnp.einsum("tbh,hg->tbg", xc, wih_b.astype(compute_dtype),
                    preferred_element_type=jnp.float32) + b_b[None, None, :]

    # Classifier, split so the kernel never lane-concats [h_b, h_f].
    fcw = params["fc_w"]                              # (C, 2H)
    fcw_b = jnp.zeros((Hp, Cp), jnp.float32).at[:H, :C].set(
        fcw[:, :H].T).astype(compute_dtype)           # multiplies h_backward
    fcw_f = jnp.zeros((Hp, Cp), jnp.float32).at[:H, :C].set(
        fcw[:, H:].T).astype(compute_dtype)           # multiplies h_forward
    fcb = jnp.zeros((Bp, Cp), jnp.float32).at[:, :C].set(params["fc_b"])

    Tt = _pick_chunk(T, 16)          # timesteps per grid step
    nT = T // Tt

    grid_spec = pltpu.PrefetchScalarGridSpec(
        num_scalar_prefetch=0,
        grid=(nT,),
        in_specs=[
            # Streamed, double-buffered gate-activation chunks.
            pl.BlockSpec((Tt, Bp, 4 * Hp), lambda t: (t, 0, 0)),
            pl.BlockSpec((Tt, Bp, 4 * Hp), lambda t: (nT - 1 - t, 0, 0)),
            # Resident weights.
            pl.BlockSpec((Hp, 4 * Hp), lambda t: (0, 0)),
            pl.BlockSpec((Hp, 4 * Hp), lambda t: (0, 0)),
            pl.BlockSpec((Hp, Cp), lambda t: (0, 0)),
            pl.BlockSpec((Hp, Cp), lambda t: (0, 0)),
            pl.BlockSpec((Bp, Cp), lambda t: (0, 0)),
        ],
        out_specs=pl.BlockSpec((Bp, Cp), lambda t: (0, 0)),
        scratch_shapes=[pltpu.VMEM((Bp, Hp), jnp.float32)] * 4,
    )

    out = pl.pallas_call(
        bilstm_recurrence_kernel,
        out_shape=jax.ShapeDtypeStruct((Bp, Cp), jnp.float32),
        grid_spec=grid_spec,
        compiler_params=pltpu.CompilerParams(
            dimension_semantics=("arbitrary",),        # serial recurrence
            vmem_limit_bytes=48 * 1024 * 1024,         # safe on v5e/v6e/v7x
        ),
    )(gf, gb, whh_f, whh_b, fcw_b, fcw_f, fcb)
    return out[:B, :C]


def bilstm_reference(tokens, params, compute_dtype=jnp.float32):
    """Pure-JAX reference matching torch.nn.LSTM semantics.

    compute_dtype=float32 -> exact f32 semantics; bfloat16 -> matches the
    kernel's matmul-operand precision for tight validation."""
    emb = params["embedding"]
    H = emb.shape[1]
    cd = compute_dtype
    x = jnp.take(emb, tokens, axis=0).astype(jnp.float32)        # (B, T, H)
    x_tm = jnp.transpose(x, (1, 0, 2))                           # (T, B, H)

    def run_dir(xs_tm, w_ih, w_hh, b_ih, b_hh):
        T, B, _ = xs_tm.shape
        pre = jnp.einsum("tbh,gh->tbg", xs_tm.astype(cd), w_ih.astype(cd),
                         preferred_element_type=jnp.float32) + (b_ih + b_hh)
        h0 = jnp.zeros((B, H), jnp.float32)
        c0 = jnp.zeros((B, H), jnp.float32)

        def step(carry, g_t):
            h, c = carry
            gates = g_t + jnp.dot(h.astype(cd), w_hh.T.astype(cd),
                                  preferred_element_type=jnp.float32)
            i = _sigmoid(gates[:, 0:H])
            f = _sigmoid(gates[:, H:2 * H])
            g = jnp.tanh(gates[:, 2 * H:3 * H])
            o = _sigmoid(gates[:, 3 * H:4 * H])
            c = f * c + i * g
            h = o * jnp.tanh(c)
            return (h, c), None

        (h, _), _ = lax.scan(step, (h0, c0), pre)
        return h

    h_fwd = run_dir(x_tm, params["w_ih_f"], params["w_hh_f"],
                    params["b_ih_f"], params["b_hh_f"])
    h_bwd = run_dir(x_tm[::-1], params["w_ih_b"], params["w_hh_b"],
                    params["b_ih_b"], params["b_hh_b"])
    fcw = params["fc_w"]
    out = (jnp.dot(h_bwd.astype(cd), fcw[:, :H].T.astype(cd),
                   preferred_element_type=jnp.float32)
           + jnp.dot(h_fwd.astype(cd), fcw[:, H:].T.astype(cd),
                     preferred_element_type=jnp.float32)
           + params["fc_b"])
    return out


def init_params(key, vocab, hidden, num_class):
    ks = jax.random.split(key, 12)
    H = hidden
    s = 1.0 / jnp.sqrt(H)
    emb = jax.random.normal(ks[0], (vocab, H), jnp.float32) * 0.1
    emb = emb.at[0].set(0.0)  # padding_idx=0
    u = lambda k, shape: jax.random.uniform(k, shape, jnp.float32, -s, s)
    return {
        "embedding": emb,
        "w_ih_f": u(ks[1], (4 * H, H)), "w_hh_f": u(ks[2], (4 * H, H)),
        "b_ih_f": u(ks[3], (4 * H,)),   "b_hh_f": u(ks[4], (4 * H,)),
        "w_ih_b": u(ks[5], (4 * H, H)), "w_hh_b": u(ks[6], (4 * H, H)),
        "b_ih_b": u(ks[7], (4 * H,)),   "b_hh_b": u(ks[8], (4 * H,)),
        "fc_w": u(ks[9], (num_class, 2 * H)),
        "fc_b": u(ks[10], (num_class,)),
    }


if __name__ == "__main__":
    B, T, V, H, C = 2, 8, 50, 32, 4
    key = jax.random.PRNGKey(0)
    kp, kt = jax.random.split(key)
    params = init_params(kp, V, H, C)
    tokens = jax.random.randint(kt, (B, T), 0, V, dtype=jnp.int32)

    fwd = jax.jit(bilstm_forward)
    logits = jax.block_until_ready(fwd(tokens, params))
    assert logits.shape == (B, C)

    # Tight check against a reference using the same (bf16-operand) precision,
    # loose check against the exact f32 PyTorch-semantics reference.
    ref_matched = bilstm_reference(tokens, params, jnp.bfloat16)
    ref_f32 = bilstm_reference(tokens, params, jnp.float32)
    assert jnp.allclose(logits, ref_matched, atol=1e-3, rtol=1e-3), (
        logits, ref_matched)
    assert jnp.allclose(logits, ref_f32, atol=5e-2, rtol=5e-2), (
        logits, ref_f32)

    print("KERNEL_OK")
</pallas_src>

<mosaic_0001>
module attributes {stable_mosaic.version = 11 : i64} {
  func.func @bilstm_recurrence_kernel(%arg0: i32, %arg1: memref<8x8x512xf32, #tpu.memory_space<vmem>>, %arg2: memref<8x8x512xf32, #tpu.memory_space<vmem>>, %arg3: memref<128x512xbf16, #tpu.memory_space<vmem>>, %arg4: memref<128x512xbf16, #tpu.memory_space<vmem>>, %arg5: memref<128x128xbf16, #tpu.memory_space<vmem>>, %arg6: memref<128x128xbf16, #tpu.memory_space<vmem>>, %arg7: memref<8x128xf32, #tpu.memory_space<vmem>>, %arg8: memref<8x128xf32, #tpu.memory_space<vmem>>, %arg9: memref<8x128xf32, #tpu.memory_space<vmem>>, %arg10: memref<8x128xf32, #tpu.memory_space<vmem>>, %arg11: memref<8x128xf32, #tpu.memory_space<vmem>>, %arg12: memref<8x128xf32, #tpu.memory_space<vmem>>) attributes {dimension_semantics = [#tpu.dimension_semantics<arbitrary>], iteration_bounds = array<i64: 1>, scalar_prefetch = 0 : i64, scratch_operands = 4 : i64, tpu.core_type = #tpu.core_type<tc>, window_params = [{transform_indices = @transform_0, window_bounds = array<i64: 8, 8, 512>}, {transform_indices = @transform_1, window_bounds = array<i64: 8, 8, 512>}, {pipeline_mode = #tpu.pipeline_mode<synchronous>, transform_indices = @transform_2, window_bounds = array<i64: 128, 512>}, {pipeline_mode = #tpu.pipeline_mode<synchronous>, transform_indices = @transform_3, window_bounds = array<i64: 128, 512>}, {pipeline_mode = #tpu.pipeline_mode<synchronous>, transform_indices = @transform_4, window_bounds = array<i64: 128, 128>}, {pipeline_mode = #tpu.pipeline_mode<synchronous>, transform_indices = @transform_5, window_bounds = array<i64: 128, 128>}, {pipeline_mode = #tpu.pipeline_mode<synchronous>, transform_indices = @transform_6, window_bounds = array<i64: 8, 128>}, {pipeline_mode = #tpu.pipeline_mode<synchronous>, transform_indices = @transform_7, window_bounds = array<i64: 8, 128>}]} {
    %c0_i32 = arith.constant 0 : i32
    %0 = arith.cmpi eq, %arg0, %c0_i32 : i32
    %1 = arith.extui %0 : i1 to i32
    %c0_i32_0 = arith.constant 0 : i32
    %2 = arith.cmpi ne, %1, %c0_i32_0 : i32
    scf.if %2 {
      %cst_334 = arith.constant 0.000000e+00 : f32
      %672 = vector.broadcast %cst_334 : f32 to vector<8x128xf32>
      %c0_335 = arith.constant 0 : index
      %c0_336 = arith.constant 0 : index
      %673 = vector.load %arg9[%c0_335, %c0_336] : memref<8x128xf32, #tpu.memory_space<vmem>>, vector<8x128xf32>
      tpu.vector_store %arg9[%c0_335, %c0_336], %672 {strides = array<i32>} : memref<8x128xf32, #tpu.memory_space<vmem>>, vector<8x128xf32>,
      %cst_337 = arith.constant 0.000000e+00 : f32
      %674 = vector.broadcast %cst_337 : f32 to vector<8x128xf32>
      %c0_338 = arith.constant 0 : index
      %c0_339 = arith.constant 0 : index
      %675 = vector.load %arg10[%c0_338, %c0_339] : memref<8x128xf32, #tpu.memory_space<vmem>>, vector<8x128xf32>
      tpu.vector_store %arg10[%c0_338, %c0_339], %674 {strides = array<i32>} : memref<8x128xf32, #tpu.memory_space<vmem>>, vector<8x128xf32>,
      %cst_340 = arith.constant 0.000000e+00 : f32
      %676 = vector.broadcast %cst_340 : f32 to vector<8x128xf32>
      %c0_341 = arith.constant 0 : index
      %c0_342 = arith.constant 0 : index
      %677 = vector.load %arg11[%c0_341, %c0_342] : memref<8x128xf32, #tpu.memory_space<vmem>>, vector<8x128xf32>
      tpu.vector_store %arg11[%c0_341, %c0_342], %676 {strides = array<i32>} : memref<8x128xf32, #tpu.memory_space<vmem>>, vector<8x128xf32>,
      %cst_343 = arith.constant 0.000000e+00 : f32
      %678 = vector.broadcast %cst_343 : f32 to vector<8x128xf32>
      %c0_344 = arith.constant 0 : index
      %c0_345 = arith.constant 0 : index
      %679 = vector.load %arg12[%c0_344, %c0_345] : memref<8x128xf32, #tpu.memory_space<vmem>>, vector<8x128xf32>
      tpu.vector_store %arg12[%c0_344, %c0_345], %678 {strides = array<i32>} : memref<8x128xf32, #tpu.memory_space<vmem>>, vector<8x128xf32>,
    } else {
    }
    %c0 = arith.constant 0 : index
    %c0_1 = arith.constant 0 : index
    %3 = vector.load %arg3[%c0, %c0_1] : memref<128x512xbf16, #tpu.memory_space<vmem>>, vector<128x512xbf16>
    %c0_2 = arith.constant 0 : index
    %c0_3 = arith.constant 0 : index
    %4 = vector.load %arg4[%c0_2, %c0_3] : memref<128x512xbf16, #tpu.memory_space<vmem>>, vector<128x512xbf16>
    %c0_i32_4 = arith.constant 0 : i32
    %5 = arith.index_cast %c0_i32_4 : i32 to index
    %c0_5 = arith.constant 0 : index
    %c0_6 = arith.constant 0 : index
    %6 = vector.load %arg1[%5, %c0_5, %c0_6] : memref<8x8x512xf32, #tpu.memory_space<vmem>>, vector<1x8x512xf32>
    %7 = vector.shape_cast %6 : vector<1x8x512xf32> to vector<8x512xf32>
    %c0_7 = arith.constant 0 : index
    %c0_8 = arith.constant 0 : index
    %8 = vector.load %arg9[%c0_7, %c0_8] : memref<8x128xf32, #tpu.memory_space<vmem>>, vector<8x128xf32>
    %c0_9 = arith.constant 0 : index
    %c0_10 = arith.constant 0 : index
    %9 = vector.load %arg10[%c0_9, %c0_10] : memref<8x128xf32, #tpu.memory_space<vmem>>, vector<8x128xf32>
    %10 = arith.truncf %8 : vector<8x128xf32> to vector<8x128xbf16>
    %cst = arith.constant dense<0.000000e+00> : vector<8x512xf32>
    %11 = tpu.matmul %10, %3, %cst {dimension_numbers = #tpu.dot_dimension_numbers<[1], [0], [0], [1], [0, 0, 1, 1], [], []>} : vector<8x128xbf16>, vector<128x512xbf16>, vector<8x512xf32> -> vector<8x512xf32>
    %12 = arith.addf %7, %11 : vector<8x512xf32>
    %13 = vector.extract_strided_slice %12 {offsets = [0, 0], sizes = [8, 128], strides = [1, 1]} : vector<8x512xf32> to vector<8x128xf32>
    %cst_11 = arith.constant 5.000000e-01 : f32
    %14 = vector.broadcast %cst_11 : f32 to vector<8x128xf32>
    %15 = arith.mulf %14, %13 : vector<8x128xf32>
    %16 = math.tanh %15 : vector<8x128xf32>
    %cst_12 = arith.constant 1.000000e+00 : f32
    %17 = vector.broadcast %cst_12 : f32 to vector<8x128xf32>
    %18 = arith.addf %16, %17 : vector<8x128xf32>
    %cst_13 = arith.constant 5.000000e-01 : f32
    %19 = vector.broadcast %cst_13 : f32 to vector<8x128xf32>
    %20 = arith.mulf %19, %18 : vector<8x128xf32>
    %21 = vector.extract_strided_slice %12 {offsets = [0, 128], sizes = [8, 128], strides = [1, 1]} : vector<8x512xf32> to vector<8x128xf32>
    %cst_14 = arith.constant 5.000000e-01 : f32
    %22 = vector.broadcast %cst_14 : f32 to vector<8x128xf32>
    %23 = arith.mulf %22, %21 : vector<8x128xf32>
    %24 = math.tanh %23 : vector<8x128xf32>
    %cst_15 = arith.constant 1.000000e+00 : f32
    %25 = vector.broadcast %cst_15 : f32 to vector<8x128xf32>
    %26 = arith.addf %24, %25 : vector<8x128xf32>
    %cst_16 = arith.constant 5.000000e-01 : f32
    %27 = vector.broadcast %cst_16 : f32 to vector<8x128xf32>
    %28 = arith.mulf %27, %26 : vector<8x128xf32>
    %29 = vector.extract_strided_slice %12 {offsets = [0, 256], sizes = [8, 128], strides = [1, 1]} : vector<8x512xf32> to vector<8x128xf32>
    %30 = math.tanh %29 : vector<8x128xf32>
    %31 = vector.extract_strided_slice %12 {offsets = [0, 384], sizes = [8, 128], strides = [1, 1]} : vector<8x512xf32> to vector<8x128xf32>
    %cst_17 = arith.constant 5.000000e-01 : f32
    %32 = vector.broadcast %cst_17 : f32 to vector<8x128xf32>
    %33 = arith.mulf %32, %31 : vector<8x128xf32>
    %34 = math.tanh %33 : vector<8x128xf32>
    %cst_18 = arith.constant 1.000000e+00 : f32
    %35 = vector.broadcast %cst_18 : f32 to vector<8x128xf32>
    %36 = arith.addf %34, %35 : vector<8x128xf32>
    %cst_19 = arith.constant 5.000000e-01 : f32
    %37 = vector.broadcast %cst_19 : f32 to vector<8x128xf32>
    %38 = arith.mulf %37, %36 : vector<8x128xf32>
    %39 = arith.mulf %28, %9 : vector<8x128xf32>
    %40 = arith.mulf %20, %30 : vector<8x128xf32>
    %41 = arith.addf %39, %40 : vector<8x128xf32>
    %42 = math.tanh %41 : vector<8x128xf32>
    %43 = arith.mulf %38, %42 : vector<8x128xf32>
    %c0_20 = arith.constant 0 : index
    %c0_21 = arith.constant 0 : index
    %44 = vector.load %arg9[%c0_20, %c0_21] : memref<8x128xf32, #tpu.memory_space<vmem>>, vector<8x128xf32>
    tpu.vector_store %arg9[%c0_20, %c0_21], %43 {strides = array<i32>} : memref<8x128xf32, #tpu.memory_space<vmem>>, vector<8x128xf32>,
    %c0_22 = arith.constant 0 : index
    %c0_23 = arith.constant 0 : index
    %45 = vector.load %arg10[%c0_22, %c0_23] : memref<8x128xf32, #tpu.memory_space<vmem>>, vector<8x128xf32>
    tpu.vector_store %arg10[%c0_22, %c0_23], %41 {strides = array<i32>} : memref<8x128xf32, #tpu.memory_space<vmem>>, vector<8x128xf32>,
    %c7_i32 = arith.constant 7 : i32
    %46 = arith.subi %c7_i32, %c0_i32_4 : i32
    %47 = arith.index_cast %46 : i32 to index
    %c0_24 = arith.constant 0 : index
    %c0_25 = arith.constant 0 : index
    %48 = vector.load %arg2[%47, %c0_24, %c0_25] : memref<8x8x512xf32, #tpu.memory_space<vmem>>, vector<1x8x512xf32>
    %49 = vector.shape_cast %48 : vector<1x8x512xf32> to vector<8x512xf32>
    %c0_26 = arith.constant 0 : index
    %c0_27 = arith.constant 0 : index
    %50 = vector.load %arg11[%c0_26, %c0_27] : memref<8x128xf32, #tpu.memory_space<vmem>>, vector<8x128xf32>
    %c0_28 = arith.constant 0 : index
    %c0_29 = arith.constant 0 : index
    %51 = vector.load %arg12[%c0_28, %c0_29] : memref<8x128xf32, #tpu.memory_space<vmem>>, vector<8x128xf32>
    %52 = arith.truncf %50 : vector<8x128xf32> to vector<8x128xbf16>
    %cst_30 = arith.constant dense<0.000000e+00> : vector<8x512xf32>
    %53 = tpu.matmul %52, %4, %cst_30 {dimension_numbers = #tpu.dot_dimension_numbers<[1], [0], [0], [1], [0, 0, 1, 1], [], []>} : vector<8x128xbf16>, vector<128x512xbf16>, vector<8x512xf32> -> vector<8x512xf32>
    %54 = arith.addf %49, %53 : vector<8x512xf32>
    %55 = vector.extract_strided_slice %54 {offsets = [0, 0], sizes = [8, 128], strides = [1, 1]} : vector<8x512xf32> to vector<8x128xf32>
    %cst_31 = arith.constant 5.000000e-01 : f32
    %56 = vector.broadcast %cst_31 : f32 to vector<8x128xf32>
    %57 = arith.mulf %56, %55 : vector<8x128xf32>
    %58 = math.tanh %57 : vector<8x128xf32>
    %cst_32 = arith.constant 1.000000e+00 : f32
    %59 = vector.broadcast %cst_32 : f32 to vector<8x128xf32>
    %60 = arith.addf %58, %59 : vector<8x128xf32>
    %cst_33 = arith.constant 5.000000e-01 : f32
    %61 = vector.broadcast %cst_33 : f32 to vector<8x128xf32>
    %62 = arith.mulf %61, %60 : vector<8x128xf32>
    %63 = vector.extract_strided_slice %54 {offsets = [0, 128], sizes = [8, 128], strides = [1, 1]} : vector<8x512xf32> to vector<8x128xf32>
    %cst_34 = arith.constant 5.000000e-01 : f32
    %64 = vector.broadcast %cst_34 : f32 to vector<8x128xf32>
    %65 = arith.mulf %64, %63 : vector<8x128xf32>
    %66 = math.tanh %65 : vector<8x128xf32>
    %cst_35 = arith.constant 1.000000e+00 : f32
    %67 = vector.broadcast %cst_35 : f32 to vector<8x128xf32>
    %68 = arith.addf %66, %67 : vector<8x128xf32>
    %cst_36 = arith.constant 5.000000e-01 : f32
    %69 = vector.broadcast %cst_36 : f32 to vector<8x128xf32>
    %70 = arith.mulf %69, %68 : vector<8x128xf32>
    %71 = vector.extract_strided_slice %54 {offsets = [0, 256], sizes = [8, 128], strides = [1, 1]} : vector<8x512xf32> to vector<8x128xf32>
    %72 = math.tanh %71 : vector<8x128xf32>
    %73 = vector.extract_strided_slice %54 {offsets = [0, 384], sizes = [8, 128], strides = [1, 1]} : vector<8x512xf32> to vector<8x128xf32>
    %cst_37 = arith.constant 5.000000e-01 : f32
    %74 = vector.broadcast %cst_37 : f32 to vector<8x128xf32>
    %75 = arith.mulf %74, %73 : vector<8x128xf32>
    %76 = math.tanh %75 : vector<8x128xf32>
    %cst_38 = arith.constant 1.000000e+00 : f32
    %77 = vector.broadcast %cst_38 : f32 to vector<8x128xf32>
    %78 = arith.addf %76, %77 : vector<8x128xf32>
    %cst_39 = arith.constant 5.000000e-01 : f32
    %79 = vector.broadcast %cst_39 : f32 to vector<8x128xf32>
    %80 = arith.mulf %79, %78 : vector<8x128xf32>
    %81 = arith.mulf %70, %51 : vector<8x128xf32>
    %82 = arith.mulf %62, %72 : vector<8x128xf32>
    %83 = arith.addf %81, %82 : vector<8x128xf32>
    %84 = math.tanh %83 : vector<8x128xf32>
    %85 = arith.mulf %80, %84 : vector<8x128xf32>
    %c0_40 = arith.constant 0 : index
    %c0_41 = arith.constant 0 : index
    %86 = vector.load %arg11[%c0_40, %c0_41] : memref<8x128xf32, #tpu.memory_space<vmem>>, vector<8x128xf32>
    tpu.vector_store %arg11[%c0_40, %c0_41], %85 {strides = array<i32>} : memref<8x128xf32, #tpu.memory_space<vmem>>, vector<8x128xf32>,
    %c0_42 = arith.constant 0 : index
    %c0_43 = arith.constant 0 : index
    %87 = vector.load %arg12[%c0_42, %c0_43] : memref<8x128xf32, #tpu.memory_space<vmem>>, vector<8x128xf32>
    tpu.vector_store %arg12[%c0_42, %c0_43], %83 {strides = array<i32>} : memref<8x128xf32, #tpu.memory_space<vmem>>, vector<8x128xf32>,
    %c1_i32 = arith.constant 1 : i32
    %88 = arith.index_cast %c1_i32 : i32 to index
    %c0_44 = arith.constant 0 : index
    %c0_45 = arith.constant 0 : index
    %89 = vector.load %arg1[%88, %c0_44, %c0_45] : memref<8x8x512xf32, #tpu.memory_space<vmem>>, vector<1x8x512xf32>
    %90 = vector.shape_cast %89 : vector<1x8x512xf32> to vector<8x512xf32>
    %c0_46 = arith.constant 0 : index
    %c0_47 = arith.constant 0 : index
    %91 = vector.load %arg9[%c0_46, %c0_47] : memref<8x128xf32, #tpu.memory_space<vmem>>, vector<8x128xf32>
    %c0_48 = arith.constant 0 : index
    %c0_49 = arith.constant 0 : index
    %92 = vector.load %arg10[%c0_48, %c0_49] : memref<8x128xf32, #tpu.memory_space<vmem>>, vector<8x128xf32>
    %93 = arith.truncf %91 : vector<8x128xf32> to vector<8x128xbf16>
    %cst_50 = arith.constant dense<0.000000e+00> : vector<8x512xf32>
    %94 = tpu.matmul %93, %3, %cst_50 {dimension_numbers = #tpu.dot_dimension_numbers<[1], [0], [0], [1], [0, 0, 1, 1], [], []>} : vector<8x128xbf16>, vector<128x512xbf16>, vector<8x512xf32> -> vector<8x512xf32>
    %95 = arith.addf %90, %94 : vector<8x512xf32>
    %96 = vector.extract_strided_slice %95 {offsets = [0, 0], sizes = [8, 128], strides = [1, 1]} : vector<8x512xf32> to vector<8x128xf32>
    %cst_51 = arith.constant 5.000000e-01 : f32
    %97 = vector.broadcast %cst_51 : f32 to vector<8x128xf32>
    %98 = arith.mulf %97, %96 : vector<8x128xf32>
    %99 = math.tanh %98 : vector<8x128xf32>
    %cst_52 = arith.constant 1.000000e+00 : f32
    %100 = vector.broadcast %cst_52 : f32 to vector<8x128xf32>
    %101 = arith.addf %99, %100 : vector<8x128xf32>
    %cst_53 = arith.constant 5.000000e-01 : f32
    %102 = vector.broadcast %cst_53 : f32 to vector<8x128xf32>
    %103 = arith.mulf %102, %101 : vector<8x128xf32>
    %104 = vector.extract_strided_slice %95 {offsets = [0, 128], sizes = [8, 128], strides = [1, 1]} : vector<8x512xf32> to vector<8x128xf32>
    %cst_54 = arith.constant 5.000000e-01 : f32
    %105 = vector.broadcast %cst_54 : f32 to vector<8x128xf32>
    %106 = arith.mulf %105, %104 : vector<8x128xf32>
    %107 = math.tanh %106 : vector<8x128xf32>
    %cst_55 = arith.constant 1.000000e+00 : f32
    %108 = vector.broadcast %cst_55 : f32 to vector<8x128xf32>
    %109 = arith.addf %107, %108 : vector<8x128xf32>
    %cst_56 = arith.constant 5.000000e-01 : f32
    %110 = vector.broadcast %cst_56 : f32 to vector<8x128xf32>
    %111 = arith.mulf %110, %109 : vector<8x128xf32>
    %112 = vector.extract_strided_slice %95 {offsets = [0, 256], sizes = [8, 128], strides = [1, 1]} : vector<8x512xf32> to vector<8x128xf32>
    %113 = math.tanh %112 : vector<8x128xf32>
    %114 = vector.extract_strided_slice %95 {offsets = [0, 384], sizes = [8, 128], strides = [1, 1]} : vector<8x512xf32> to vector<8x128xf32>
    %cst_57 = arith.constant 5.000000e-01 : f32
    %115 = vector.broadcast %cst_57 : f32 to vector<8x128xf32>
    %116 = arith.mulf %115, %114 : vector<8x128xf32>
    %117 = math.tanh %116 : vector<8x128xf32>
    %cst_58 = arith.constant 1.000000e+00 : f32
    %118 = vector.broadcast %cst_58 : f32 to vector<8x128xf32>
    %119 = arith.addf %117, %118 : vector<8x128xf32>
    %cst_59 = arith.constant 5.000000e-01 : f32
    %120 = vector.broadcast %cst_59 : f32 to vector<8x128xf32>
    %121 = arith.mulf %120, %119 : vector<8x128xf32>
    %122 = arith.mulf %111, %92 : vector<8x128xf32>
    %123 = arith.mulf %103, %113 : vector<8x128xf32>
    %124 = arith.addf %122, %123 : vector<8x128xf32>
    %125 = math.tanh %124 : vector<8x128xf32>
    %126 = arith.mulf %121, %125 : vector<8x128xf32>
    %c0_60 = arith.constant 0 : index
    %c0_61 = arith.constant 0 : index
    %127 = vector.load %arg9[%c0_60, %c0_61] : memref<8x128xf32, #tpu.memory_space<vmem>>, vector<8x128xf32>
    tpu.vector_store %arg9[%c0_60, %c0_61], %126 {strides = array<i32>} : memref<8x128xf32, #tpu.memory_space<vmem>>, vector<8x128xf32>,
    %c0_62 = arith.constant 0 : index
    %c0_63 = arith.constant 0 : index
    %128 = vector.load %arg10[%c0_62, %c0_63] : memref<8x128xf32, #tpu.memory_space<vmem>>, vector<8x128xf32>
    tpu.vector_store %arg10[%c0_62, %c0_63], %124 {strides = array<i32>} : memref<8x128xf32, #tpu.memory_space<vmem>>, vector<8x128xf32>,
    %c7_i32_64 = arith.constant 7 : i32
    %129 = arith.subi %c7_i32_64, %c1_i32 : i32
    %130 = arith.index_cast %129 : i32 to index
    %c0_65 = arith.constant 0 : index
    %c0_66 = arith.constant 0 : index
    %131 = vector.load %arg2[%130, %c0_65, %c0_66] : memref<8x8x512xf32, #tpu.memory_space<vmem>>, vector<1x8x512xf32>
    %132 = vector.shape_cast %131 : vector<1x8x512xf32> to vector<8x512xf32>
    %c0_67 = arith.constant 0 : index
    %c0_68 = arith.constant 0 : index
    %133 = vector.load %arg11[%c0_67, %c0_68] : memref<8x128xf32, #tpu.memory_space<vmem>>, vector<8x128xf32>
    %c0_69 = arith.constant 0 : index
    %c0_70 = arith.constant 0 : index
    %134 = vector.load %arg12[%c0_69, %c0_70] : memref<8x128xf32, #tpu.memory_space<vmem>>, vector<8x128xf32>
    %135 = arith.truncf %133 : vector<8x128xf32> to vector<8x128xbf16>
    %cst_71 = arith.constant dense<0.000000e+00> : vector<8x512xf32>
    %136 = tpu.matmul %135, %4, %cst_71 {dimension_numbers = #tpu.dot_dimension_numbers<[1], [0], [0], [1], [0, 0, 1, 1], [], []>} : vector<8x128xbf16>, vector<128x512xbf16>, vector<8x512xf32> -> vector<8x512xf32>
    %137 = arith.addf %132, %136 : vector<8x512xf32>
    %138 = vector.extract_strided_slice %137 {offsets = [0, 0], sizes = [8, 128], strides = [1, 1]} : vector<8x512xf32> to vector<8x128xf32>
    %cst_72 = arith.constant 5.000000e-01 : f32
    %139 = vector.broadcast %cst_72 : f32 to vector<8x128xf32>
    %140 = arith.mulf %139, %138 : vector<8x128xf32>
    %141 = math.tanh %140 : vector<8x128xf32>
    %cst_73 = arith.constant 1.000000e+00 : f32
    %142 = vector.broadcast %cst_73 : f32 to vector<8x128xf32>
    %143 = arith.addf %141, %142 : vector<8x128xf32>
    %cst_74 = arith.constant 5.000000e-01 : f32
    %144 = vector.broadcast %cst_74 : f32 to vector<8x128xf32>
    %145 = arith.mulf %144, %143 : vector<8x128xf32>
    %146 = vector.extract_strided_slice %137 {offsets = [0, 128], sizes = [8, 128], strides = [1, 1]} : vector<8x512xf32> to vector<8x128xf32>
    %cst_75 = arith.constant 5.000000e-01 : f32
    %147 = vector.broadcast %cst_75 : f32 to vector<8x128xf32>
    %148 = arith.mulf %147, %146 : vector<8x128xf32>
    %149 = math.tanh %148 : vector<8x128xf32>
    %cst_76 = arith.constant 1.000000e+00 : f32
    %150 = vector.broadcast %cst_76 : f32 to vector<8x128xf32>
    %151 = arith.addf %149, %150 : vector<8x128xf32>
    %cst_77 = arith.constant 5.000000e-01 : f32
    %152 = vector.broadcast %cst_77 : f32 to vector<8x128xf32>
    %153 = arith.mulf %152, %151 : vector<8x128xf32>
    %154 = vector.extract_strided_slice %137 {offsets = [0, 256], sizes = [8, 128], strides = [1, 1]} : vector<8x512xf32> to vector<8x128xf32>
    %155 = math.tanh %154 : vector<8x128xf32>
    %156 = vector.extract_strided_slice %137 {offsets = [0, 384], sizes = [8, 128], strides = [1, 1]} : vector<8x512xf32> to vector<8x128xf32>
    %cst_78 = arith.constant 5.000000e-01 : f32
    %157 = vector.broadcast %cst_78 : f32 to vector<8x128xf32>
    %158 = arith.mulf %157, %156 : vector<8x128xf32>
    %159 = math.tanh %158 : vector<8x128xf32>
    %cst_79 = arith.constant 1.000000e+00 : f32
    %160 = vector.broadcast %cst_79 : f32 to vector<8x128xf32>
    %161 = arith.addf %159, %160 : vector<8x128xf32>
    %cst_80 = arith.constant 5.000000e-01 : f32
    %162 = vector.broadcast %cst_80 : f32 to vector<8x128xf32>
    %163 = arith.mulf %162, %161 : vector<8x128xf32>
    %164 = arith.mulf %153, %134 : vector<8x128xf32>
    %165 = arith.mulf %145, %155 : vector<8x128xf32>
    %166 = arith.addf %164, %165 : vector<8x128xf32>
    %167 = math.tanh %166 : vector<8x128xf32>
    %168 = arith.mulf %163, %167 : vector<8x128xf32>
    %c0_81 = arith.constant 0 : index
    %c0_82 = arith.constant 0 : index
    %169 = vector.load %arg11[%c0_81, %c0_82] : memref<8x128xf32, #tpu.memory_space<vmem>>, vector<8x128xf32>
    tpu.vector_store %arg11[%c0_81, %c0_82], %168 {strides = array<i32>} : memref<8x128xf32, #tpu.memory_space<vmem>>, vector<8x128xf32>,
    %c0_83 = arith.constant 0 : index
    %c0_84 = arith.constant 0 : index
    %170 = vector.load %arg12[%c0_83, %c0_84] : memref<8x128xf32, #tpu.memory_space<vmem>>, vector<8x128xf32>
    tpu.vector_store %arg12[%c0_83, %c0_84], %166 {strides = array<i32>} : memref<8x128xf32, #tpu.memory_space<vmem>>, vector<8x128xf32>,
    %c2_i32 = arith.constant 2 : i32
    %171 = arith.index_cast %c2_i32 : i32 to index
    %c0_85 = arith.constant 0 : index
    %c0_86 = arith.constant 0 : index
    %172 = vector.load %arg1[%171, %c0_85, %c0_86] : memref<8x8x512xf32, #tpu.memory_space<vmem>>, vector<1x8x512xf32>
    %173 = vector.shape_cast %172 : vector<1x8x512xf32> to vector<8x512xf32>
    %c0_87 = arith.constant 0 : index
    %c0_88 = arith.constant 0 : index
    %174 = vector.load %arg9[%c0_87, %c0_88] : memref<8x128xf32, #tpu.memory_space<vmem>>, vector<8x128xf32>
    %c0_89 = arith.constant 0 : index
    %c0_90 = arith.constant 0 : index
    %175 = vector.load %arg10[%c0_89, %c0_90] : memref<8x128xf32, #tpu.memory_space<vmem>>, vector<8x128xf32>
    %176 = arith.truncf %174 : vector<8x128xf32> to vector<8x128xbf16>
    %cst_91 = arith.constant dense<0.000000e+00> : vector<8x512xf32>
    %177 = tpu.matmul %176, %3, %cst_91 {dimension_numbers = #tpu.dot_dimension_numbers<[1], [0], [0], [1], [0, 0, 1, 1], [], []>} : vector<8x128xbf16>, vector<128x512xbf16>, vector<8x512xf32> -> vector<8x512xf32>
    %178 = arith.addf %173, %177 : vector<8x512xf32>
    %179 = vector.extract_strided_slice %178 {offsets = [0, 0], sizes = [8, 128], strides = [1, 1]} : vector<8x512xf32> to vector<8x128xf32>
    %cst_92 = arith.constant 5.000000e-01 : f32
    %180 = vector.broadcast %cst_92 : f32 to vector<8x128xf32>
    %181 = arith.mulf %180, %179 : vector<8x128xf32>
    %182 = math.tanh %181 : vector<8x128xf32>
    %cst_93 = arith.constant 1.000000e+00 : f32
    %183 = vector.broadcast %cst_93 : f32 to vector<8x128xf32>
    %184 = arith.addf %182, %183 : vector<8x128xf32>
    %cst_94 = arith.constant 5.000000e-01 : f32
    %185 = vector.broadcast %cst_94 : f32 to vector<8x128xf32>
    %186 = arith.mulf %185, %184 : vector<8x128xf32>
    %187 = vector.extract_strided_slice %178 {offsets = [0, 128], sizes = [8, 128], strides = [1, 1]} : vector<8x512xf32> to vector<8x128xf32>
    %cst_95 = arith.constant 5.000000e-01 : f32
    %188 = vector.broadcast %cst_95 : f32 to vector<8x128xf32>
    %189 = arith.mulf %188, %187 : vector<8x128xf32>
    %190 = math.tanh %189 : vector<8x128xf32>
    %cst_96 = arith.constant 1.000000e+00 : f32
    %191 = vector.broadcast %cst_96 : f32 to vector<8x128xf32>
    %192 = arith.addf %190, %191 : vector<8x128xf32>
    %cst_97 = arith.constant 5.000000e-01 : f32
    %193 = vector.broadcast %cst_97 : f32 to vector<8x128xf32>
    %194 = arith.mulf %193, %192 : vector<8x128xf32>
    %195 = vector.extract_strided_slice %178 {offsets = [0, 256], sizes = [8, 128], strides = [1, 1]} : vector<8x512xf32> to vector<8x128xf32>
    %196 = math.tanh %195 : vector<8x128xf32>
    %197 = vector.extract_strided_slice %178 {offsets = [0, 384], sizes = [8, 128], strides = [1, 1]} : vector<8x512xf32> to vector<8x128xf32>
    %cst_98 = arith.constant 5.000000e-01 : f32
    %198 = vector.broadcast %cst_98 : f32 to vector<8x128xf32>
    %199 = arith.mulf %198, %197 : vector<8x128xf32>
    %200 = math.tanh %199 : vector<8x128xf32>
    %cst_99 = arith.constant 1.000000e+00 : f32
    %201 = vector.broadcast %cst_99 : f32 to vector<8x128xf32>
    %202 = arith.addf %200, %201 : vector<8x128xf32>
    %cst_100 = arith.constant 5.000000e-01 : f32
    %203 = vector.broadcast %cst_100 : f32 to vector<8x128xf32>
    %204 = arith.mulf %203, %202 : vector<8x128xf32>
    %205 = arith.mulf %194, %175 : vector<8x128xf32>
    %206 = arith.mulf %186, %196 : vector<8x128xf32>
    %207 = arith.addf %205, %206 : vector<8x128xf32>
    %208 = math.tanh %207 : vector<8x128xf32>
    %209 = arith.mulf %204, %208 : vector<8x128xf32>
    %c0_101 = arith.constant 0 : index
    %c0_102 = arith.constant 0 : index
    %210 = vector.load %arg9[%c0_101, %c0_102] : memref<8x128xf32, #tpu.memory_space<vmem>>, vector<8x128xf32>
    tpu.vector_store %arg9[%c0_101, %c0_102], %209 {strides = array<i32>} : memref<8x128xf32, #tpu.memory_space<vmem>>, vector<8x128xf32>,
    %c0_103 = arith.constant 0 : index
    %c0_104 = arith.constant 0 : index
    %211 = vector.load %arg10[%c0_103, %c0_104] : memref<8x128xf32, #tpu.memory_space<vmem>>, vector<8x128xf32>
    tpu.vector_store %arg10[%c0_103, %c0_104], %207 {strides = array<i32>} : memref<8x128xf32, #tpu.memory_space<vmem>>, vector<8x128xf32>,
    %c7_i32_105 = arith.constant 7 : i32
    %212 = arith.subi %c7_i32_105, %c2_i32 : i32
    %213 = arith.index_cast %212 : i32 to index
    %c0_106 = arith.constant 0 : index
    %c0_107 = arith.constant 0 : index
    %214 = vector.load %arg2[%213, %c0_106, %c0_107] : memref<8x8x512xf32, #tpu.memory_space<vmem>>, vector<1x8x512xf32>
    %215 = vector.shape_cast %214 : vector<1x8x512xf32> to vector<8x512xf32>
    %c0_108 = arith.constant 0 : index
    %c0_109 = arith.constant 0 : index
    %216 = vector.load %arg11[%c0_108, %c0_109] : memref<8x128xf32, #tpu.memory_space<vmem>>, vector<8x128xf32>
    %c0_110 = arith.constant 0 : index
    %c0_111 = arith.constant 0 : index
    %217 = vector.load %arg12[%c0_110, %c0_111] : memref<8x128xf32, #tpu.memory_space<vmem>>, vector<8x128xf32>
    %218 = arith.truncf %216 : vector<8x128xf32> to vector<8x128xbf16>
    %cst_112 = arith.constant dense<0.000000e+00> : vector<8x512xf32>
    %219 = tpu.matmul %218, %4, %cst_112 {dimension_numbers = #tpu.dot_dimension_numbers<[1], [0], [0], [1], [0, 0, 1, 1], [], []>} : vector<8x128xbf16>, vector<128x512xbf16>, vector<8x512xf32> -> vector<8x512xf32>
    %220 = arith.addf %215, %219 : vector<8x512xf32>
    %221 = vector.extract_strided_slice %220 {offsets = [0, 0], sizes = [8, 128], strides = [1, 1]} : vector<8x512xf32> to vector<8x128xf32>
    %cst_113 = arith.constant 5.000000e-01 : f32
    %222 = vector.broadcast %cst_113 : f32 to vector<8x128xf32>
    %223 = arith.mulf %222, %221 : vector<8x128xf32>
    %224 = math.tanh %223 : vector<8x128xf32>
    %cst_114 = arith.constant 1.000000e+00 : f32
    %225 = vector.broadcast %cst_114 : f32 to vector<8x128xf32>
    %226 = arith.addf %224, %225 : vector<8x128xf32>
    %cst_115 = arith.constant 5.000000e-01 : f32
    %227 = vector.broadcast %cst_115 : f32 to vector<8x128xf32>
    %228 = arith.mulf %227, %226 : vector<8x128xf32>
    %229 = vector.extract_strided_slice %220 {offsets = [0, 128], sizes = [8, 128], strides = [1, 1]} : vector<8x512xf32> to vector<8x128xf32>
    %cst_116 = arith.constant 5.000000e-01 : f32
    %230 = vector.broadcast %cst_116 : f32 to vector<8x128xf32>
    %231 = arith.mulf %230, %229 : vector<8x128xf32>
    %232 = math.tanh %231 : vector<8x128xf32>
    %cst_117 = arith.constant 1.000000e+00 : f32
    %233 = vector.broadcast %cst_117 : f32 to vector<8x128xf32>
    %234 = arith.addf %232, %233 : vector<8x128xf32>
    %cst_118 = arith.constant 5.000000e-01 : f32
    %235 = vector.broadcast %cst_118 : f32 to vector<8x128xf32>
    %236 = arith.mulf %235, %234 : vector<8x128xf32>
    %237 = vector.extract_strided_slice %220 {offsets = [0, 256], sizes = [8, 128], strides = [1, 1]} : vector<8x512xf32> to vector<8x128xf32>
    %238 = math.tanh %237 : vector<8x128xf32>
    %239 = vector.extract_strided_slice %220 {offsets = [0, 384], sizes = [8, 128], strides = [1, 1]} : vector<8x512xf32> to vector<8x128xf32>
    %cst_119 = arith.constant 5.000000e-01 : f32
    %240 = vector.broadcast %cst_119 : f32 to vector<8x128xf32>
    %241 = arith.mulf %240, %239 : vector<8x128xf32>
    %242 = math.tanh %241 : vector<8x128xf32>
    %cst_120 = arith.constant 1.000000e+00 : f32
    %243 = vector.broadcast %cst_120 : f32 to vector<8x128xf32>
    %244 = arith.addf %242, %243 : vector<8x128xf32>
    %cst_121 = arith.constant 5.000000e-01 : f32
    %245 = vector.broadcast %cst_121 : f32 to vector<8x128xf32>
    %246 = arith.mulf %245, %244 : vector<8x128xf32>
    %247 = arith.mulf %236, %217 : vector<8x128xf32>
    %248 = arith.mulf %228, %238 : vector<8x128xf32>
    %249 = arith.addf %247, %248 : vector<8x128xf32>
    %250 = math.tanh %249 : vector<8x128xf32>
    %251 = arith.mulf %246, %250 : vector<8x128xf32>
    %c0_122 = arith.constant 0 : index
    %c0_123 = arith.constant 0 : index
    %252 = vector.load %arg11[%c0_122, %c0_123] : memref<8x128xf32, #tpu.memory_space<vmem>>, vector<8x128xf32>
    tpu.vector_store %arg11[%c0_122, %c0_123], %251 {strides = array<i32>} : memref<8x128xf32, #tpu.memory_space<vmem>>, vector<8x128xf32>,
    %c0_124 = arith.constant 0 : index
    %c0_125 = arith.constant 0 : index
    %253 = vector.load %arg12[%c0_124, %c0_125] : memref<8x128xf32, #tpu.memory_space<vmem>>, vector<8x128xf32>
    tpu.vector_store %arg12[%c0_124, %c0_125], %249 {strides = array<i32>} : memref<8x128xf32, #tpu.memory_space<vmem>>, vector<8x128xf32>,
    %c3_i32 = arith.constant 3 : i32
    %254 = arith.index_cast %c3_i32 : i32 to index
    %c0_126 = arith.constant 0 : index
    %c0_127 = arith.constant 0 : index
    %255 = vector.load %arg1[%254, %c0_126, %c0_127] : memref<8x8x512xf32, #tpu.memory_space<vmem>>, vector<1x8x512xf32>
    %256 = vector.shape_cast %255 : vector<1x8x512xf32> to vector<8x512xf32>
    %c0_128 = arith.constant 0 : index
    %c0_129 = arith.constant 0 : index
    %257 = vector.load %arg9[%c0_128, %c0_129] : memref<8x128xf32, #tpu.memory_space<vmem>>, vector<8x128xf32>
    %c0_130 = arith.constant 0 : index
    %c0_131 = arith.constant 0 : index
    %258 = vector.load %arg10[%c0_130, %c0_131] : memref<8x128xf32, #tpu.memory_space<vmem>>, vector<8x128xf32>
    %259 = arith.truncf %257 : vector<8x128xf32> to vector<8x128xbf16>
    %cst_132 = arith.constant dense<0.000000e+00> : vector<8x512xf32>
    %260 = tpu.matmul %259, %3, %cst_132 {dimension_numbers = #tpu.dot_dimension_numbers<[1], [0], [0], [1], [0, 0, 1, 1], [], []>} : vector<8x128xbf16>, vector<128x512xbf16>, vector<8x512xf32> -> vector<8x512xf32>
    %261 = arith.addf %256, %260 : vector<8x512xf32>
    %262 = vector.extract_strided_slice %261 {offsets = [0, 0], sizes = [8, 128], strides = [1, 1]} : vector<8x512xf32> to vector<8x128xf32>
    %cst_133 = arith.constant 5.000000e-01 : f32
    %263 = vector.broadcast %cst_133 : f32 to vector<8x128xf32>
    %264 = arith.mulf %263, %262 : vector<8x128xf32>
    %265 = math.tanh %264 : vector<8x128xf32>
    %cst_134 = arith.constant 1.000000e+00 : f32
    %266 = vector.broadcast %cst_134 : f32 to vector<8x128xf32>
    %267 = arith.addf %265, %266 : vector<8x128xf32>
    %cst_135 = arith.constant 5.000000e-01 : f32
    %268 = vector.broadcast %cst_135 : f32 to vector<8x128xf32>
    %269 = arith.mulf %268, %267 : vector<8x128xf32>
    %270 = vector.extract_strided_slice %261 {offsets = [0, 128], sizes = [8, 128], strides = [1, 1]} : vector<8x512xf32> to vector<8x128xf32>
    %cst_136 = arith.constant 5.000000e-01 : f32
    %271 = vector.broadcast %cst_136 : f32 to vector<8x128xf32>
    %272 = arith.mulf %271, %270 : vector<8x128xf32>
    %273 = math.tanh %272 : vector<8x128xf32>
    %cst_137 = arith.constant 1.000000e+00 : f32
    %274 = vector.broadcast %cst_137 : f32 to vector<8x128xf32>
    %275 = arith.addf %273, %274 : vector<8x128xf32>
    %cst_138 = arith.constant 5.000000e-01 : f32
    %276 = vector.broadcast %cst_138 : f32 to vector<8x128xf32>
    %277 = arith.mulf %276, %275 : vector<8x128xf32>
    %278 = vector.extract_strided_slice %261 {offsets = [0, 256], sizes = [8, 128], strides = [1, 1]} : vector<8x512xf32> to vector<8x128xf32>
    %279 = math.tanh %278 : vector<8x128xf32>
    %280 = vector.extract_strided_slice %261 {offsets = [0, 384], sizes = [8, 128], strides = [1, 1]} : vector<8x512xf32> to vector<8x128xf32>
    %cst_139 = arith.constant 5.000000e-01 : f32
    %281 = vector.broadcast %cst_139 : f32 to vector<8x128xf32>
    %282 = arith.mulf %281, %280 : vector<8x128xf32>
    %283 = math.tanh %282 : vector<8x128xf32>
    %cst_140 = arith.constant 1.000000e+00 : f32
    %284 = vector.broadcast %cst_140 : f32 to vector<8x128xf32>
    %285 = arith.addf %283, %284 : vector<8x128xf32>
    %cst_141 = arith.constant 5.000000e-01 : f32
    %286 = vector.broadcast %cst_141 : f32 to vector<8x128xf32>
    %287 = arith.mulf %286, %285 : vector<8x128xf32>
    %288 = arith.mulf %277, %258 : vector<8x128xf32>
    %289 = arith.mulf %269, %279 : vector<8x128xf32>
    %290 = arith.addf %288, %289 : vector<8x128xf32>
    %291 = math.tanh %290 : vector<8x128xf32>
    %292 = arith.mulf %287, %291 : vector<8x128xf32>
    %c0_142 = arith.constant 0 : index
    %c0_143 = arith.constant 0 : index
    %293 = vector.load %arg9[%c0_142, %c0_143] : memref<8x128xf32, #tpu.memory_space<vmem>>, vector<8x128xf32>
    tpu.vector_store %arg9[%c0_142, %c0_143], %292 {strides = array<i32>} : memref<8x128xf32, #tpu.memory_space<vmem>>, vector<8x128xf32>,
    %c0_144 = arith.constant 0 : index
    %c0_145 = arith.constant 0 : index
    %294 = vector.load %arg10[%c0_144, %c0_145] : memref<8x128xf32, #tpu.memory_space<vmem>>, vector<8x128xf32>
    tpu.vector_store %arg10[%c0_144, %c0_145], %290 {strides = array<i32>} : memref<8x128xf32, #tpu.memory_space<vmem>>, vector<8x128xf32>,
    %c7_i32_146 = arith.constant 7 : i32
    %295 = arith.subi %c7_i32_146, %c3_i32 : i32
    %296 = arith.index_cast %295 : i32 to index
    %c0_147 = arith.constant 0 : index
    %c0_148 = arith.constant 0 : index
    %297 = vector.load %arg2[%296, %c0_147, %c0_148] : memref<8x8x512xf32, #tpu.memory_space<vmem>>, vector<1x8x512xf32>
    %298 = vector.shape_cast %297 : vector<1x8x512xf32> to vector<8x512xf32>
    %c0_149 = arith.constant 0 : index
    %c0_150 = arith.constant 0 : index
    %299 = vector.load %arg11[%c0_149, %c0_150] : memref<8x128xf32, #tpu.memory_space<vmem>>, vector<8x128xf32>
    %c0_151 = arith.constant 0 : index
    %c0_152 = arith.constant 0 : index
    %300 = vector.load %arg12[%c0_151, %c0_152] : memref<8x128xf32, #tpu.memory_space<vmem>>, vector<8x128xf32>
    %301 = arith.truncf %299 : vector<8x128xf32> to vector<8x128xbf16>
    %cst_153 = arith.constant dense<0.000000e+00> : vector<8x512xf32>
    %302 = tpu.matmul %301, %4, %cst_153 {dimension_numbers = #tpu.dot_dimension_numbers<[1], [0], [0], [1], [0, 0, 1, 1], [], []>} : vector<8x128xbf16>, vector<128x512xbf16>, vector<8x512xf32> -> vector<8x512xf32>
    %303 = arith.addf %298, %302 : vector<8x512xf32>
    %304 = vector.extract_strided_slice %303 {offsets = [0, 0], sizes = [8, 128], strides = [1, 1]} : vector<8x512xf32> to vector<8x128xf32>
    %cst_154 = arith.constant 5.000000e-01 : f32
    %305 = vector.broadcast %cst_154 : f32 to vector<8x128xf32>
    %306 = arith.mulf %305, %304 : vector<8x128xf32>
    %307 = math.tanh %306 : vector<8x128xf32>
    %cst_155 = arith.constant 1.000000e+00 : f32
    %308 = vector.broadcast %cst_155 : f32 to vector<8x128xf32>
    %309 = arith.addf %307, %308 : vector<8x128xf32>
    %cst_156 = arith.constant 5.000000e-01 : f32
    %310 = vector.broadcast %cst_156 : f32 to vector<8x128xf32>
    %311 = arith.mulf %310, %309 : vector<8x128xf32>
    %312 = vector.extract_strided_slice %303 {offsets = [0, 128], sizes = [8, 128], strides = [1, 1]} : vector<8x512xf32> to vector<8x128xf32>
    %cst_157 = arith.constant 5.000000e-01 : f32
    %313 = vector.broadcast %cst_157 : f32 to vector<8x128xf32>
    %314 = arith.mulf %313, %312 : vector<8x128xf32>
    %315 = math.tanh %314 : vector<8x128xf32>
    %cst_158 = arith.constant 1.000000e+00 : f32
    %316 = vector.broadcast %cst_158 : f32 to vector<8x128xf32>
    %317 = arith.addf %315, %316 : vector<8x128xf32>
    %cst_159 = arith.constant 5.000000e-01 : f32
    %318 = vector.broadcast %cst_159 : f32 to vector<8x128xf32>
    %319 = arith.mulf %318, %317 : vector<8x128xf32>
    %320 = vector.extract_strided_slice %303 {offsets = [0, 256], sizes = [8, 128], strides = [1, 1]} : vector<8x512xf32> to vector<8x128xf32>
    %321 = math.tanh %320 : vector<8x128xf32>
    %322 = vector.extract_strided_slice %303 {offsets = [0, 384], sizes = [8, 128], strides = [1, 1]} : vector<8x512xf32> to vector<8x128xf32>
    %cst_160 = arith.constant 5.000000e-01 : f32
    %323 = vector.broadcast %cst_160 : f32 to vector<8x128xf32>
    %324 = arith.mulf %323, %322 : vector<8x128xf32>
    %325 = math.tanh %324 : vector<8x128xf32>
    %cst_161 = arith.constant 1.000000e+00 : f32
    %326 = vector.broadcast %cst_161 : f32 to vector<8x128xf32>
    %327 = arith.addf %325, %326 : vector<8x128xf32>
    %cst_162 = arith.constant 5.000000e-01 : f32
    %328 = vector.broadcast %cst_162 : f32 to vector<8x128xf32>
    %329 = arith.mulf %328, %327 : vector<8x128xf32>
    %330 = arith.mulf %319, %300 : vector<8x128xf32>
    %331 = arith.mulf %311, %321 : vector<8x128xf32>
    %332 = arith.addf %330, %331 : vector<8x128xf32>
    %333 = math.tanh %332 : vector<8x128xf32>
    %334 = arith.mulf %329, %333 : vector<8x128xf32>
    %c0_163 = arith.constant 0 : index
    %c0_164 = arith.constant 0 : index
    %335 = vector.load %arg11[%c0_163, %c0_164] : memref<8x128xf32, #tpu.memory_space<vmem>>, vector<8x128xf32>
    tpu.vector_store %arg11[%c0_163, %c0_164], %334 {strides = array<i32>} : memref<8x128xf32, #tpu.memory_space<vmem>>, vector<8x128xf32>,
    %c0_165 = arith.constant 0 : index
    %c0_166 = arith.constant 0 : index
    %336 = vector.load %arg12[%c0_165, %c0_166] : memref<8x128xf32, #tpu.memory_space<vmem>>, vector<8x128xf32>
    tpu.vector_store %arg12[%c0_165, %c0_166], %332 {strides = array<i32>} : memref<8x128xf32, #tpu.memory_space<vmem>>, vector<8x128xf32>,
    %c4_i32 = arith.constant 4 : i32
    %337 = arith.index_cast %c4_i32 : i32 to index
    %c0_167 = arith.constant 0 : index
    %c0_168 = arith.constant 0 : index
    %338 = vector.load %arg1[%337, %c0_167, %c0_168] : memref<8x8x512xf32, #tpu.memory_space<vmem>>, vector<1x8x512xf32>
    %339 = vector.shape_cast %338 : vector<1x8x512xf32> to vector<8x512xf32>
    %c0_169 = arith.constant 0 : index
    %c0_170 = arith.constant 0 : index
    %340 = vector.load %arg9[%c0_169, %c0_170] : memref<8x128xf32, #tpu.memory_space<vmem>>, vector<8x128xf32>
    %c0_171 = arith.constant 0 : index
    %c0_172 = arith.constant 0 : index
    %341 = vector.load %arg10[%c0_171, %c0_172] : memref<8x128xf32, #tpu.memory_space<vmem>>, vector<8x128xf32>
    %342 = arith.truncf %340 : vector<8x128xf32> to vector<8x128xbf16>
    %cst_173 = arith.constant dense<0.000000e+00> : vector<8x512xf32>
    %343 = tpu.matmul %342, %3, %cst_173 {dimension_numbers = #tpu.dot_dimension_numbers<[1], [0], [0], [1], [0, 0, 1, 1], [], []>} : vector<8x128xbf16>, vector<128x512xbf16>, vector<8x512xf32> -> vector<8x512xf32>
    %344 = arith.addf %339, %343 : vector<8x512xf32>
    %345 = vector.extract_strided_slice %344 {offsets = [0, 0], sizes = [8, 128], strides = [1, 1]} : vector<8x512xf32> to vector<8x128xf32>
    %cst_174 = arith.constant 5.000000e-01 : f32
    %346 = vector.broadcast %cst_174 : f32 to vector<8x128xf32>
    %347 = arith.mulf %346, %345 : vector<8x128xf32>
    %348 = math.tanh %347 : vector<8x128xf32>
    %cst_175 = arith.constant 1.000000e+00 : f32
    %349 = vector.broadcast %cst_175 : f32 to vector<8x128xf32>
    %350 = arith.addf %348, %349 : vector<8x128xf32>
    %cst_176 = arith.constant 5.000000e-01 : f32
    %351 = vector.broadcast %cst_176 : f32 to vector<8x128xf32>
    %352 = arith.mulf %351, %350 : vector<8x128xf32>
    %353 = vector.extract_strided_slice %344 {offsets = [0, 128], sizes = [8, 128], strides = [1, 1]} : vector<8x512xf32> to vector<8x128xf32>
    %cst_177 = arith.constant 5.000000e-01 : f32
    %354 = vector.broadcast %cst_177 : f32 to vector<8x128xf32>
    %355 = arith.mulf %354, %353 : vector<8x128xf32>
    %356 = math.tanh %355 : vector<8x128xf32>
    %cst_178 = arith.constant 1.000000e+00 : f32
    %357 = vector.broadcast %cst_178 : f32 to vector<8x128xf32>
    %358 = arith.addf %356, %357 : vector<8x128xf32>
    %cst_179 = arith.constant 5.000000e-01 : f32
    %359 = vector.broadcast %cst_179 : f32 to vector<8x128xf32>
    %360 = arith.mulf %359, %358 : vector<8x128xf32>
    %361 = vector.extract_strided_slice %344 {offsets = [0, 256], sizes = [8, 128], strides = [1, 1]} : vector<8x512xf32> to vector<8x128xf32>
    %362 = math.tanh %361 : vector<8x128xf32>
    %363 = vector.extract_strided_slice %344 {offsets = [0, 384], sizes = [8, 128], strides = [1, 1]} : vector<8x512xf32> to vector<8x128xf32>
    %cst_180 = arith.constant 5.000000e-01 : f32
    %364 = vector.broadcast %cst_180 : f32 to vector<8x128xf32>
    %365 = arith.mulf %364, %363 : vector<8x128xf32>
    %366 = math.tanh %365 : vector<8x128xf32>
    %cst_181 = arith.constant 1.000000e+00 : f32
    %367 = vector.broadcast %cst_181 : f32 to vector<8x128xf32>
    %368 = arith.addf %366, %367 : vector<8x128xf32>
    %cst_182 = arith.constant 5.000000e-01 : f32
    %369 = vector.broadcast %cst_182 : f32 to vector<8x128xf32>
    %370 = arith.mulf %369, %368 : vector<8x128xf32>
    %371 = arith.mulf %360, %341 : vector<8x128xf32>
    %372 = arith.mulf %352, %362 : vector<8x128xf32>
    %373 = arith.addf %371, %372 : vector<8x128xf32>
    %374 = math.tanh %373 : vector<8x128xf32>
    %375 = arith.mulf %370, %374 : vector<8x128xf32>
    %c0_183 = arith.constant 0 : index
    %c0_184 = arith.constant 0 : index
    %376 = vector.load %arg9[%c0_183, %c0_184] : memref<8x128xf32, #tpu.memory_space<vmem>>, vector<8x128xf32>
    tpu.vector_store %arg9[%c0_183, %c0_184], %375 {strides = array<i32>} : memref<8x128xf32, #tpu.memory_space<vmem>>, vector<8x128xf32>,
    %c0_185 = arith.constant 0 : index
    %c0_186 = arith.constant 0 : index
    %377 = vector.load %arg10[%c0_185, %c0_186] : memref<8x128xf32, #tpu.memory_space<vmem>>, vector<8x128xf32>
    tpu.vector_store %arg10[%c0_185, %c0_186], %373 {strides = array<i32>} : memref<8x128xf32, #tpu.memory_space<vmem>>, vector<8x128xf32>,
    %c7_i32_187 = arith.constant 7 : i32
    %378 = arith.subi %c7_i32_187, %c4_i32 : i32
    %379 = arith.index_cast %378 : i32 to index
    %c0_188 = arith.constant 0 : index
    %c0_189 = arith.constant 0 : index
    %380 = vector.load %arg2[%379, %c0_188, %c0_189] : memref<8x8x512xf32, #tpu.memory_space<vmem>>, vector<1x8x512xf32>
    %381 = vector.shape_cast %380 : vector<1x8x512xf32> to vector<8x512xf32>
    %c0_190 = arith.constant 0 : index
    %c0_191 = arith.constant 0 : index
    %382 = vector.load %arg11[%c0_190, %c0_191] : memref<8x128xf32, #tpu.memory_space<vmem>>, vector<8x128xf32>
    %c0_192 = arith.constant 0 : index
    %c0_193 = arith.constant 0 : index
    %383 = vector.load %arg12[%c0_192, %c0_193] : memref<8x128xf32, #tpu.memory_space<vmem>>, vector<8x128xf32>
    %384 = arith.truncf %382 : vector<8x128xf32> to vector<8x128xbf16>
    %cst_194 = arith.constant dense<0.000000e+00> : vector<8x512xf32>
    %385 = tpu.matmul %384, %4, %cst_194 {dimension_numbers = #tpu.dot_dimension_numbers<[1], [0], [0], [1], [0, 0, 1, 1], [], []>} : vector<8x128xbf16>, vector<128x512xbf16>, vector<8x512xf32> -> vector<8x512xf32>
    %386 = arith.addf %381, %385 : vector<8x512xf32>
    %387 = vector.extract_strided_slice %386 {offsets = [0, 0], sizes = [8, 128], strides = [1, 1]} : vector<8x512xf32> to vector<8x128xf32>
    %cst_195 = arith.constant 5.000000e-01 : f32
    %388 = vector.broadcast %cst_195 : f32 to vector<8x128xf32>
    %389 = arith.mulf %388, %387 : vector<8x128xf32>
    %390 = math.tanh %389 : vector<8x128xf32>
    %cst_196 = arith.constant 1.000000e+00 : f32
    %391 = vector.broadcast %cst_196 : f32 to vector<8x128xf32>
    %392 = arith.addf %390, %391 : vector<8x128xf32>
    %cst_197 = arith.constant 5.000000e-01 : f32
    %393 = vector.broadcast %cst_197 : f32 to vector<8x128xf32>
    %394 = arith.mulf %393, %392 : vector<8x128xf32>
    %395 = vector.extract_strided_slice %386 {offsets = [0, 128], sizes = [8, 128], strides = [1, 1]} : vector<8x512xf32> to vector<8x128xf32>
    %cst_198 = arith.constant 5.000000e-01 : f32
    %396 = vector.broadcast %cst_198 : f32 to vector<8x128xf32>
    %397 = arith.mulf %396, %395 : vector<8x128xf32>
    %398 = math.tanh %397 : vector<8x128xf32>
    %cst_199 = arith.constant 1.000000e+00 : f32
    %399 = vector.broadcast %cst_199 : f32 to vector<8x128xf32>
    %400 = arith.addf %398, %399 : vector<8x128xf32>
    %cst_200 = arith.constant 5.000000e-01 : f32
    %401 = vector.broadcast %cst_200 : f32 to vector<8x128xf32>
    %402 = arith.mulf %401, %400 : vector<8x128xf32>
    %403 = vector.extract_strided_slice %386 {offsets = [0, 256], sizes = [8, 128], strides = [1, 1]} : vector<8x512xf32> to vector<8x128xf32>
    %404 = math.tanh %403 : vector<8x128xf32>
    %405 = vector.extract_strided_slice %386 {offsets = [0, 384], sizes = [8, 128], strides = [1, 1]} : vector<8x512xf32> to vector<8x128xf32>
    %cst_201 = arith.constant 5.000000e-01 : f32
    %406 = vector.broadcast %cst_201 : f32 to vector<8x128xf32>
    %407 = arith.mulf %406, %405 : vector<8x128xf32>
    %408 = math.tanh %407 : vector<8x128xf32>
    %cst_202 = arith.constant 1.000000e+00 : f32
    %409 = vector.broadcast %cst_202 : f32 to vector<8x128xf32>
    %410 = arith.addf %408, %409 : vector<8x128xf32>
    %cst_203 = arith.constant 5.000000e-01 : f32
    %411 = vector.broadcast %cst_203 : f32 to vector<8x128xf32>
    %412 = arith.mulf %411, %410 : vector<8x128xf32>
    %413 = arith.mulf %402, %383 : vector<8x128xf32>
    %414 = arith.mulf %394, %404 : vector<8x128xf32>
    %415 = arith.addf %413, %414 : vector<8x128xf32>
    %416 = math.tanh %415 : vector<8x128xf32>
    %417 = arith.mulf %412, %416 : vector<8x128xf32>
    %c0_204 = arith.constant 0 : index
    %c0_205 = arith.constant 0 : index
    %418 = vector.load %arg11[%c0_204, %c0_205] : memref<8x128xf32, #tpu.memory_space<vmem>>, vector<8x128xf32>
    tpu.vector_store %arg11[%c0_204, %c0_205], %417 {strides = array<i32>} : memref<8x128xf32, #tpu.memory_space<vmem>>, vector<8x128xf32>,
    %c0_206 = arith.constant 0 : index
    %c0_207 = arith.constant 0 : index
    %419 = vector.load %arg12[%c0_206, %c0_207] : memref<8x128xf32, #tpu.memory_space<vmem>>, vector<8x128xf32>
    tpu.vector_store %arg12[%c0_206, %c0_207], %415 {strides = array<i32>} : memref<8x128xf32, #tpu.memory_space<vmem>>, vector<8x128xf32>,
    %c5_i32 = arith.constant 5 : i32
    %420 = arith.index_cast %c5_i32 : i32 to index
    %c0_208 = arith.constant 0 : index
    %c0_209 = arith.constant 0 : index
    %421 = vector.load %arg1[%420, %c0_208, %c0_209] : memref<8x8x512xf32, #tpu.memory_space<vmem>>, vector<1x8x512xf32>
    %422 = vector.shape_cast %421 : vector<1x8x512xf32> to vector<8x512xf32>
    %c0_210 = arith.constant 0 : index
    %c0_211 = arith.constant 0 : index
    %423 = vector.load %arg9[%c0_210, %c0_211] : memref<8x128xf32, #tpu.memory_space<vmem>>, vector<8x128xf32>
    %c0_212 = arith.constant 0 : index
    %c0_213 = arith.constant 0 : index
    %424 = vector.load %arg10[%c0_212, %c0_213] : memref<8x128xf32, #tpu.memory_space<vmem>>, vector<8x128xf32>
    %425 = arith.truncf %423 : vector<8x128xf32> to vector<8x128xbf16>
    %cst_214 = arith.constant dense<0.000000e+00> : vector<8x512xf32>
    %426 = tpu.matmul %425, %3, %cst_214 {dimension_numbers = #tpu.dot_dimension_numbers<[1], [0], [0], [1], [0, 0, 1, 1], [], []>} : vector<8x128xbf16>, vector<128x512xbf16>, vector<8x512xf32> -> vector<8x512xf32>
    %427 = arith.addf %422, %426 : vector<8x512xf32>
    %428 = vector.extract_strided_slice %427 {offsets = [0, 0], sizes = [8, 128], strides = [1, 1]} : vector<8x512xf32> to vector<8x128xf32>
    %cst_215 = arith.constant 5.000000e-01 : f32
    %429 = vector.broadcast %cst_215 : f32 to vector<8x128xf32>
    %430 = arith.mulf %429, %428 : vector<8x128xf32>
    %431 = math.tanh %430 : vector<8x128xf32>
    %cst_216 = arith.constant 1.000000e+00 : f32
    %432 = vector.broadcast %cst_216 : f32 to vector<8x128xf32>
    %433 = arith.addf %431, %432 : vector<8x128xf32>
    %cst_217 = arith.constant 5.000000e-01 : f32
    %434 = vector.broadcast %cst_217 : f32 to vector<8x128xf32>
    %435 = arith.mulf %434, %433 : vector<8x128xf32>
    %436 = vector.extract_strided_slice %427 {offsets = [0, 128], sizes = [8, 128], strides = [1, 1]} : vector<8x512xf32> to vector<8x128xf32>
    %cst_218 = arith.constant 5.000000e-01 : f32
    %437 = vector.broadcast %cst_218 : f32 to vector<8x128xf32>
    %438 = arith.mulf %437, %436 : vector<8x128xf32>
    %439 = math.tanh %438 : vector<8x128xf32>
    %cst_219 = arith.constant 1.000000e+00 : f32
    %440 = vector.broadcast %cst_219 : f32 to vector<8x128xf32>
    %441 = arith.addf %439, %440 : vector<8x128xf32>
    %cst_220 = arith.constant 5.000000e-01 : f32
    %442 = vector.broadcast %cst_220 : f32 to vector<8x128xf32>
    %443 = arith.mulf %442, %441 : vector<8x128xf32>
    %444 = vector.extract_strided_slice %427 {offsets = [0, 256], sizes = [8, 128], strides = [1, 1]} : vector<8x512xf32> to vector<8x128xf32>
    %445 = math.tanh %444 : vector<8x128xf32>
    %446 = vector.extract_strided_slice %427 {offsets = [0, 384], sizes = [8, 128], strides = [1, 1]} : vector<8x512xf32> to vector<8x128xf32>
    %cst_221 = arith.constant 5.000000e-01 : f32
    %447 = vector.broadcast %cst_221 : f32 to vector<8x128xf32>
    %448 = arith.mulf %447, %446 : vector<8x128xf32>
    %449 = math.tanh %448 : vector<8x128xf32>
    %cst_222 = arith.constant 1.000000e+00 : f32
    %450 = vector.broadcast %cst_222 : f32 to vector<8x128xf32>
    %451 = arith.addf %449, %450 : vector<8x128xf32>
    %cst_223 = arith.constant 5.000000e-01 : f32
    %452 = vector.broadcast %cst_223 : f32 to vector<8x128xf32>
    %453 = arith.mulf %452, %451 : vector<8x128xf32>
    %454 = arith.mulf %443, %424 : vector<8x128xf32>
    %455 = arith.mulf %435, %445 : vector<8x128xf32>
    %456 = arith.addf %454, %455 : vector<8x128xf32>
    %457 = math.tanh %456 : vector<8x128xf32>
    %458 = arith.mulf %453, %457 : vector<8x128xf32>
    %c0_224 = arith.constant 0 : index
    %c0_225 = arith.constant 0 : index
    %459 = vector.load %arg9[%c0_224, %c0_225] : memref<8x128xf32, #tpu.memory_space<vmem>>, vector<8x128xf32>
    tpu.vector_store %arg9[%c0_224, %c0_225], %458 {strides = array<i32>} : memref<8x128xf32, #tpu.memory_space<vmem>>, vector<8x128xf32>,
    %c0_226 = arith.constant 0 : index
    %c0_227 = arith.constant 0 : index
    %460 = vector.load %arg10[%c0_226, %c0_227] : memref<8x128xf32, #tpu.memory_space<vmem>>, vector<8x128xf32>
    tpu.vector_store %arg10[%c0_226, %c0_227], %456 {strides = array<i32>} : memref<8x128xf32, #tpu.memory_space<vmem>>, vector<8x128xf32>,
    %c7_i32_228 = arith.constant 7 : i32
    %461 = arith.subi %c7_i32_228, %c5_i32 : i32
    %462 = arith.index_cast %461 : i32 to index
    %c0_229 = arith.constant 0 : index
    %c0_230 = arith.constant 0 : index
    %463 = vector.load %arg2[%462, %c0_229, %c0_230] : memref<8x8x512xf32, #tpu.memory_space<vmem>>, vector<1x8x512xf32>
    %464 = vector.shape_cast %463 : vector<1x8x512xf32> to vector<8x512xf32>
    %c0_231 = arith.constant 0 : index
    %c0_232 = arith.constant 0 : index
    %465 = vector.load %arg11[%c0_231, %c0_232] : memref<8x128xf32, #tpu.memory_space<vmem>>, vector<8x128xf32>
    %c0_233 = arith.constant 0 : index
    %c0_234 = arith.constant 0 : index
    %466 = vector.load %arg12[%c0_233, %c0_234] : memref<8x128xf32, #tpu.memory_space<vmem>>, vector<8x128xf32>
    %467 = arith.truncf %465 : vector<8x128xf32> to vector<8x128xbf16>
    %cst_235 = arith.constant dense<0.000000e+00> : vector<8x512xf32>
    %468 = tpu.matmul %467, %4, %cst_235 {dimension_numbers = #tpu.dot_dimension_numbers<[1], [0], [0], [1], [0, 0, 1, 1], [], []>} : vector<8x128xbf16>, vector<128x512xbf16>, vector<8x512xf32> -> vector<8x512xf32>
    %469 = arith.addf %464, %468 : vector<8x512xf32>
    %470 = vector.extract_strided_slice %469 {offsets = [0, 0], sizes = [8, 128], strides = [1, 1]} : vector<8x512xf32> to vector<8x128xf32>
    %cst_236 = arith.constant 5.000000e-01 : f32
    %471 = vector.broadcast %cst_236 : f32 to vector<8x128xf32>
    %472 = arith.mulf %471, %470 : vector<8x128xf32>
    %473 = math.tanh %472 : vector<8x128xf32>
    %cst_237 = arith.constant 1.000000e+00 : f32
    %474 = vector.broadcast %cst_237 : f32 to vector<8x128xf32>
    %475 = arith.addf %473, %474 : vector<8x128xf32>
    %cst_238 = arith.constant 5.000000e-01 : f32
    %476 = vector.broadcast %cst_238 : f32 to vector<8x128xf32>
    %477 = arith.mulf %476, %475 : vector<8x128xf32>
    %478 = vector.extract_strided_slice %469 {offsets = [0, 128], sizes = [8, 128], strides = [1, 1]} : vector<8x512xf32> to vector<8x128xf32>
    %cst_239 = arith.constant 5.000000e-01 : f32
    %479 = vector.broadcast %cst_239 : f32 to vector<8x128xf32>
    %480 = arith.mulf %479, %478 : vector<8x128xf32>
    %481 = math.tanh %480 : vector<8x128xf32>
    %cst_240 = arith.constant 1.000000e+00 : f32
    %482 = vector.broadcast %cst_240 : f32 to vector<8x128xf32>
    %483 = arith.addf %481, %482 : vector<8x128xf32>
    %cst_241 = arith.constant 5.000000e-01 : f32
    %484 = vector.broadcast %cst_241 : f32 to vector<8x128xf32>
    %485 = arith.mulf %484, %483 : vector<8x128xf32>
    %486 = vector.extract_strided_slice %469 {offsets = [0, 256], sizes = [8, 128], strides = [1, 1]} : vector<8x512xf32> to vector<8x128xf32>
    %487 = math.tanh %486 : vector<8x128xf32>
    %488 = vector.extract_strided_slice %469 {offsets = [0, 384], sizes = [8, 128], strides = [1, 1]} : vector<8x512xf32> to vector<8x128xf32>
    %cst_242 = arith.constant 5.000000e-01 : f32
    %489 = vector.broadcast %cst_242 : f32 to vector<8x128xf32>
    %490 = arith.mulf %489, %488 : vector<8x128xf32>
    %491 = math.tanh %490 : vector<8x128xf32>
    %cst_243 = arith.constant 1.000000e+00 : f32
    %492 = vector.broadcast %cst_243 : f32 to vector<8x128xf32>
    %493 = arith.addf %491, %492 : vector<8x128xf32>
    %cst_244 = arith.constant 5.000000e-01 : f32
    %494 = vector.broadcast %cst_244 : f32 to vector<8x128xf32>
    %495 = arith.mulf %494, %493 : vector<8x128xf32>
    %496 = arith.mulf %485, %466 : vector<8x128xf32>
    %497 = arith.mulf %477, %487 : vector<8x128xf32>
    %498 = arith.addf %496, %497 : vector<8x128xf32>
    %499 = math.tanh %498 : vector<8x128xf32>
    %500 = arith.mulf %495, %499 : vector<8x128xf32>
    %c0_245 = arith.constant 0 : index
    %c0_246 = arith.constant 0 : index
    %501 = vector.load %arg11[%c0_245, %c0_246] : memref<8x128xf32, #tpu.memory_space<vmem>>, vector<8x128xf32>
    tpu.vector_store %arg11[%c0_245, %c0_246], %500 {strides = array<i32>} : memref<8x128xf32, #tpu.memory_space<vmem>>, vector<8x128xf32>,
    %c0_247 = arith.constant 0 : index
    %c0_248 = arith.constant 0 : index
    %502 = vector.load %arg12[%c0_247, %c0_248] : memref<8x128xf32, #tpu.memory_space<vmem>>, vector<8x128xf32>
    tpu.vector_store %arg12[%c0_247, %c0_248], %498 {strides = array<i32>} : memref<8x128xf32, #tpu.memory_space<vmem>>, vector<8x128xf32>,
    %c6_i32 = arith.constant 6 : i32
    %503 = arith.index_cast %c6_i32 : i32 to index
    %c0_249 = arith.constant 0 : index
    %c0_250 = arith.constant 0 : index
    %504 = vector.load %arg1[%503, %c0_249, %c0_250] : memref<8x8x512xf32, #tpu.memory_space<vmem>>, vector<1x8x512xf32>
    %505 = vector.shape_cast %504 : vector<1x8x512xf32> to vector<8x512xf32>
    %c0_251 = arith.constant 0 : index
    %c0_252 = arith.constant 0 : index
    %506 = vector.load %arg9[%c0_251, %c0_252] : memref<8x128xf32, #tpu.memory_space<vmem>>, vector<8x128xf32>
    %c0_253 = arith.constant 0 : index
    %c0_254 = arith.constant 0 : index
    %507 = vector.load %arg10[%c0_253, %c0_254] : memref<8x128xf32, #tpu.memory_space<vmem>>, vector<8x128xf32>
    %508 = arith.truncf %506 : vector<8x128xf32> to vector<8x128xbf16>
    %cst_255 = arith.constant dense<0.000000e+00> : vector<8x512xf32>
    %509 = tpu.matmul %508, %3, %cst_255 {dimension_numbers = #tpu.dot_dimension_numbers<[1], [0], [0], [1], [0, 0, 1, 1], [], []>} : vector<8x128xbf16>, vector<128x512xbf16>, vector<8x512xf32> -> vector<8x512xf32>
    %510 = arith.addf %505, %509 : vector<8x512xf32>
    %511 = vector.extract_strided_slice %510 {offsets = [0, 0], sizes = [8, 128], strides = [1, 1]} : vector<8x512xf32> to vector<8x128xf32>
    %cst_256 = arith.constant 5.000000e-01 : f32
    %512 = vector.broadcast %cst_256 : f32 to vector<8x128xf32>
    %513 = arith.mulf %512, %511 : vector<8x128xf32>
    %514 = math.tanh %513 : vector<8x128xf32>
    %cst_257 = arith.constant 1.000000e+00 : f32
    %515 = vector.broadcast %cst_257 : f32 to vector<8x128xf32>
    %516 = arith.addf %514, %515 : vector<8x128xf32>
    %cst_258 = arith.constant 5.000000e-01 : f32
    %517 = vector.broadcast %cst_258 : f32 to vector<8x128xf32>
    %518 = arith.mulf %517, %516 : vector<8x128xf32>
    %519 = vector.extract_strided_slice %510 {offsets = [0, 128], sizes = [8, 128], strides = [1, 1]} : vector<8x512xf32> to vector<8x128xf32>
    %cst_259 = arith.constant 5.000000e-01 : f32
    %520 = vector.broadcast %cst_259 : f32 to vector<8x128xf32>
    %521 = arith.mulf %520, %519 : vector<8x128xf32>
    %522 = math.tanh %521 : vector<8x128xf32>
    %cst_260 = arith.constant 1.000000e+00 : f32
    %523 = vector.broadcast %cst_260 : f32 to vector<8x128xf32>
    %524 = arith.addf %522, %523 : vector<8x128xf32>
    %cst_261 = arith.constant 5.000000e-01 : f32
    %525 = vector.broadcast %cst_261 : f32 to vector<8x128xf32>
    %526 = arith.mulf %525, %524 : vector<8x128xf32>
    %527 = vector.extract_strided_slice %510 {offsets = [0, 256], sizes = [8, 128], strides = [1, 1]} : vector<8x512xf32> to vector<8x128xf32>
    %528 = math.tanh %527 : vector<8x128xf32>
    %529 = vector.extract_strided_slice %510 {offsets = [0, 384], sizes = [8, 128], strides = [1, 1]} : vector<8x512xf32> to vector<8x128xf32>
    %cst_262 = arith.constant 5.000000e-01 : f32
    %530 = vector.broadcast %cst_262 : f32 to vector<8x128xf32>
    %531 = arith.mulf %530, %529 : vector<8x128xf32>
    %532 = math.tanh %531 : vector<8x128xf32>
    %cst_263 = arith.constant 1.000000e+00 : f32
    %533 = vector.broadcast %cst_263 : f32 to vector<8x128xf32>
    %534 = arith.addf %532, %533 : vector<8x128xf32>
    %cst_264 = arith.constant 5.000000e-01 : f32
    %535 = vector.broadcast %cst_264 : f32 to vector<8x128xf32>
    %536 = arith.mulf %535, %534 : vector<8x128xf32>
    %537 = arith.mulf %526, %507 : vector<8x128xf32>
    %538 = arith.mulf %518, %528 : vector<8x128xf32>
    %539 = arith.addf %537, %538 : vector<8x128xf32>
    %540 = math.tanh %539 : vector<8x128xf32>
    %541 = arith.mulf %536, %540 : vector<8x128xf32>
    %c0_265 = arith.constant 0 : index
    %c0_266 = arith.constant 0 : index
    %542 = vector.load %arg9[%c0_265, %c0_266] : memref<8x128xf32, #tpu.memory_space<vmem>>, vector<8x128xf32>
    tpu.vector_store %arg9[%c0_265, %c0_266], %541 {strides = array<i32>} : memref<8x128xf32, #tpu.memory_space<vmem>>, vector<8x128xf32>,
    %c0_267 = arith.constant 0 : index
    %c0_268 = arith.constant 0 : index
    %543 = vector.load %arg10[%c0_267, %c0_268] : memref<8x128xf32, #tpu.memory_space<vmem>>, vector<8x128xf32>
    tpu.vector_store %arg10[%c0_267, %c0_268], %539 {strides = array<i32>} : memref<8x128xf32, #tpu.memory_space<vmem>>, vector<8x128xf32>,
    %c7_i32_269 = arith.constant 7 : i32
    %544 = arith.subi %c7_i32_269, %c6_i32 : i32
    %545 = arith.index_cast %544 : i32 to index
    %c0_270 = arith.constant 0 : index
    %c0_271 = arith.constant 0 : index
    %546 = vector.load %arg2[%545, %c0_270, %c0_271] : memref<8x8x512xf32, #tpu.memory_space<vmem>>, vector<1x8x512xf32>
    %547 = vector.shape_cast %546 : vector<1x8x512xf32> to vector<8x512xf32>
    %c0_272 = arith.constant 0 : index
    %c0_273 = arith.constant 0 : index
    %548 = vector.load %arg11[%c0_272, %c0_273] : memref<8x128xf32, #tpu.memory_space<vmem>>, vector<8x128xf32>
    %c0_274 = arith.constant 0 : index
    %c0_275 = arith.constant 0 : index
    %549 = vector.load %arg12[%c0_274, %c0_275] : memref<8x128xf32, #tpu.memory_space<vmem>>, vector<8x128xf32>
    %550 = arith.truncf %548 : vector<8x128xf32> to vector<8x128xbf16>
    %cst_276 = arith.constant dense<0.000000e+00> : vector<8x512xf32>
    %551 = tpu.matmul %550, %4, %cst_276 {dimension_numbers = #tpu.dot_dimension_numbers<[1], [0], [0], [1], [0, 0, 1, 1], [], []>} : vector<8x128xbf16>, vector<128x512xbf16>, vector<8x512xf32> -> vector<8x512xf32>
    %552 = arith.addf %547, %551 : vector<8x512xf32>
    %553 = vector.extract_strided_slice %552 {offsets = [0, 0], sizes = [8, 128], strides = [1, 1]} : vector<8x512xf32> to vector<8x128xf32>
    %cst_277 = arith.constant 5.000000e-01 : f32
    %554 = vector.broadcast %cst_277 : f32 to vector<8x128xf32>
    %555 = arith.mulf %554, %553 : vector<8x128xf32>
    %556 = math.tanh %555 : vector<8x128xf32>
    %cst_278 = arith.constant 1.000000e+00 : f32
    %557 = vector.broadcast %cst_278 : f32 to vector<8x128xf32>
    %558 = arith.addf %556, %557 : vector<8x128xf32>
    %cst_279 = arith.constant 5.000000e-01 : f32
    %559 = vector.broadcast %cst_279 : f32 to vector<8x128xf32>
    %560 = arith.mulf %559, %558 : vector<8x128xf32>
    %561 = vector.extract_strided_slice %552 {offsets = [0, 128], sizes = [8, 128], strides = [1, 1]} : vector<8x512xf32> to vector<8x128xf32>
    %cst_280 = arith.constant 5.000000e-01 : f32
    %562 = vector.broadcast %cst_280 : f32 to vector<8x128xf32>
    %563 = arith.mulf %562, %561 : vector<8x128xf32>
    %564 = math.tanh %563 : vector<8x128xf32>
    %cst_281 = arith.constant 1.000000e+00 : f32
    %565 = vector.broadcast %cst_281 : f32 to vector<8x128xf32>
    %566 = arith.addf %564, %565 : vector<8x128xf32>
    %cst_282 = arith.constant 5.000000e-01 : f32
    %567 = vector.broadcast %cst_282 : f32 to vector<8x128xf32>
    %568 = arith.mulf %567, %566 : vector<8x128xf32>
    %569 = vector.extract_strided_slice %552 {offsets = [0, 256], sizes = [8, 128], strides = [1, 1]} : vector<8x512xf32> to vector<8x128xf32>
    %570 = math.tanh %569 : vector<8x128xf32>
    %571 = vector.extract_strided_slice %552 {offsets = [0, 384], sizes = [8, 128], strides = [1, 1]} : vector<8x512xf32> to vector<8x128xf32>
    %cst_283 = arith.constant 5.000000e-01 : f32
    %572 = vector.broadcast %cst_283 : f32 to vector<8x128xf32>
    %573 = arith.mulf %572, %571 : vector<8x128xf32>
    %574 = math.tanh %573 : vector<8x128xf32>
    %cst_284 = arith.constant 1.000000e+00 : f32
    %575 = vector.broadcast %cst_284 : f32 to vector<8x128xf32>
    %576 = arith.addf %574, %575 : vector<8x128xf32>
    %cst_285 = arith.constant 5.000000e-01 : f32
    %577 = vector.broadcast %cst_285 : f32 to vector<8x128xf32>
    %578 = arith.mulf %577, %576 : vector<8x128xf32>
    %579 = arith.mulf %568, %549 : vector<8x128xf32>
    %580 = arith.mulf %560, %570 : vector<8x128xf32>
    %581 = arith.addf %579, %580 : vector<8x128xf32>
    %582 = math.tanh %581 : vector<8x128xf32>
    %583 = arith.mulf %578, %582 : vector<8x128xf32>
    %c0_286 = arith.constant 0 : index
    %c0_287 = arith.constant 0 : index
    %584 = vector.load %arg11[%c0_286, %c0_287] : memref<8x128xf32, #tpu.memory_space<vmem>>, vector<8x128xf32>
    tpu.vector_store %arg11[%c0_286, %c0_287], %583 {strides = array<i32>} : memref<8x128xf32, #tpu.memory_space<vmem>>, vector<8x128xf32>,
    %c0_288 = arith.constant 0 : index
    %c0_289 = arith.constant 0 : index
    %585 = vector.load %arg12[%c0_288, %c0_289] : memref<8x128xf32, #tpu.memory_space<vmem>>, vector<8x128xf32>
    tpu.vector_store %arg12[%c0_288, %c0_289], %581 {strides = array<i32>} : memref<8x128xf32, #tpu.memory_space<vmem>>, vector<8x128xf32>,
    %c7_i32_290 = arith.constant 7 : i32
    %586 = arith.index_cast %c7_i32_290 : i32 to index
    %c0_291 = arith.constant 0 : index
    %c0_292 = arith.constant 0 : index
    %587 = vector.load %arg1[%586, %c0_291, %c0_292] : memref<8x8x512xf32, #tpu.memory_space<vmem>>, vector<1x8x512xf32>
    %588 = vector.shape_cast %587 : vector<1x8x512xf32> to vector<8x512xf32>
    %c0_293 = arith.constant 0 : index
    %c0_294 = arith.constant 0 : index
    %589 = vector.load %arg9[%c0_293, %c0_294] : memref<8x128xf32, #tpu.memory_space<vmem>>, vector<8x128xf32>
    %c0_295 = arith.constant 0 : index
    %c0_296 = arith.constant 0 : index
    %590 = vector.load %arg10[%c0_295, %c0_296] : memref<8x128xf32, #tpu.memory_space<vmem>>, vector<8x128xf32>
    %591 = arith.truncf %589 : vector<8x128xf32> to vector<8x128xbf16>
    %cst_297 = arith.constant dense<0.000000e+00> : vector<8x512xf32>
    %592 = tpu.matmul %591, %3, %cst_297 {dimension_numbers = #tpu.dot_dimension_numbers<[1], [0], [0], [1], [0, 0, 1, 1], [], []>} : vector<8x128xbf16>, vector<128x512xbf16>, vector<8x512xf32> -> vector<8x512xf32>
    %593 = arith.addf %588, %592 : vector<8x512xf32>
    %594 = vector.extract_strided_slice %593 {offsets = [0, 0], sizes = [8, 128], strides = [1, 1]} : vector<8x512xf32> to vector<8x128xf32>
    %cst_298 = arith.constant 5.000000e-01 : f32
    %595 = vector.broadcast %cst_298 : f32 to vector<8x128xf32>
    %596 = arith.mulf %595, %594 : vector<8x128xf32>
    %597 = math.tanh %596 : vector<8x128xf32>
    %cst_299 = arith.constant 1.000000e+00 : f32
    %598 = vector.broadcast %cst_299 : f32 to vector<8x128xf32>
    %599 = arith.addf %597, %598 : vector<8x128xf32>
    %cst_300 = arith.constant 5.000000e-01 : f32
    %600 = vector.broadcast %cst_300 : f32 to vector<8x128xf32>
    %601 = arith.mulf %600, %599 : vector<8x128xf32>
    %602 = vector.extract_strided_slice %593 {offsets = [0, 128], sizes = [8, 128], strides = [1, 1]} : vector<8x512xf32> to vector<8x128xf32>
    %cst_301 = arith.constant 5.000000e-01 : f32
    %603 = vector.broadcast %cst_301 : f32 to vector<8x128xf32>
    %604 = arith.mulf %603, %602 : vector<8x128xf32>
    %605 = math.tanh %604 : vector<8x128xf32>
    %cst_302 = arith.constant 1.000000e+00 : f32
    %606 = vector.broadcast %cst_302 : f32 to vector<8x128xf32>
    %607 = arith.addf %605, %606 : vector<8x128xf32>
    %cst_303 = arith.constant 5.000000e-01 : f32
    %608 = vector.broadcast %cst_303 : f32 to vector<8x128xf32>
    %609 = arith.mulf %608, %607 : vector<8x128xf32>
    %610 = vector.extract_strided_slice %593 {offsets = [0, 256], sizes = [8, 128], strides = [1, 1]} : vector<8x512xf32> to vector<8x128xf32>
    %611 = math.tanh %610 : vector<8x128xf32>
    %612 = vector.extract_strided_slice %593 {offsets = [0, 384], sizes = [8, 128], strides = [1, 1]} : vector<8x512xf32> to vector<8x128xf32>
    %cst_304 = arith.constant 5.000000e-01 : f32
    %613 = vector.broadcast %cst_304 : f32 to vector<8x128xf32>
    %614 = arith.mulf %613, %612 : vector<8x128xf32>
    %615 = math.tanh %614 : vector<8x128xf32>
    %cst_305 = arith.constant 1.000000e+00 : f32
    %616 = vector.broadcast %cst_305 : f32 to vector<8x128xf32>
    %617 = arith.addf %615, %616 : vector<8x128xf32>
    %cst_306 = arith.constant 5.000000e-01 : f32
    %618 = vector.broadcast %cst_306 : f32 to vector<8x128xf32>
    %619 = arith.mulf %618, %617 : vector<8x128xf32>
    %620 = arith.mulf %609, %590 : vector<8x128xf32>
    %621 = arith.mulf %601, %611 : vector<8x128xf32>
    %622 = arith.addf %620, %621 : vector<8x128xf32>
    %623 = math.tanh %622 : vector<8x128xf32>
    %624 = arith.mulf %619, %623 : vector<8x128xf32>
    %c0_307 = arith.constant 0 : index
    %c0_308 = arith.constant 0 : index
    %625 = vector.load %arg9[%c0_307, %c0_308] : memref<8x128xf32, #tpu.memory_space<vmem>>, vector<8x128xf32>
    tpu.vector_store %arg9[%c0_307, %c0_308], %624 {strides = array<i32>} : memref<8x128xf32, #tpu.memory_space<vmem>>, vector<8x128xf32>,
    %c0_309 = arith.constant 0 : index
    %c0_310 = arith.constant 0 : index
    %626 = vector.load %arg10[%c0_309, %c0_310] : memref<8x128xf32, #tpu.memory_space<vmem>>, vector<8x128xf32>
    tpu.vector_store %arg10[%c0_309, %c0_310], %622 {strides = array<i32>} : memref<8x128xf32, #tpu.memory_space<vmem>>, vector<8x128xf32>,
    %c7_i32_311 = arith.constant 7 : i32
    %627 = arith.subi %c7_i32_311, %c7_i32_290 : i32
    %628 = arith.index_cast %627 : i32 to index
    %c0_312 = arith.constant 0 : index
    %c0_313 = arith.constant 0 : index
    %629 = vector.load %arg2[%628, %c0_312, %c0_313] : memref<8x8x512xf32, #tpu.memory_space<vmem>>, vector<1x8x512xf32>
    %630 = vector.shape_cast %629 : vector<1x8x512xf32> to vector<8x512xf32>
    %c0_314 = arith.constant 0 : index
    %c0_315 = arith.constant 0 : index
    %631 = vector.load %arg11[%c0_314, %c0_315] : memref<8x128xf32, #tpu.memory_space<vmem>>, vector<8x128xf32>
    %c0_316 = arith.constant 0 : index
    %c0_317 = arith.constant 0 : index
    %632 = vector.load %arg12[%c0_316, %c0_317] : memref<8x128xf32, #tpu.memory_space<vmem>>, vector<8x128xf32>
    %633 = arith.truncf %631 : vector<8x128xf32> to vector<8x128xbf16>
    %cst_318 = arith.constant dense<0.000000e+00> : vector<8x512xf32>
    %634 = tpu.matmul %633, %4, %cst_318 {dimension_numbers = #tpu.dot_dimension_numbers<[1], [0], [0], [1], [0, 0, 1, 1], [], []>} : vector<8x128xbf16>, vector<128x512xbf16>, vector<8x512xf32> -> vector<8x512xf32>
    %635 = arith.addf %630, %634 : vector<8x512xf32>
    %636 = vector.extract_strided_slice %635 {offsets = [0, 0], sizes = [8, 128], strides = [1, 1]} : vector<8x512xf32> to vector<8x128xf32>
    %cst_319 = arith.constant 5.000000e-01 : f32
    %637 = vector.broadcast %cst_319 : f32 to vector<8x128xf32>
    %638 = arith.mulf %637, %636 : vector<8x128xf32>
    %639 = math.tanh %638 : vector<8x128xf32>
    %cst_320 = arith.constant 1.000000e+00 : f32
    %640 = vector.broadcast %cst_320 : f32 to vector<8x128xf32>
    %641 = arith.addf %639, %640 : vector<8x128xf32>
    %cst_321 = arith.constant 5.000000e-01 : f32
    %642 = vector.broadcast %cst_321 : f32 to vector<8x128xf32>
    %643 = arith.mulf %642, %641 : vector<8x128xf32>
    %644 = vector.extract_strided_slice %635 {offsets = [0, 128], sizes = [8, 128], strides = [1, 1]} : vector<8x512xf32> to vector<8x128xf32>
    %cst_322 = arith.constant 5.000000e-01 : f32
    %645 = vector.broadcast %cst_322 : f32 to vector<8x128xf32>
    %646 = arith.mulf %645, %644 : vector<8x128xf32>
    %647 = math.tanh %646 : vector<8x128xf32>
    %cst_323 = arith.constant 1.000000e+00 : f32
    %648 = vector.broadcast %cst_323 : f32 to vector<8x128xf32>
    %649 = arith.addf %647, %648 : vector<8x128xf32>
    %cst_324 = arith.constant 5.000000e-01 : f32
    %650 = vector.broadcast %cst_324 : f32 to vector<8x128xf32>
    %651 = arith.mulf %650, %649 : vector<8x128xf32>
    %652 = vector.extract_strided_slice %635 {offsets = [0, 256], sizes = [8, 128], strides = [1, 1]} : vector<8x512xf32> to vector<8x128xf32>
    %653 = math.tanh %652 : vector<8x128xf32>
    %654 = vector.extract_strided_slice %635 {offsets = [0, 384], sizes = [8, 128], strides = [1, 1]} : vector<8x512xf32> to vector<8x128xf32>
    %cst_325 = arith.constant 5.000000e-01 : f32
    %655 = vector.broadcast %cst_325 : f32 to vector<8x128xf32>
    %656 = arith.mulf %655, %654 : vector<8x128xf32>
    %657 = math.tanh %656 : vector<8x128xf32>
    %cst_326 = arith.constant 1.000000e+00 : f32
    %658 = vector.broadcast %cst_326 : f32 to vector<8x128xf32>
    %659 = arith.addf %657, %658 : vector<8x128xf32>
    %cst_327 = arith.constant 5.000000e-01 : f32
    %660 = vector.broadcast %cst_327 : f32 to vector<8x128xf32>
    %661 = arith.mulf %660, %659 : vector<8x128xf32>
    %662 = arith.mulf %651, %632 : vector<8x128xf32>
    %663 = arith.mulf %643, %653 : vector<8x128xf32>
    %664 = arith.addf %662, %663 : vector<8x128xf32>
    %665 = math.tanh %664 : vector<8x128xf32>
    %666 = arith.mulf %661, %665 : vector<8x128xf32>
    %c0_328 = arith.constant 0 : index
    %c0_329 = arith.constant 0 : index
    %667 = vector.load %arg11[%c0_328, %c0_329] : memref<8x128xf32, #tpu.memory_space<vmem>>, vector<8x128xf32>
    tpu.vector_store %arg11[%c0_328, %c0_329], %666 {strides = array<i32>} : memref<8x128xf32, #tpu.memory_space<vmem>>, vector<8x128xf32>,
    %c0_330 = arith.constant 0 : index
    %c0_331 = arith.constant 0 : index
    %668 = vector.load %arg12[%c0_330, %c0_331] : memref<8x128xf32, #tpu.memory_space<vmem>>, vector<8x128xf32>
    tpu.vector_store %arg12[%c0_330, %c0_331], %664 {strides = array<i32>} : memref<8x128xf32, #tpu.memory_space<vmem>>, vector<8x128xf32>,
    %c8_i32 = arith.constant 8 : i32
    %c0_i32_332 = arith.constant 0 : i32
    %669 = arith.cmpi eq, %arg0, %c0_i32_332 : i32
    %670 = arith.extui %669 : i1 to i32
    %c0_i32_333 = arith.constant 0 : i32
    %671 = arith.cmpi ne, %670, %c0_i32_333 : i32
    scf.if %671 {
      %c0_334 = arith.constant 0 : index
      %c0_335 = arith.constant 0 : index
      %672 = vector.load %arg11[%c0_334, %c0_335] : memref<8x128xf32, #tpu.memory_space<vmem>>, vector<8x128xf32>
      %673 = arith.truncf %672 : vector<8x128xf32> to vector<8x128xbf16>
      %c0_336 = arith.constant 0 : index
      %c0_337 = arith.constant 0 : index
      %674 = vector.load %arg5[%c0_336, %c0_337] : memref<128x128xbf16, #tpu.memory_space<vmem>>, vector<128x128xbf16>
      %cst_338 = arith.constant dense<0.000000e+00> : vector<8x128xf32>
      %675 = tpu.matmul %673, %674, %cst_338 {dimension_numbers = #tpu.dot_dimension_numbers<[1], [0], [0], [1], [0, 0, 1, 1], [], []>} : vector<8x128xbf16>, vector<128x128xbf16>, vector<8x128xf32> -> vector<8x128xf32>
      %c0_339 = arith.constant 0 : index
      %c0_340 = arith.constant 0 : index
      %676 = vector.load %arg9[%c0_339, %c0_340] : memref<8x128xf32, #tpu.memory_space<vmem>>, vector<8x128xf32>
      %677 = arith.truncf %676 : vector<8x128xf32> to vector<8x128xbf16>
      %c0_341 = arith.constant 0 : index
      %c0_342 = arith.constant 0 : index
      %678 = vector.load %arg6[%c0_341, %c0_342] : memref<128x128xbf16, #tpu.memory_space<vmem>>, vector<128x128xbf16>
      %cst_343 = arith.constant dense<0.000000e+00> : vector<8x128xf32>
      %679 = tpu.matmul %677, %678, %cst_343 {dimension_numbers = #tpu.dot_dimension_numbers<[1], [0], [0], [1], [0, 0, 1, 1], [], []>} : vector<8x128xbf16>, vector<128x128xbf16>, vector<8x128xf32> -> vector<8x128xf32>
      %680 = arith.addf %675, %679 : vector<8x128xf32>
      %c0_344 = arith.constant 0 : index
      %c0_345 = arith.constant 0 : index
      %681 = vector.load %arg7[%c0_344, %c0_345] : memref<8x128xf32, #tpu.memory_space<vmem>>, vector<8x128xf32>
      %682 = arith.addf %680, %681 : vector<8x128xf32>
      %c0_346 = arith.constant 0 : index
      %c0_347 = arith.constant 0 : index
      %683 = vector.load %arg8[%c0_346, %c0_347] : memref<8x128xf32, #tpu.memory_space<vmem>>, vector<8x128xf32>
      tpu.vector_store %arg8[%c0_346, %c0_347], %682 {strides = array<i32>} : memref<8x128xf32, #tpu.memory_space<vmem>>, vector<8x128xf32>,
    } else {
    }
    return
  }
  func.func @transform_0(%arg0: i32) -> (i32, i32, i32) {
    %c0_i32 = arith.constant 0 : i32
    %c0_i32_0 = arith.constant 0 : i32
    %c0_i32_1 = arith.constant 0 : i32
    return %arg0, %c0_i32, %c0_i32_0 : i32, i32, i32
  }
  func.func @transform_1(%arg0: i32) -> (i32, i32, i32) {
    %c0_i32 = arith.constant 0 : i32
    %0 = arith.subi %c0_i32, %arg0 : i32
    %c0_i32_0 = arith.constant 0 : i32
    %c0_i32_1 = arith.constant 0 : i32
    %c0_i32_2 = arith.constant 0 : i32
    return %0, %c0_i32_0, %c0_i32_1 : i32, i32, i32
  }
  func.func @transform_2(%arg0: i32) -> (i32, i32) {
    %c0_i32 = arith.constant 0 : i32
    %c0_i32_0 = arith.constant 0 : i32
    %c0_i32_1 = arith.constant 0 : i32
    return %c0_i32, %c0_i32_0 : i32, i32
  }
  func.func @transform_3(%arg0: i32) -> (i32, i32) {
    %c0_i32 = arith.constant 0 : i32
    %c0_i32_0 = arith.constant 0 : i32
    %c0_i32_1 = arith.constant 0 : i32
    return %c0_i32, %c0_i32_0 : i32, i32
  }
  func.func @transform_4(%arg0: i32) -> (i32, i32) {
    %c0_i32 = arith.constant 0 : i32
    %c0_i32_0 = arith.constant 0 : i32
    %c0_i32_1 = arith.constant 0 : i32
    return %c0_i32, %c0_i32_0 : i32, i32
  }
  func.func @transform_5(%arg0: i32) -> (i32, i32) {
    %c0_i32 = arith.constant 0 : i32
    %c0_i32_0 = arith.constant 0 : i32
    %c0_i32_1 = arith.constant 0 : i32
    return %c0_i32, %c0_i32_0 : i32, i32
  }
  func.func @transform_6(%arg0: i32) -> (i32, i32) {
    %c0_i32 = arith.constant 0 : i32
    %c0_i32_0 = arith.constant 0 : i32
    %c0_i32_1 = arith.constant 0 : i32
    return %c0_i32, %c0_i32_0 : i32, i32
  }
  func.func @transform_7(%arg0: i32) -> (i32, i32) {
    %c0_i32 = arith.constant 0 : i32
    %c0_i32_0 = arith.constant 0 : i32
    %c0_i32_1 = arith.constant 0 : i32
    return %c0_i32, %c0_i32_0 : i32, i32
  }
}

</mosaic_0001>

<llo_original>
// kernel: bilstm_forward.1
$region0: #{bilstm_forward.1}
  #allocation0 [shape = 'u32[]', space=smem, size = 0x4, offset = 0x4, fixed_abs, tag = 'smem constant byte address 0x4 - core index']
  #allocation1 [shape = 'u32[144,128]{1,0:T(1,128)}', space=vmem, size = 0x12000, scoped, tag = 'internal scratch']
  #allocation2 [shape = 'f32[8,128]{1,0:T(8,128)}', space=vmem, size = 0x1000, scoped, tag = 'scratch operand']
  #allocation3 [shape = 'f32[8,128]{1,0:T(8,128)}', space=vmem, size = 0x1000, scoped, tag = 'scratch operand']
  #allocation4 [shape = 'f32[8,128]{1,0:T(8,128)}', space=vmem, size = 0x1000, scoped, tag = 'scratch operand']
  #allocation5 [shape = 'f32[8,128]{1,0:T(8,128)}', space=vmem, size = 0x1000, scoped, tag = 'scratch operand']
  %s0 = inlined_call_operand.vmem [shape: f32[8,8,512], index: 0, kind: input, shape index: {}]
  %s1 = inlined_call_operand.vmem [shape: f32[8,8,512], index: 1, kind: input, shape index: {}]
  %s2 = inlined_call_operand.vmem [shape: bf16[128,512], index: 2, kind: input, shape index: {}]
  %s3 = inlined_call_operand.vmem [shape: bf16[128,512], index: 3, kind: input, shape index: {}]
  %s4 = inlined_call_operand.vmem [shape: bf16[128,128], index: 4, kind: input, shape index: {}]
  %s5 = inlined_call_operand.vmem [shape: bf16[128,128], index: 5, kind: input, shape index: {}]
  %s6 = inlined_call_operand.vmem [shape: f32[8,128], index: 6, kind: input, shape index: {}]
  %s7 = inlined_call_operand.vmem [shape: f32[8,128], index: 7, kind: output, shape index: {}]
  %s8 = sld [smem:[#allocation0]]
  $region46: #{bilstm_forward.1} parent=0
    _
  %s10 = ssub.s32 1, %s8
  %s11 = scalar_select 0, %s10, %s8
  // Predicated region
  $region2: #{bilstm_forward.1} parent=0 // pred_check
    _
  $region3: #{bilstm_forward.1} parent=0 // pred_check_branch
    %13 = sbr.rel (0) target = $region5
  $region4: #{bilstm_forward.1} parent=0 // pred_region
    _
  $region5: #{bilstm_forward.1} parent=0 // pred_fallthru
    _
  // Predicated region
  $region6: #{bilstm_forward.1} parent=0 // pred_check
    _
  $region7: #{bilstm_forward.1} parent=0 // pred_check_branch
    %15 = sbr.rel (0) target = $region9
  $region8: #{bilstm_forward.1} parent=0 // pred_region
    %s16 = ssub.s32 0, 0
    %s17 = smul.u32 8, %s16
    %p18 = scmp.lt.s32.totalorder %s17, 7
    %s19 = scalar_select %p18, %s17, 7
    %s20 = smul.addr %s19, 4
    %s21 = smul.addr %s20, 8
    %s22 = scalar_lea.vmem %s1, %s21
    %s23 = ssub.s32 0, 0
    %s24 = smul.u32 8, %s23
  $region9: #{bilstm_forward.1} parent=0 // pred_fallthru
    _
  // Predicated region
  $region10: #{bilstm_forward.1} parent=0 // pred_check
    _
  $region11: #{bilstm_forward.1} parent=0 // pred_check_branch
    %26 = sbr.rel (0) target = $region13
  $region12: #{bilstm_forward.1} parent=0 // pred_region
    _
  $region13: #{bilstm_forward.1} parent=0 // pred_fallthru
    _
  // Predicated region
  $region14: #{bilstm_forward.1} parent=0 // pred_check
    _
  $region15: #{bilstm_forward.1} parent=0 // pred_check_branch
    %28 = sbr.rel (0) target = $region17
  $region16: #{bilstm_forward.1} parent=0 // pred_region
    _
  $region17: #{bilstm_forward.1} parent=0 // pred_fallthru
    _
  // Predicated region
  $region18: #{bilstm_forward.1} parent=0 // pred_check
    _
  $region19: #{bilstm_forward.1} parent=0 // pred_check_branch
    %30 = sbr.rel (0) target = $region21
  $region20: #{bilstm_forward.1} parent=0 // pred_region
    _
  $region21: #{bilstm_forward.1} parent=0 // pred_fallthru
    _
  // Predicated region
  $region22: #{bilstm_forward.1} parent=0 // pred_check
    _
  $region23: #{bilstm_forward.1} parent=0 // pred_check_branch
    %32 = sbr.rel (0) target = $region25
  $region24: #{bilstm_forward.1} parent=0 // pred_region
    _
  $region25: #{bilstm_forward.1} parent=0 // pred_fallthru
    _
  // Predicated region
  $region26: #{bilstm_forward.1} parent=0 // pred_check
    _
  $region27: #{bilstm_forward.1} parent=0 // pred_check_branch
    %34 = sbr.rel (0) target = $region29
  $region28: #{bilstm_forward.1} parent=0 // pred_region
    _
  $region29: #{bilstm_forward.1} parent=0 // pred_fallthru
    _
  %s35 = ssub.s32 0, 0
  %s36 = smul.u32 8, %s35
  %p37 = scmp.lt.s32.totalorder %s36, 7
  %s38 = scalar_select %p37, %s36, 7
  %s39 = smul.addr %s38, 4
  %s40 = smul.addr %s39, 8
  %s41 = scalar_lea.vmem %s1, %s40
  %s42 = ssub.s32 0, 0
  %s43 = smul.u32 8, %s42
  %p44 = scmp.lt.s32.totalorder %s43, 7
  %s45 = scalar_select %p44, %s43, 7
  %s46 = smul.addr %s45, 4
  %s47 = smul.addr %s46, 8
  %s48 = scalar_lea.vmem %s1, %s47
  %s49 = ssub.s32 0, 0
  %s50 = smul.u32 8, %s49
  %p52 = scmp.eq.s32.totalorder 0, 0
  // Predicated region
  $region30: #{bilstm_forward.1} parent=0 // pred_check
    %p53 = pneg %p52
  $region31: #{bilstm_forward.1} parent=0 // pred_check_branch
    %55 = sbr.rel (%p53) target = $region33
  $region32: #{bilstm_forward.1} parent=0 // pred_region
    %56 = vst [vmem:[#allocation2] sm:$0xff] 0.0
    %57 = vst [vmem:[#allocation3] sm:$0xff] 0.0
    %58 = vst [vmem:[#allocation4] sm:$0xff] 0.0
    %59 = vst [vmem:[#allocation5] sm:$0xff] 0.0
  $region33: #{bilstm_forward.1} parent=0 // pred_fallthru
    _
  %v60 = vld [vmem:[%s2] sm:$0xff]
  %v61 = vld [vmem:[%s2 + $0x8] sm:$0xff]
  %v62 = vld [vmem:[%s2 + $0x10] sm:$0xff]
  %v63 = vld [vmem:[%s2 + $0x18] sm:$0xff]
  %v64 = vld [vmem:[%s2 + $0x20] sm:$0xff]
  %v65 = vld [vmem:[%s2 + $0x28] sm:$0xff]
  %v66 = vld [vmem:[%s2 + $0x30] sm:$0xff]
  %v67 = vld [vmem:[%s2 + $0x38] sm:$0xff]
  %v68 = vld [vmem:[%s2 + $0x40] sm:$0xff]
  %v69 = vld [vmem:[%s2 + $0x48] sm:$0xff]
  %v70 = vld [vmem:[%s2 + $0x50] sm:$0xff]
  %v71 = vld [vmem:[%s2 + $0x58] sm:$0xff]
  %v72 = vld [vmem:[%s2 + $0x60] sm:$0xff]
  %v73 = vld [vmem:[%s2 + $0x68] sm:$0xff]
  %v74 = vld [vmem:[%s2 + $0x70] sm:$0xff]
  %v75 = vld [vmem:[%s2 + $0x78] sm:$0xff]
  %v76 = vld [vmem:[%s2 + $0x80] sm:$0xff]
  %v77 = vld [vmem:[%s2 + $0x88] sm:$0xff]
  %v78 = vld [vmem:[%s2 + $0x90] sm:$0xff]
  %v79 = vld [vmem:[%s2 + $0x98] sm:$0xff]
  %v80 = vld [vmem:[%s2 + $0xa0] sm:$0xff]
  %v81 = vld [vmem:[%s2 + $0xa8] sm:$0xff]
  %v82 = vld [vmem:[%s2 + $0xb0] sm:$0xff]
  %v83 = vld [vmem:[%s2 + $0xb8] sm:$0xff]
  %v84 = vld [vmem:[%s2 + $0xc0] sm:$0xff]
  %v85 = vld [vmem:[%s2 + $0xc8] sm:$0xff]
  %v86 = vld [vmem:[%s2 + $0xd0] sm:$0xff]
  %v87 = vld [vmem:[%s2 + $0xd8] sm:$0xff]
  %v88 = vld [vmem:[%s2 + $0xe0] sm:$0xff]
  %v89 = vld [vmem:[%s2 + $0xe8] sm:$0xff]
  %v90 = vld [vmem:[%s2 + $0xf0] sm:$0xff]
  %v91 = vld [vmem:[%s2 + $0xf8] sm:$0xff]
  %v92 = vld [vmem:[%s3] sm:$0xff]
  %v93 = vld [vmem:[%s3 + $0x8] sm:$0xff]
  %v94 = vld [vmem:[%s3 + $0x10] sm:$0xff]
  %v95 = vld [vmem:[%s3 + $0x18] sm:$0xff]
  %v96 = vld [vmem:[%s3 + $0x20] sm:$0xff]
  %v97 = vld [vmem:[%s3 + $0x28] sm:$0xff]
  %v98 = vld [vmem:[%s3 + $0x30] sm:$0xff]
  %v99 = vld [vmem:[%s3 + $0x38] sm:$0xff]
  %v100 = vld [vmem:[%s3 + $0x40] sm:$0xff]
  %v101 = vld [vmem:[%s3 + $0x48] sm:$0xff]
  %v102 = vld [vmem:[%s3 + $0x50] sm:$0xff]
  %v103 = vld [vmem:[%s3 + $0x58] sm:$0xff]
  %v104 = vld [vmem:[%s3 + $0x60] sm:$0xff]
  %v105 = vld [vmem:[%s3 + $0x68] sm:$0xff]
  %v106 = vld [vmem:[%s3 + $0x70] sm:$0xff]
  %v107 = vld [vmem:[%s3 + $0x78] sm:$0xff]
  %v108 = vld [vmem:[%s3 + $0x80] sm:$0xff]
  %v109 = vld [vmem:[%s3 + $0x88] sm:$0xff]
  %v110 = vld [vmem:[%s3 + $0x90] sm:$0xff]
  %v111 = vld [vmem:[%s3 + $0x98] sm:$0xff]
  %v112 = vld [vmem:[%s3 + $0xa0] sm:$0xff]
  %v113 = vld [vmem:[%s3 + $0xa8] sm:$0xff]
  %v114 = vld [vmem:[%s3 + $0xb0] sm:$0xff]
  %v115 = vld [vmem:[%s3 + $0xb8] sm:$0xff]
  %v116 = vld [vmem:[%s3 + $0xc0] sm:$0xff]
  %v117 = vld [vmem:[%s3 + $0xc8] sm:$0xff]
  %v118 = vld [vmem:[%s3 + $0xd0] sm:$0xff]
  %v119 = vld [vmem:[%s3 + $0xd8] sm:$0xff]
  %v120 = vld [vmem:[%s3 + $0xe0] sm:$0xff]
  %v121 = vld [vmem:[%s3 + $0xe8] sm:$0xff]
  %v122 = vld [vmem:[%s3 + $0xf0] sm:$0xff]
  %v123 = vld [vmem:[%s3 + $0xf8] sm:$0xff]
  %v124 = vld [vmem:[%s0] sm:$0xff]
  %v125 = vld [vmem:[%s0 + $0x8] sm:$0xff]
  %v126 = vld [vmem:[%s0 + $0x10] sm:$0xff]
  %v127 = vld [vmem:[%s0 + $0x18] sm:$0xff]
  %v128 = vld [vmem:[#allocation2] sm:$0xff]
  %v129 = vld [vmem:[#allocation3] sm:$0xff]
  %v130 = vpack.c.bf16 %v128, %v128
  %v163 = vunpack.c.l.b16 %v60
  %v164 = vunpack.c.h.b16 %v60
  %v165 = vunpack.c.l.b16 %v61
  %v166 = vunpack.c.h.b16 %v61
  %v167 = vunpack.c.l.b16 %v62
  %v168 = vunpack.c.h.b16 %v62
  %v169 = vunpack.c.l.b16 %v63
  %v170 = vunpack.c.h.b16 %v63
  %v171 = vunpack.c.l.b16 %v64
  %v172 = vunpack.c.h.b16 %v64
  %v173 = vunpack.c.l.b16 %v65
  %v174 = vunpack.c.h.b16 %v65
  %v175 = vunpack.c.l.b16 %v66
  %v176 = vunpack.c.h.b16 %v66
  %v177 = vunpack.c.l.b16 %v67
  %v178 = vunpack.c.h.b16 %v67
  %v179 = vunpack.c.l.b16 %v68
  %v180 = vunpack.c.h.b16 %v68
  %v181 = vunpack.c.l.b16 %v69
  %v182 = vunpack.c.h.b16 %v69
  %v183 = vunpack.c.l.b16 %v70
  %v184 = vunpack.c.h.b16 %v70
  %v185 = vunpack.c.l.b16 %v71
  %v186 = vunpack.c.h.b16 %v71
  %v187 = vunpack.c.l.b16 %v72
  %v188 = vunpack.c.h.b16 %v72
  %v189 = vunpack.c.l.b16 %v73
  %v190 = vunpack.c.h.b16 %v73
  %v191 = vunpack.c.l.b16 %v74
  %v192 = vunpack.c.h.b16 %v74
  %v193 = vunpack.c.l.b16 %v75
  %v194 = vunpack.c.h.b16 %v75
  %v195 = vunpack.c.l.b16 %v76
  %v196 = vunpack.c.h.b16 %v76
  %v197 = vunpack.c.l.b16 %v77
  %v198 = vunpack.c.h.b16 %v77
  %v199 = vunpack.c.l.b16 %v78
  %v200 = vunpack.c.h.b16 %v78
  %v201 = vunpack.c.l.b16 %v79
  %v202 = vunpack.c.h.b16 %v79
  %v203 = vunpack.c.l.b16 %v80
  %v204 = vunpack.c.h.b16 %v80
  %v205 = vunpack.c.l.b16 %v81
  %v206 = vunpack.c.h.b16 %v81
  %v207 = vunpack.c.l.b16 %v82
  %v208 = vunpack.c.h.b16 %v82
  %v209 = vunpack.c.l.b16 %v83
  %v210 = vunpack.c.h.b16 %v83
  %v211 = vunpack.c.l.b16 %v84
  %v212 = vunpack.c.h.b16 %v84
  %v213 = vunpack.c.l.b16 %v85
  %v214 = vunpack.c.h.b16 %v85
  %v215 = vunpack.c.l.b16 %v86
  %v216 = vunpack.c.h.b16 %v86
  %v217 = vunpack.c.l.b16 %v87
  %v218 = vunpack.c.h.b16 %v87
  %v219 = vunpack.c.l.b16 %v88
  %v220 = vunpack.c.h.b16 %v88
  %v221 = vunpack.c.l.b16 %v89
  %v222 = vunpack.c.h.b16 %v89
  %v223 = vunpack.c.l.b16 %v90
  %v224 = vunpack.c.h.b16 %v90
  %v225 = vunpack.c.l.b16 %v91
  %v226 = vunpack.c.h.b16 %v91
  %v227 = vpack.c.b16 %v167, %v163
  %v228 = vpack.c.b16 %v168, %v164
  %v229 = vpack.c.b16 %v169, %v165
  %v230 = vpack.c.b16 %v170, %v166
  %v231 = vpack.c.b16 %v175, %v171
  %v232 = vpack.c.b16 %v176, %v172
  %v233 = vpack.c.b16 %v177, %v173
  %v234 = vpack.c.b16 %v178, %v174
  %v235 = vpack.c.b16 %v183, %v179
  %v236 = vpack.c.b16 %v184, %v180
  %v237 = vpack.c.b16 %v185, %v181
  %v238 = vpack.c.b16 %v186, %v182
  %v239 = vpack.c.b16 %v191, %v187
  %v240 = vpack.c.b16 %v192, %v188
  %v241 = vpack.c.b16 %v193, %v189
  %v242 = vpack.c.b16 %v194, %v190
  %v243 = vpack.c.b16 %v199, %v195
  %v244 = vpack.c.b16 %v200, %v196
  %v245 = vpack.c.b16 %v201, %v197
  %v246 = vpack.c.b16 %v202, %v198
  %v247 = vpack.c.b16 %v207, %v203
  %v248 = vpack.c.b16 %v208, %v204
  %v249 = vpack.c.b16 %v209, %v205
  %v250 = vpack.c.b16 %v210, %v206
  %v251 = vpack.c.b16 %v215, %v211
  %v252 = vpack.c.b16 %v216, %v212
  %v253 = vpack.c.b16 %v217, %v213
  %v254 = vpack.c.b16 %v218, %v214
  %v255 = vpack.c.b16 %v223, %v219
  %v256 = vpack.c.b16 %v224, %v220
  %v257 = vpack.c.b16 %v225, %v221
  %v258 = vpack.c.b16 %v226, %v222
  %291 = vmatprep.subr.bf16.mxu0 %v228
  %292 = vmatpush1.bf16.msra.mxu0 %v227
  %293 = vmatprep.subr.bf16.mxu0 %v232
  %294 = vmatpush1.bf16.msra.mxu0 %v231
  %295 = vmatprep.subr.bf16.mxu0 %v236
  %296 = vmatpush1.bf16.msra.mxu0 %v235
  %297 = vmatprep.subr.bf16.mxu0 %v240
  %298 = vmatpush1.bf16.msra.mxu0 %v239
  %299 = vmatprep.subr.bf16.mxu0 %v244
  %300 = vmatpush1.bf16.msra.mxu0 %v243
  %301 = vmatprep.subr.bf16.mxu0 %v248
  %302 = vmatpush1.bf16.msra.mxu0 %v247
  %303 = vmatprep.subr.bf16.mxu0 %v252
  %304 = vmatpush1.bf16.msra.mxu0 %v251
  %305 = vmatprep.subr.bf16.mxu0 %v256
  %306 = vmatpush1.bf16.msra.mxu0 %v255
  %307 = vmatprep.subr.bf16.mxu0 0
  %308 = vmatpush1.bf16.msra.mxu0 0
  %309 = vmatprep.subr.bf16.mxu0 0
  %310 = vmatpush1.bf16.msra.mxu0 0
  %311 = vmatprep.subr.bf16.mxu0 0
  %312 = vmatpush1.bf16.msra.mxu0 0
  %313 = vmatprep.subr.bf16.mxu0 0
  %314 = vmatpush1.bf16.msra.mxu0 0
  %315 = vmatprep.subr.bf16.mxu0 0
  %316 = vmatpush1.bf16.msra.mxu0 0
  %317 = vmatprep.subr.bf16.mxu0 0
  %318 = vmatpush1.bf16.msra.mxu0 0
  %319 = vmatprep.subr.bf16.mxu0 0
  %320 = vmatpush1.bf16.msra.mxu0 0
  %321 = vmatprep.subr.bf16.mxu0 0
  %322 = vmatpush1.bf16.msra.mxu0 0
  %323 = vmatprep.mubr.bf16.mxu0 0
  %324 = vmatmul.mubr.bf16.gmra.mrb[0].mxu0 %v130
  %v325 = vpop.f32.mrb[0].mxu0
  %v326 = vadd.f32 0.0, %v325
  %v327 = vpop.f32.mrb[0].mxu0
  %v328 = vadd.f32 0.0, %v327
  %v329 = vpop.f32.mrb[0].mxu0
  %v330 = vpop.f32.mrb[0].mxu0
  %331 = vdwg.mxu0
  %332 = vmatprep.subr.bf16.mxu0 %v230
  %333 = vmatpush1.bf16.msra.mxu0 %v229
  %334 = vmatprep.subr.bf16.mxu0 %v234
  %335 = vmatpush1.bf16.msra.mxu0 %v233
  %336 = vmatprep.subr.bf16.mxu0 %v238
  %337 = vmatpush1.bf16.msra.mxu0 %v237
  %338 = vmatprep.subr.bf16.mxu0 %v242
  %339 = vmatpush1.bf16.msra.mxu0 %v241
  %340 = vmatprep.subr.bf16.mxu0 %v246
  %341 = vmatpush1.bf16.msra.mxu0 %v245
  %342 = vmatprep.subr.bf16.mxu0 %v250
  %343 = vmatpush1.bf16.msra.mxu0 %v249
  %344 = vmatprep.subr.bf16.mxu0 %v254
  %345 = vmatpush1.bf16.msra.mxu0 %v253
  %346 = vmatprep.subr.bf16.mxu0 %v258
  %347 = vmatpush1.bf16.msra.mxu0 %v257
  %348 = vmatprep.subr.bf16.mxu0 0
  %349 = vmatpush1.bf16.msra.mxu0 0
  %350 = vmatprep.subr.bf16.mxu0 0
  %351 = vmatpush1.bf16.msra.mxu0 0
  %352 = vmatprep.subr.bf16.mxu0 0
  %353 = vmatpush1.bf16.msra.mxu0 0
  %354 = vmatprep.subr.bf16.mxu0 0
  %355 = vmatpush1.bf16.msra.mxu0 0
  %356 = vmatprep.subr.bf16.mxu0 0
  %357 = vmatpush1.bf16.msra.mxu0 0
  %358 = vmatprep.subr.bf16.mxu0 0
  %359 = vmatpush1.bf16.msra.mxu0 0
  %360 = vmatprep.subr.bf16.mxu0 0
  %361 = vmatpush1.bf16.msra.mxu0 0
  %362 = vmatprep.subr.bf16.mxu0 0
  %363 = vmatpush1.bf16.msra.mxu0 0
  %364 = vmatprep.mubr.bf16.mxu0 0
  %365 = vmatmul.mubr.bf16.gmra.mrb[0].mxu0 %v130
  %v366 = vpop.f32.mrb[0].mxu0
  %v367 = vadd.f32 0.0, %v366
  %v368 = vpop.f32.mrb[0].mxu0
  %v369 = vadd.f32 0.0, %v368
  %v370 = vpop.f32.mrb[0].mxu0
  %v371 = vpop.f32.mrb[0].mxu0
  %372 = vdwg.mxu0
  %v373 = vadd.f32 %v124, %v326
  %v374 = vadd.f32 %v125, %v328
  %v375 = vadd.f32 %v126, %v367
  %v376 = vadd.f32 %v127, %v369
  %v377 = vmul.f32 %v373, 0.5
  %v378 = vtanh.pop %v377
  %v379 = vadd.f32 %v378, 1.0
  %v380 = vmul.f32 %v379, 0.5
  %v381 = vmul.f32 %v374, 0.5
  %v382 = vtanh.pop %v381
  %v383 = vadd.f32 %v382, 1.0
  %v384 = vmul.f32 %v383, 0.5
  %v385 = vtanh.pop %v375
  %v386 = vmul.f32 %v376, 0.5
  %v387 = vtanh.pop %v386
  %v388 = vadd.f32 %v387, 1.0
  %v389 = vmul.f32 %v388, 0.5
  %v390 = vmul.f32 %v384, %v129
  %v391 = vmul.f32 %v380, %v385
  %v392 = vadd.f32 %v390, %v391
  %v393 = vtanh.pop %v392
  %v394 = vmul.f32 %v389, %v393
  %395 = vst [vmem:[#allocation2] sm:$0xff] %v394
  %396 = vst [vmem:[#allocation3] sm:$0xff] %v392
  %s397 = scalar_lea.vmem %s48, 224
  %v398 = vld [vmem:[%s397] sm:$0xff]
  %v399 = vld [vmem:[%s397 + $0x8] sm:$0xff]
  %v400 = vld [vmem:[%s397 + $0x10] sm:$0xff]
  %v401 = vld [vmem:[%s397 + $0x18] sm:$0xff]
  %v402 = vld [vmem:[#allocation4] sm:$0xff]
  %v403 = vld [vmem:[#allocation5] sm:$0xff]
  %v404 = vpack.c.bf16 %v402, %v402
  %v437 = vunpack.c.l.b16 %v92
  %v438 = vunpack.c.h.b16 %v92
  %v439 = vunpack.c.l.b16 %v93
  %v440 = vunpack.c.h.b16 %v93
  %v441 = vunpack.c.l.b16 %v94
  %v442 = vunpack.c.h.b16 %v94
  %v443 = vunpack.c.l.b16 %v95
  %v444 = vunpack.c.h.b16 %v95
  %v445 = vunpack.c.l.b16 %v96
  %v446 = vunpack.c.h.b16 %v96
  %v447 = vunpack.c.l.b16 %v97
  %v448 = vunpack.c.h.b16 %v97
  %v449 = vunpack.c.l.b16 %v98
  %v450 = vunpack.c.h.b16 %v98
  %v451 = vunpack.c.l.b16 %v99
  %v452 = vunpack.c.h.b16 %v99
  %v453 = vunpack.c.l.b16 %v100
  %v454 = vunpack.c.h.b16 %v100
  %v455 = vunpack.c.l.b16 %v101
  %v456 = vunpack.c.h.b16 %v101
  %v457 = vunpack.c.l.b16 %v102
  %v458 = vunpack.c.h.b16 %v102
  %v459 = vunpack.c.l.b16 %v103
  %v460 = vunpack.c.h.b16 %v103
  %v461 = vunpack.c.l.b16 %v104
  %v462 = vunpack.c.h.b16 %v104
  %v463 = vunpack.c.l.b16 %v105
  %v464 = vunpack.c.h.b16 %v105
  %v465 = vunpack.c.l.b16 %v106
  %v466 = vunpack.c.h.b16 %v106
  %v467 = vunpack.c.l.b16 %v107
  %v468 = vunpack.c.h.b16 %v107
  %v469 = vunpack.c.l.b16 %v108
  %v470 = vunpack.c.h.b16 %v108
  %v471 = vunpack.c.l.b16 %v109
  %v472 = vunpack.c.h.b16 %v109
  %v473 = vunpack.c.l.b16 %v110
  %v474 = vunpack.c.h.b16 %v110
  %v475 = vunpack.c.l.b16 %v111
  %v476 = vunpack.c.h.b16 %v111
  %v477 = vunpack.c.l.b16 %v112
  %v478 = vunpack.c.h.b16 %v112
  %v479 = vunpack.c.l.b16 %v113
  %v480 = vunpack.c.h.b16 %v113
  %v481 = vunpack.c.l.b16 %v114
  %v482 = vunpack.c.h.b16 %v114
  %v483 = vunpack.c.l.b16 %v115
  %v484 = vunpack.c.h.b16 %v115
  %v485 = vunpack.c.l.b16 %v116
  %v486 = vunpack.c.h.b16 %v116
  %v487 = vunpack.c.l.b16 %v117
  %v488 = vunpack.c.h.b16 %v117
  %v489 = vunpack.c.l.b16 %v118
  %v490 = vunpack.c.h.b16 %v118
  %v491 = vunpack.c.l.b16 %v119
  %v492 = vunpack.c.h.b16 %v119
  %v493 = vunpack.c.l.b16 %v120
  %v494 = vunpack.c.h.b16 %v120
  %v495 = vunpack.c.l.b16 %v121
  %v496 = vunpack.c.h.b16 %v121
  %v497 = vunpack.c.l.b16 %v122
  %v498 = vunpack.c.h.b16 %v122
  %v499 = vunpack.c.l.b16 %v123
  %v500 = vunpack.c.h.b16 %v123
  %v501 = vpack.c.b16 %v441, %v437
  %v502 = vpack.c.b16 %v442, %v438
  %v503 = vpack.c.b16 %v443, %v439
  %v504 = vpack.c.b16 %v444, %v440
  %v505 = vpack.c.b16 %v449, %v445
  %v506 = vpack.c.b16 %v450, %v446
  %v507 = vpack.c.b16 %v451, %v447
  %v508 = vpack.c.b16 %v452, %v448
  %v509 = vpack.c.b16 %v457, %v453
  %v510 = vpack.c.b16 %v458, %v454
  %v511 = vpack.c.b16 %v459, %v455
  %v512 = vpack.c.b16 %v460, %v456
  %v513 = vpack.c.b16 %v465, %v461
  %v514 = vpack.c.b16 %v466, %v462
  %v515 = vpack.c.b16 %v467, %v463
  %v516 = vpack.c.b16 %v468, %v464
  %v517 = vpack.c.b16 %v473, %v469
  %v518 = vpack.c.b16 %v474, %v470
  %v519 = vpack.c.b16 %v475, %v471
  %v520 = vpack.c.b16 %v476, %v472
  %v521 = vpack.c.b16 %v481, %v477
  %v522 = vpack.c.b16 %v482, %v478
  %v523 = vpack.c.b16 %v483, %v479
  %v524 = vpack.c.b16 %v484, %v480
  %v525 = vpack.c.b16 %v489, %v485
  %v526 = vpack.c.b16 %v490, %v486
  %v527 = vpack.c.b16 %v491, %v487
  %v528 = vpack.c.b16 %v492, %v488
  %v529 = vpack.c.b16 %v497, %v493
  %v530 = vpack.c.b16 %v498, %v494
  %v531 = vpack.c.b16 %v499, %v495
  %v532 = vpack.c.b16 %v500, %v496
  %565 = vmatprep.subr.bf16.mxu0 %v502
  %566 = vmatpush1.bf16.msra.mxu0 %v501
  %567 = vmatprep.subr.bf16.mxu0 %v506
  %568 = vmatpush1.bf16.msra.mxu0 %v505
  %569 = vmatprep.subr.bf16.mxu0 %v510
  %570 = vmatpush1.bf16.msra.mxu0 %v509
  %571 = vmatprep.subr.bf16.mxu0 %v514
  %572 = vmatpush1.bf16.msra.mxu0 %v513
  %573 = vmatprep.subr.bf16.mxu0 %v518
  %574 = vmatpush1.bf16.msra.mxu0 %v517
  %575 = vmatprep.subr.bf16.mxu0 %v522
  %576 = vmatpush1.bf16.msra.mxu0 %v521
  %577 = vmatprep.subr.bf16.mxu0 %v526
  %578 = vmatpush1.bf16.msra.mxu0 %v525
  %579 = vmatprep.subr.bf16.mxu0 %v530
  %580 = vmatpush1.bf16.msra.mxu0 %v529
  %581 = vmatprep.subr.bf16.mxu0 0
  %582 = vmatpush1.bf16.msra.mxu0 0
  %583 = vmatprep.subr.bf16.mxu0 0
  %584 = vmatpush1.bf16.msra.mxu0 0
  %585 = vmatprep.subr.bf16.mxu0 0
  %586 = vmatpush1.bf16.msra.mxu0 0
  %587 = vmatprep.subr.bf16.mxu0 0
  %588 = vmatpush1.bf16.msra.mxu0 0
  %589 = vmatprep.subr.bf16.mxu0 0
  %590 = vmatpush1.bf16.msra.mxu0 0
  %591 = vmatprep.subr.bf16.mxu0 0
  %592 = vmatpush1.bf16.msra.mxu0 0
  %593 = vmatprep.subr.bf16.mxu0 0
  %594 = vmatpush1.bf16.msra.mxu0 0
  %595 = vmatprep.subr.bf16.mxu0 0
  %596 = vmatpush1.bf16.msra.mxu0 0
  %597 = vmatprep.mubr.bf16.mxu0 0
  %598 = vmatmul.mubr.bf16.gmra.mrb[0].mxu0 %v404
  %v599 = vpop.f32.mrb[0].mxu0
  %v600 = vadd.f32 0.0, %v599
  %v601 = vpop.f32.mrb[0].mxu0
  %v602 = vadd.f32 0.0, %v601
  %v603 = vpop.f32.mrb[0].mxu0
  %v604 = vpop.f32.mrb[0].mxu0
  %605 = vdwg.mxu0
  %606 = vmatprep.subr.bf16.mxu0 %v504
  %607 = vmatpush1.bf16.msra.mxu0 %v503
  %608 = vmatprep.subr.bf16.mxu0 %v508
  %609 = vmatpush1.bf16.msra.mxu0 %v507
  %610 = vmatprep.subr.bf16.mxu0 %v512
  %611 = vmatpush1.bf16.msra.mxu0 %v511
  %612 = vmatprep.subr.bf16.mxu0 %v516
  %613 = vmatpush1.bf16.msra.mxu0 %v515
  %614 = vmatprep.subr.bf16.mxu0 %v520
  %615 = vmatpush1.bf16.msra.mxu0 %v519
  %616 = vmatprep.subr.bf16.mxu0 %v524
  %617 = vmatpush1.bf16.msra.mxu0 %v523
  %618 = vmatprep.subr.bf16.mxu0 %v528
  %619 = vmatpush1.bf16.msra.mxu0 %v527
  %620 = vmatprep.subr.bf16.mxu0 %v532
  %621 = vmatpush1.bf16.msra.mxu0 %v531
  %622 = vmatprep.subr.bf16.mxu0 0
  %623 = vmatpush1.bf16.msra.mxu0 0
  %624 = vmatprep.subr.bf16.mxu0 0
  %625 = vmatpush1.bf16.msra.mxu0 0
  %626 = vmatprep.subr.bf16.mxu0 0
  %627 = vmatpush1.bf16.msra.mxu0 0
  %628 = vmatprep.subr.bf16.mxu0 0
  %629 = vmatpush1.bf16.msra.mxu0 0
  %630 = vmatprep.subr.bf16.mxu0 0
  %631 = vmatpush1.bf16.msra.mxu0 0
  %632 = vmatprep.subr.bf16.mxu0 0
  %633 = vmatpush1.bf16.msra.mxu0 0
  %634 = vmatprep.subr.bf16.mxu0 0
  %635 = vmatpush1.bf16.msra.mxu0 0
  %636 = vmatprep.subr.bf16.mxu0 0
  %637 = vmatpush1.bf16.msra.mxu0 0
  %638 = vmatprep.mubr.bf16.mxu0 0
  %639 = vmatmul.mubr.bf16.gmra.mrb[0].mxu0 %v404
  %v640 = vpop.f32.mrb[0].mxu0
  %v641 = vadd.f32 0.0, %v640
  %v642 = vpop.f32.mrb[0].mxu0
  %v643 = vadd.f32 0.0, %v642
  %v644 = vpop.f32.mrb[0].mxu0
  %v645 = vpop.f32.mrb[0].mxu0
  %646 = vdwg.mxu0
  %v647 = vadd.f32 %v398, %v600
  %v648 = vadd.f32 %v399, %v602
  %v649 = vadd.f32 %v400, %v641
  %v650 = vadd.f32 %v401, %v643
  %v651 = vmul.f32 %v647, 0.5
  %v652 = vtanh.pop %v651
  %v653 = vadd.f32 %v652, 1.0
  %v654 = vmul.f32 %v653, 0.5
  %v655 = vmul.f32 %v648, 0.5
  %v656 = vtanh.pop %v655
  %v657 = vadd.f32 %v656, 1.0
  %v658 = vmul.f32 %v657, 0.5
  %v659 = vtanh.pop %v649
  %v660 = vmul.f32 %v650, 0.5
  %v661 = vtanh.pop %v660
  %v662 = vadd.f32 %v661, 1.0
  %v663 = vmul.f32 %v662, 0.5
  %v664 = vmul.f32 %v658, %v403
  %v665 = vmul.f32 %v654, %v659
  %v666 = vadd.f32 %v664, %v665
  %v667 = vtanh.pop %v666
  %v668 = vmul.f32 %v663, %v667
  %669 = vst [vmem:[#allocation4] sm:$0xff] %v668
  %670 = vst [vmem:[#allocation5] sm:$0xff] %v666
  %s671 = scalar_lea.vmem %s0, 32
  %v672 = vld [vmem:[%s671] sm:$0xff]
  %v673 = vld [vmem:[%s671 + $0x8] sm:$0xff]
  %v674 = vld [vmem:[%s671 + $0x10] sm:$0xff]
  %v675 = vld [vmem:[%s671 + $0x18] sm:$0xff]
  %v676 = vld [vmem:[#allocation2] sm:$0xff]
  %v677 = vld [vmem:[#allocation3] sm:$0xff]
  %v678 = vpack.c.bf16 %v676, %v676
  %679 = vmatprep.subr.bf16.mxu0 %v228
  %680 = vmatpush1.bf16.msra.mxu0 %v227
  %681 = vmatprep.subr.bf16.mxu0 %v232
  %682 = vmatpush1.bf16.msra.mxu0 %v231
  %683 = vmatprep.subr.bf16.mxu0 %v236
  %684 = vmatpush1.bf16.msra.mxu0 %v235
  %685 = vmatprep.subr.bf16.mxu0 %v240
  %686 = vmatpush1.bf16.msra.mxu0 %v239
  %687 = vmatprep.subr.bf16.mxu0 %v244
  %688 = vmatpush1.bf16.msra.mxu0 %v243
  %689 = vmatprep.subr.bf16.mxu0 %v248
  %690 = vmatpush1.bf16.msra.mxu0 %v247
  %691 = vmatprep.subr.bf16.mxu0 %v252
  %692 = vmatpush1.bf16.msra.mxu0 %v251
  %693 = vmatprep.subr.bf16.mxu0 %v256
  %694 = vmatpush1.bf16.msra.mxu0 %v255
  %695 = vmatprep.subr.bf16.mxu0 0
  %696 = vmatpush1.bf16.msra.mxu0 0
  %697 = vmatprep.subr.bf16.mxu0 0
  %698 = vmatpush1.bf16.msra.mxu0 0
  %699 = vmatprep.subr.bf16.mxu0 0
  %700 = vmatpush1.bf16.msra.mxu0 0
  %701 = vmatprep.subr.bf16.mxu0 0
  %702 = vmatpush1.bf16.msra.mxu0 0
  %703 = vmatprep.subr.bf16.mxu0 0
  %704 = vmatpush1.bf16.msra.mxu0 0
  %705 = vmatprep.subr.bf16.mxu0 0
  %706 = vmatpush1.bf16.msra.mxu0 0
  %707 = vmatprep.subr.bf16.mxu0 0
  %708 = vmatpush1.bf16.msra.mxu0 0
  %709 = vmatprep.subr.bf16.mxu0 0
  %710 = vmatpush1.bf16.msra.mxu0 0
  %711 = vmatprep.mubr.bf16.mxu0 0
  %712 = vmatmul.mubr.bf16.gmra.mrb[0].mxu0 %v678
  %v713 = vpop.f32.mrb[0].mxu0
  %v714 = vadd.f32 0.0, %v713
  %v715 = vpop.f32.mrb[0].mxu0
  %v716 = vadd.f32 0.0, %v715
  %v717 = vpop.f32.mrb[0].mxu0
  %v718 = vpop.f32.mrb[0].mxu0
  %719 = vdwg.mxu0
  %720 = vmatprep.subr.bf16.mxu0 %v230
  %721 = vmatpush1.bf16.msra.mxu0 %v229
  %722 = vmatprep.subr.bf16.mxu0 %v234
  %723 = vmatpush1.bf16.msra.mxu0 %v233
  %724 = vmatprep.subr.bf16.mxu0 %v238
  %725 = vmatpush1.bf16.msra.mxu0 %v237
  %726 = vmatprep.subr.bf16.mxu0 %v242
  %727 = vmatpush1.bf16.msra.mxu0 %v241
  %728 = vmatprep.subr.bf16.mxu0 %v246
  %729 = vmatpush1.bf16.msra.mxu0 %v245
  %730 = vmatprep.subr.bf16.mxu0 %v250
  %731 = vmatpush1.bf16.msra.mxu0 %v249
  %732 = vmatprep.subr.bf16.mxu0 %v254
  %733 = vmatpush1.bf16.msra.mxu0 %v253
  %734 = vmatprep.subr.bf16.mxu0 %v258
  %735 = vmatpush1.bf16.msra.mxu0 %v257
  %736 = vmatprep.subr.bf16.mxu0 0
  %737 = vmatpush1.bf16.msra.mxu0 0
  %738 = vmatprep.subr.bf16.mxu0 0
  %739 = vmatpush1.bf16.msra.mxu0 0
  %740 = vmatprep.subr.bf16.mxu0 0
  %741 = vmatpush1.bf16.msra.mxu0 0
  %742 = vmatprep.subr.bf16.mxu0 0
  %743 = vmatpush1.bf16.msra.mxu0 0
  %744 = vmatprep.subr.bf16.mxu0 0
  %745 = vmatpush1.bf16.msra.mxu0 0
  %746 = vmatprep.subr.bf16.mxu0 0
  %747 = vmatpush1.bf16.msra.mxu0 0
  %748 = vmatprep.subr.bf16.mxu0 0
  %749 = vmatpush1.bf16.msra.mxu0 0
  %750 = vmatprep.subr.bf16.mxu0 0
  %751 = vmatpush1.bf16.msra.mxu0 0
  %752 = vmatprep.mubr.bf16.mxu0 0
  %753 = vmatmul.mubr.bf16.gmra.mrb[0].mxu0 %v678
  %v754 = vpop.f32.mrb[0].mxu0
  %v755 = vadd.f32 0.0, %v754
  %v756 = vpop.f32.mrb[0].mxu0
  %v757 = vadd.f32 0.0, %v756
  %v758 = vpop.f32.mrb[0].mxu0
  %v759 = vpop.f32.mrb[0].mxu0
  %760 = vdwg.mxu0
  %v761 = vadd.f32 %v672, %v714
  %v762 = vadd.f32 %v673, %v716
  %v763 = vadd.f32 %v674, %v755
  %v764 = vadd.f32 %v675, %v757
  %v765 = vmul.f32 %v761, 0.5
  %v766 = vtanh.pop %v765
  %v767 = vadd.f32 %v766, 1.0
  %v768 = vmul.f32 %v767, 0.5
  %v769 = vmul.f32 %v762, 0.5
  %v770 = vtanh.pop %v769
  %v771 = vadd.f32 %v770, 1.0
  %v772 = vmul.f32 %v771, 0.5
  %v773 = vtanh.pop %v763
  %v774 = vmul.f32 %v764, 0.5
  %v775 = vtanh.pop %v774
  %v776 = vadd.f32 %v775, 1.0
  %v777 = vmul.f32 %v776, 0.5
  %v778 = vmul.f32 %v772, %v677
  %v779 = vmul.f32 %v768, %v773
  %v780 = vadd.f32 %v778, %v779
  %v781 = vtanh.pop %v780
  %v782 = vmul.f32 %v777, %v781
  %783 = vst [vmem:[#allocation2] sm:$0xff] %v782
  %784 = vst [vmem:[#allocation3] sm:$0xff] %v780
  %s785 = scalar_lea.vmem %s48, 192
  %v786 = vld [vmem:[%s785] sm:$0xff]
  %v787 = vld [vmem:[%s785 + $0x8] sm:$0xff]
  %v788 = vld [vmem:[%s785 + $0x10] sm:$0xff]
  %v789 = vld [vmem:[%s785 + $0x18] sm:$0xff]
  %v790 = vld [vmem:[#allocation4] sm:$0xff]
  %v791 = vld [vmem:[#allocation5] sm:$0xff]
  %v792 = vpack.c.bf16 %v790, %v790
  %793 = vmatprep.subr.bf16.mxu0 %v502
  %794 = vmatpush1.bf16.msra.mxu0 %v501
  %795 = vmatprep.subr.bf16.mxu0 %v506
  %796 = vmatpush1.bf16.msra.mxu0 %v505
  %797 = vmatprep.subr.bf16.mxu0 %v510
  %798 = vmatpush1.bf16.msra.mxu0 %v509
  %799 = vmatprep.subr.bf16.mxu0 %v514
  %800 = vmatpush1.bf16.msra.mxu0 %v513
  %801 = vmatprep.subr.bf16.mxu0 %v518
  %802 = vmatpush1.bf16.msra.mxu0 %v517
  %803 = vmatprep.subr.bf16.mxu0 %v522
  %804 = vmatpush1.bf16.msra.mxu0 %v521
  %805 = vmatprep.subr.bf16.mxu0 %v526
  %806 = vmatpush1.bf16.msra.mxu0 %v525
  %807 = vmatprep.subr.bf16.mxu0 %v530
  %808 = vmatpush1.bf16.msra.mxu0 %v529
  %809 = vmatprep.subr.bf16.mxu0 0
  %810 = vmatpush1.bf16.msra.mxu0 0
  %811 = vmatprep.subr.bf16.mxu0 0
  %812 = vmatpush1.bf16.msra.mxu0 0
  %813 = vmatprep.subr.bf16.mxu0 0
  %814 = vmatpush1.bf16.msra.mxu0 0
  %815 = vmatprep.subr.bf16.mxu0 0
  %816 = vmatpush1.bf16.msra.mxu0 0
  %817 = vmatprep.subr.bf16.mxu0 0
  %818 = vmatpush1.bf16.msra.mxu0 0
  %819 = vmatprep.subr.bf16.mxu0 0
  %820 = vmatpush1.bf16.msra.mxu0 0
  %821 = vmatprep.subr.bf16.mxu0 0
  %822 = vmatpush1.bf16.msra.mxu0 0
  %823 = vmatprep.subr.bf16.mxu0 0
  %824 = vmatpush1.bf16.msra.mxu0 0
  %825 = vmatprep.mubr.bf16.mxu0 0
  %826 = vmatmul.mubr.bf16.gmra.mrb[0].mxu0 %v792
  %v827 = vpop.f32.mrb[0].mxu0
  %v828 = vadd.f32 0.0, %v827
  %v829 = vpop.f32.mrb[0].mxu0
  %v830 = vadd.f32 0.0, %v829
  %v831 = vpop.f32.mrb[0].mxu0
  %v832 = vpop.f32.mrb[0].mxu0
  %833 = vdwg.mxu0
  %834 = vmatprep.subr.bf16.mxu0 %v504
  %835 = vmatpush1.bf16.msra.mxu0 %v503
  %836 = vmatprep.subr.bf16.mxu0 %v508
  %837 = vmatpush1.bf16.msra.mxu0 %v507
  %838 = vmatprep.subr.bf16.mxu0 %v512
  %839 = vmatpush1.bf16.msra.mxu0 %v511
  %840 = vmatprep.subr.bf16.mxu0 %v516
  %841 = vmatpush1.bf16.msra.mxu0 %v515
  %842 = vmatprep.subr.bf16.mxu0 %v520
  %843 = vmatpush1.bf16.msra.mxu0 %v519
  %844 = vmatprep.subr.bf16.mxu0 %v524
  %845 = vmatpush1.bf16.msra.mxu0 %v523
  %846 = vmatprep.subr.bf16.mxu0 %v528
  %847 = vmatpush1.bf16.msra.mxu0 %v527
  %848 = vmatprep.subr.bf16.mxu0 %v532
  %849 = vmatpush1.bf16.msra.mxu0 %v531
  %850 = vmatprep.subr.bf16.mxu0 0
  %851 = vmatpush1.bf16.msra.mxu0 0
  %852 = vmatprep.subr.bf16.mxu0 0
  %853 = vmatpush1.bf16.msra.mxu0 0
  %854 = vmatprep.subr.bf16.mxu0 0
  %855 = vmatpush1.bf16.msra.mxu0 0
  %856 = vmatprep.subr.bf16.mxu0 0
  %857 = vmatpush1.bf16.msra.mxu0 0
  %858 = vmatprep.subr.bf16.mxu0 0
  %859 = vmatpush1.bf16.msra.mxu0 0
  %860 = vmatprep.subr.bf16.mxu0 0
  %861 = vmatpush1.bf16.msra.mxu0 0
  %862 = vmatprep.subr.bf16.mxu0 0
  %863 = vmatpush1.bf16.msra.mxu0 0
  %864 = vmatprep.subr.bf16.mxu0 0
  %865 = vmatpush1.bf16.msra.mxu0 0
  %866 = vmatprep.mubr.bf16.mxu0 0
  %867 = vmatmul.mubr.bf16.gmra.mrb[0].mxu0 %v792
  %v868 = vpop.f32.mrb[0].mxu0
  %v869 = vadd.f32 0.0, %v868
  %v870 = vpop.f32.mrb[0].mxu0
  %v871 = vadd.f32 0.0, %v870
  %v872 = vpop.f32.mrb[0].mxu0
  %v873 = vpop.f32.mrb[0].mxu0
  %874 = vdwg.mxu0
  %v875 = vadd.f32 %v786, %v828
  %v876 = vadd.f32 %v787, %v830
  %v877 = vadd.f32 %v788, %v869
  %v878 = vadd.f32 %v789, %v871
  %v879 = vmul.f32 %v875, 0.5
  %v880 = vtanh.pop %v879
  %v881 = vadd.f32 %v880, 1.0
  %v882 = vmul.f32 %v881, 0.5
  %v883 = vmul.f32 %v876, 0.5
  %v884 = vtanh.pop %v883
  %v885 = vadd.f32 %v884, 1.0
  %v886 = vmul.f32 %v885, 0.5
  %v887 = vtanh.pop %v877
  %v888 = vmul.f32 %v878, 0.5
  %v889 = vtanh.pop %v888
  %v890 = vadd.f32 %v889, 1.0
  %v891 = vmul.f32 %v890, 0.5
  %v892 = vmul.f32 %v886, %v791
  %v893 = vmul.f32 %v882, %v887
  %v894 = vadd.f32 %v892, %v893
  %v895 = vtanh.pop %v894
  %v896 = vmul.f32 %v891, %v895
  %897 = vst [vmem:[#allocation4] sm:$0xff] %v896
  %898 = vst [vmem:[#allocation5] sm:$0xff] %v894
  %s899 = scalar_lea.vmem %s0, 64
  %v900 = vld [vmem:[%s899] sm:$0xff]
  %v901 = vld [vmem:[%s899 + $0x8] sm:$0xff]
  %v902 = vld [vmem:[%s899 + $0x10] sm:$0xff]
  %v903 = vld [vmem:[%s899 + $0x18] sm:$0xff]
  %v904 = vld [vmem:[#allocation2] sm:$0xff]
  %v905 = vld [vmem:[#allocation3] sm:$0xff]
  %v906 = vpack.c.bf16 %v904, %v904
  %907 = vmatprep.subr.bf16.mxu0 %v228
  %908 = vmatpush1.bf16.msra.mxu0 %v227
  %909 = vmatprep.subr.bf16.mxu0 %v232
  %910 = vmatpush1.bf16.msra.mxu0 %v231
  %911 = vmatprep.subr.bf16.mxu0 %v236
  %912 = vmatpush1.bf16.msra.mxu0 %v235
  %913 = vmatprep.subr.bf16.mxu0 %v240
  %914 = vmatpush1.bf16.msra.mxu0 %v239
  %915 = vmatprep.subr.bf16.mxu0 %v244
  %916 = vmatpush1.bf16.msra.mxu0 %v243
  %917 = vmatprep.subr.bf16.mxu0 %v248
  %918 = vmatpush1.bf16.msra.mxu0 %v247
  %919 = vmatprep.subr.bf16.mxu0 %v252
  %920 = vmatpush1.bf16.msra.mxu0 %v251
  %921 = vmatprep.subr.bf16.mxu0 %v256
  %922 = vmatpush1.bf16.msra.mxu0 %v255
  %923 = vmatprep.subr.bf16.mxu0 0
  %924 = vmatpush1.bf16.msra.mxu0 0
  %925 = vmatprep.subr.bf16.mxu0 0
  %926 = vmatpush1.bf16.msra.mxu0 0
  %927 = vmatprep.subr.bf16.mxu0 0
  %928 = vmatpush1.bf16.msra.mxu0 0
  %929 = vmatprep.subr.bf16.mxu0 0
  %930 = vmatpush1.bf16.msra.mxu0 0
  %931 = vmatprep.subr.bf16.mxu0 0
  %932 = vmatpush1.bf16.msra.mxu0 0
  %933 = vmatprep.subr.bf16.mxu0 0
  %934 = vmatpush1.bf16.msra.mxu0 0
  %935 = vmatprep.subr.bf16.mxu0 0
  %936 = vmatpush1.bf16.msra.mxu0 0
  %937 = vmatprep.subr.bf16.mxu0 0
  %938 = vmatpush1.bf16.msra.mxu0 0
  %939 = vmatprep.mubr.bf16.mxu0 0
  %940 = vmatmul.mubr.bf16.gmra.mrb[0].mxu0 %v906
  %v941 = vpop.f32.mrb[0].mxu0
  %v942 = vadd.f32 0.0, %v941
  %v943 = vpop.f32.mrb[0].mxu0
  %v944 = vadd.f32 0.0, %v943
  %v945 = vpop.f32.mrb[0].mxu0
  %v946 = vpop.f32.mrb[0].mxu0
  %947 = vdwg.mxu0
  %948 = vmatprep.subr.bf16.mxu0 %v230
  %949 = vmatpush1.bf16.msra.mxu0 %v229
  %950 = vmatprep.subr.bf16.mxu0 %v234
  %951 = vmatpush1.bf16.msra.mxu0 %v233
  %952 = vmatprep.subr.bf16.mxu0 %v238
  %953 = vmatpush1.bf16.msra.mxu0 %v237
  %954 = vmatprep.subr.bf16.mxu0 %v242
  %955 = vmatpush1.bf16.msra.mxu0 %v241
  %956 = vmatprep.subr.bf16.mxu0 %v246
  %957 = vmatpush1.bf16.msra.mxu0 %v245
  %958 = vmatprep.subr.bf16.mxu0 %v250
  %959 = vmatpush1.bf16.msra.mxu0 %v249
  %960 = vmatprep.subr.bf16.mxu0 %v254
  %961 = vmatpush1.bf16.msra.mxu0 %v253
  %962 = vmatprep.subr.bf16.mxu0 %v258
  %963 = vmatpush1.bf16.msra.mxu0 %v257
  %964 = vmatprep.subr.bf16.mxu0 0
  %965 = vmatpush1.bf16.msra.mxu0 0
  %966 = vmatprep.subr.bf16.mxu0 0
  %967 = vmatpush1.bf16.msra.mxu0 0
  %968 = vmatprep.subr.bf16.mxu0 0
  %969 = vmatpush1.bf16.msra.mxu0 0
  %970 = vmatprep.subr.bf16.mxu0 0
  %971 = vmatpush1.bf16.msra.mxu0 0
  %972 = vmatprep.subr.bf16.mxu0 0
  %973 = vmatpush1.bf16.msra.mxu0 0
  %974 = vmatprep.subr.bf16.mxu0 0
  %975 = vmatpush1.bf16.msra.mxu0 0
  %976 = vmatprep.subr.bf16.mxu0 0
  %977 = vmatpush1.bf16.msra.mxu0 0
  %978 = vmatprep.subr.bf16.mxu0 0
  %979 = vmatpush1.bf16.msra.mxu0 0
  %980 = vmatprep.mubr.bf16.mxu0 0
  %981 = vmatmul.mubr.bf16.gmra.mrb[0].mxu0 %v906
  %v982 = vpop.f32.mrb[0].mxu0
  %v983 = vadd.f32 0.0, %v982
  %v984 = vpop.f32.mrb[0].mxu0
  %v985 = vadd.f32 0.0, %v984
  %v986 = vpop.f32.mrb[0].mxu0
  %v987 = vpop.f32.mrb[0].mxu0
  %988 = vdwg.mxu0
  %v989 = vadd.f32 %v900, %v942
  %v990 = vadd.f32 %v901, %v944
  %v991 = vadd.f32 %v902, %v983
  %v992 = vadd.f32 %v903, %v985
  %v993 = vmul.f32 %v989, 0.5
  %v994 = vtanh.pop %v993
  %v995 = vadd.f32 %v994, 1.0
  %v996 = vmul.f32 %v995, 0.5
  %v997 = vmul.f32 %v990, 0.5
  %v998 = vtanh.pop %v997
  %v999 = vadd.f32 %v998, 1.0
  %v1000 = vmul.f32 %v999, 0.5
  %v1001 = vtanh.pop %v991
  %v1002 = vmul.f32 %v992, 0.5
  %v1003 = vtanh.pop %v1002
  %v1004 = vadd.f32 %v1003, 1.0
  %v1005 = vmul.f32 %v1004, 0.5
  %v1006 = vmul.f32 %v1000, %v905
  %v1007 = vmul.f32 %v996, %v1001
  %v1008 = vadd.f32 %v1006, %v1007
  %v1009 = vtanh.pop %v1008
  %v1010 = vmul.f32 %v1005, %v1009
  %1011 = vst [vmem:[#allocation2] sm:$0xff] %v1010
  %1012 = vst [vmem:[#allocation3] sm:$0xff] %v1008
  %s1013 = scalar_lea.vmem %s48, 160
  %v1014 = vld [vmem:[%s1013] sm:$0xff]
  %v1015 = vld [vmem:[%s1013 + $0x8] sm:$0xff]
  %v1016 = vld [vmem:[%s1013 + $0x10] sm:$0xff]
  %v1017 = vld [vmem:[%s1013 + $0x18] sm:$0xff]
  %v1018 = vld [vmem:[#allocation4] sm:$0xff]
  %v1019 = vld [vmem:[#allocation5] sm:$0xff]
  %v1020 = vpack.c.bf16 %v1018, %v1018
  %1021 = vmatprep.subr.bf16.mxu0 %v502
  %1022 = vmatpush1.bf16.msra.mxu0 %v501
  %1023 = vmatprep.subr.bf16.mxu0 %v506
  %1024 = vmatpush1.bf16.msra.mxu0 %v505
  %1025 = vmatprep.subr.bf16.mxu0 %v510
  %1026 = vmatpush1.bf16.msra.mxu0 %v509
  %1027 = vmatprep.subr.bf16.mxu0 %v514
  %1028 = vmatpush1.bf16.msra.mxu0 %v513
  %1029 = vmatprep.subr.bf16.mxu0 %v518
  %1030 = vmatpush1.bf16.msra.mxu0 %v517
  %1031 = vmatprep.subr.bf16.mxu0 %v522
  %1032 = vmatpush1.bf16.msra.mxu0 %v521
  %1033 = vmatprep.subr.bf16.mxu0 %v526
  %1034 = vmatpush1.bf16.msra.mxu0 %v525
  %1035 = vmatprep.subr.bf16.mxu0 %v530
  %1036 = vmatpush1.bf16.msra.mxu0 %v529
  %1037 = vmatprep.subr.bf16.mxu0 0
  %1038 = vmatpush1.bf16.msra.mxu0 0
  %1039 = vmatprep.subr.bf16.mxu0 0
  %1040 = vmatpush1.bf16.msra.mxu0 0
  %1041 = vmatprep.subr.bf16.mxu0 0
  %1042 = vmatpush1.bf16.msra.mxu0 0
  %1043 = vmatprep.subr.bf16.mxu0 0
  %1044 = vmatpush1.bf16.msra.mxu0 0
  %1045 = vmatprep.subr.bf16.mxu0 0
  %1046 = vmatpush1.bf16.msra.mxu0 0
  %1047 = vmatprep.subr.bf16.mxu0 0
  %1048 = vmatpush1.bf16.msra.mxu0 0
  %1049 = vmatprep.subr.bf16.mxu0 0
  %1050 = vmatpush1.bf16.msra.mxu0 0
  %1051 = vmatprep.subr.bf16.mxu0 0
  %1052 = vmatpush1.bf16.msra.mxu0 0
  %1053 = vmatprep.mubr.bf16.mxu0 0
  %1054 = vmatmul.mubr.bf16.gmra.mrb[0].mxu0 %v1020
  %v1055 = vpop.f32.mrb[0].mxu0
  %v1056 = vadd.f32 0.0, %v1055
  %v1057 = vpop.f32.mrb[0].mxu0
  %v1058 = vadd.f32 0.0, %v1057
  %v1059 = vpop.f32.mrb[0].mxu0
  %v1060 = vpop.f32.mrb[0].mxu0
  %1061 = vdwg.mxu0
  %1062 = vmatprep.subr.bf16.mxu0 %v504
  %1063 = vmatpush1.bf16.msra.mxu0 %v503
  %1064 = vmatprep.subr.bf16.mxu0 %v508
  %1065 = vmatpush1.bf16.msra.mxu0 %v507
  %1066 = vmatprep.subr.bf16.mxu0 %v512
  %1067 = vmatpush1.bf16.msra.mxu0 %v511
  %1068 = vmatprep.subr.bf16.mxu0 %v516
  %1069 = vmatpush1.bf16.msra.mxu0 %v515
  %1070 = vmatprep.subr.bf16.mxu0 %v520
  %1071 = vmatpush1.bf16.msra.mxu0 %v519
  %1072 = vmatprep.subr.bf16.mxu0 %v524
  %1073 = vmatpush1.bf16.msra.mxu0 %v523
  %1074 = vmatprep.subr.bf16.mxu0 %v528
  %1075 = vmatpush1.bf16.msra.mxu0 %v527
  %1076 = vmatprep.subr.bf16.mxu0 %v532
  %1077 = vmatpush1.bf16.msra.mxu0 %v531
  %1078 = vmatprep.subr.bf16.mxu0 0
  %1079 = vmatpush1.bf16.msra.mxu0 0
  %1080 = vmatprep.subr.bf16.mxu0 0
  %1081 = vmatpush1.bf16.msra.mxu0 0
  %1082 = vmatprep.subr.bf16.mxu0 0
  %1083 = vmatpush1.bf16.msra.mxu0 0
  %1084 = vmatprep.subr.bf16.mxu0 0
  %1085 = vmatpush1.bf16.msra.mxu0 0
  %1086 = vmatprep.subr.bf16.mxu0 0
  %1087 = vmatpush1.bf16.msra.mxu0 0
  %1088 = vmatprep.subr.bf16.mxu0 0
  %1089 = vmatpush1.bf16.msra.mxu0 0
  %1090 = vmatprep.subr.bf16.mxu0 0
  %1091 = vmatpush1.bf16.msra.mxu0 0
  %1092 = vmatprep.subr.bf16.mxu0 0
  %1093 = vmatpush1.bf16.msra.mxu0 0
  %1094 = vmatprep.mubr.bf16.mxu0 0
  %1095 = vmatmul.mubr.bf16.gmra.mrb[0].mxu0 %v1020
  %v1096 = vpop.f32.mrb[0].mxu0
  %v1097 = vadd.f32 0.0, %v1096
  %v1098 = vpop.f32.mrb[0].mxu0
  %v1099 = vadd.f32 0.0, %v1098
  %v1100 = vpop.f32.mrb[0].mxu0
  %v1101 = vpop.f32.mrb[0].mxu0
  %1102 = vdwg.mxu0
  %v1103 = vadd.f32 %v1014, %v1056
  %v1104 = vadd.f32 %v1015, %v1058
  %v1105 = vadd.f32 %v1016, %v1097
  %v1106 = vadd.f32 %v1017, %v1099
  %v1107 = vmul.f32 %v1103, 0.5
  %v1108 = vtanh.pop %v1107
  %v1109 = vadd.f32 %v1108, 1.0
  %v1110 = vmul.f32 %v1109, 0.5
  %v1111 = vmul.f32 %v1104, 0.5
  %v1112 = vtanh.pop %v1111
  %v1113 = vadd.f32 %v1112, 1.0
  %v1114 = vmul.f32 %v1113, 0.5
  %v1115 = vtanh.pop %v1105
  %v1116 = vmul.f32 %v1106, 0.5
  %v1117 = vtanh.pop %v1116
  %v1118 = vadd.f32 %v1117, 1.0
  %v1119 = vmul.f32 %v1118, 0.5
  %v1120 = vmul.f32 %v1114, %v1019
  %v1121 = vmul.f32 %v1110, %v1115
  %v1122 = vadd.f32 %v1120, %v1121
  %v1123 = vtanh.pop %v1122
  %v1124 = vmul.f32 %v1119, %v1123
  %1125 = vst [vmem:[#allocation4] sm:$0xff] %v1124
  %1126 = vst [vmem:[#allocation5] sm:$0xff] %v1122
  %s1127 = scalar_lea.vmem %s0, 96
  %v1128 = vld [vmem:[%s1127] sm:$0xff]
  %v1129 = vld [vmem:[%s1127 + $0x8] sm:$0xff]
  %v1130 = vld [vmem:[%s1127 + $0x10] sm:$0xff]
  %v1131 = vld [vmem:[%s1127 + $0x18] sm:$0xff]
  %v1132 = vld [vmem:[#allocation2] sm:$0xff]
  %v1133 = vld [vmem:[#allocation3] sm:$0xff]
  %v1134 = vpack.c.bf16 %v1132, %v1132
  %1135 = vmatprep.subr.bf16.mxu0 %v228
  %1136 = vmatpush1.bf16.msra.mxu0 %v227
  %1137 = vmatprep.subr.bf16.mxu0 %v232
  %1138 = vmatpush1.bf16.msra.mxu0 %v231
  %1139 = vmatprep.subr.bf16.mxu0 %v236
  %1140 = vmatpush1.bf16.msra.mxu0 %v235
  %1141 = vmatprep.subr.bf16.mxu0 %v240
  %1142 = vmatpush1.bf16.msra.mxu0 %v239
  %1143 = vmatprep.subr.bf16.mxu0 %v244
  %1144 = vmatpush1.bf16.msra.mxu0 %v243
  %1145 = vmatprep.subr.bf16.mxu0 %v248
  %1146 = vmatpush1.bf16.msra.mxu0 %v247
  %1147 = vmatprep.subr.bf16.mxu0 %v252
  %1148 = vmatpush1.bf16.msra.mxu0 %v251
  %1149 = vmatprep.subr.bf16.mxu0 %v256
  %1150 = vmatpush1.bf16.msra.mxu0 %v255
  %1151 = vmatprep.subr.bf16.mxu0 0
  %1152 = vmatpush1.bf16.msra.mxu0 0
  %1153 = vmatprep.subr.bf16.mxu0 0
  %1154 = vmatpush1.bf16.msra.mxu0 0
  %1155 = vmatprep.subr.bf16.mxu0 0
  %1156 = vmatpush1.bf16.msra.mxu0 0
  %1157 = vmatprep.subr.bf16.mxu0 0
  %1158 = vmatpush1.bf16.msra.mxu0 0
  %1159 = vmatprep.subr.bf16.mxu0 0
  %1160 = vmatpush1.bf16.msra.mxu0 0
  %1161 = vmatprep.subr.bf16.mxu0 0
  %1162 = vmatpush1.bf16.msra.mxu0 0
  %1163 = vmatprep.subr.bf16.mxu0 0
  %1164 = vmatpush1.bf16.msra.mxu0 0
  %1165 = vmatprep.subr.bf16.mxu0 0
  %1166 = vmatpush1.bf16.msra.mxu0 0
  %1167 = vmatprep.mubr.bf16.mxu0 0
  %1168 = vmatmul.mubr.bf16.gmra.mrb[0].mxu0 %v1134
  %v1169 = vpop.f32.mrb[0].mxu0
  %v1170 = vadd.f32 0.0, %v1169
  %v1171 = vpop.f32.mrb[0].mxu0
  %v1172 = vadd.f32 0.0, %v1171
  %v1173 = vpop.f32.mrb[0].mxu0
  %v1174 = vpop.f32.mrb[0].mxu0
  %1175 = vdwg.mxu0
  %1176 = vmatprep.subr.bf16.mxu0 %v230
  %1177 = vmatpush1.bf16.msra.mxu0 %v229
  %1178 = vmatprep.subr.bf16.mxu0 %v234
  %1179 = vmatpush1.bf16.msra.mxu0 %v233
  %1180 = vmatprep.subr.bf16.mxu0 %v238
  %1181 = vmatpush1.bf16.msra.mxu0 %v237
  %1182 = vmatprep.subr.bf16.mxu0 %v242
  %1183 = vmatpush1.bf16.msra.mxu0 %v241
  %1184 = vmatprep.subr.bf16.mxu0 %v246
  %1185 = vmatpush1.bf16.msra.mxu0 %v245
  %1186 = vmatprep.subr.bf16.mxu0 %v250
  %1187 = vmatpush1.bf16.msra.mxu0 %v249
  %1188 = vmatprep.subr.bf16.mxu0 %v254
  %1189 = vmatpush1.bf16.msra.mxu0 %v253
  %1190 = vmatprep.subr.bf16.mxu0 %v258
  %1191 = vmatpush1.bf16.msra.mxu0 %v257
  %1192 = vmatprep.subr.bf16.mxu0 0
  %1193 = vmatpush1.bf16.msra.mxu0 0
  %1194 = vmatprep.subr.bf16.mxu0 0
  %1195 = vmatpush1.bf16.msra.mxu0 0
  %1196 = vmatprep.subr.bf16.mxu0 0
  %1197 = vmatpush1.bf16.msra.mxu0 0
  %1198 = vmatprep.subr.bf16.mxu0 0
  %1199 = vmatpush1.bf16.msra.mxu0 0
  %1200 = vmatprep.subr.bf16.mxu0 0
  %1201 = vmatpush1.bf16.msra.mxu0 0
  %1202 = vmatprep.subr.bf16.mxu0 0
  %1203 = vmatpush1.bf16.msra.mxu0 0
  %1204 = vmatprep.subr.bf16.mxu0 0
  %1205 = vmatpush1.bf16.msra.mxu0 0
  %1206 = vmatprep.subr.bf16.mxu0 0
  %1207 = vmatpush1.bf16.msra.mxu0 0
  %1208 = vmatprep.mubr.bf16.mxu0 0
  %1209 = vmatmul.mubr.bf16.gmra.mrb[0].mxu0 %v1134
  %v1210 = vpop.f32.mrb[0].mxu0
  %v1211 = vadd.f32 0.0, %v1210
  %v1212 = vpop.f32.mrb[0].mxu0
  %v1213 = vadd.f32 0.0, %v1212
  %v1214 = vpop.f32.mrb[0].mxu0
  %v1215 = vpop.f32.mrb[0].mxu0
  %1216 = vdwg.mxu0
  %v1217 = vadd.f32 %v1128, %v1170
  %v1218 = vadd.f32 %v1129, %v1172
  %v1219 = vadd.f32 %v1130, %v1211
  %v1220 = vadd.f32 %v1131, %v1213
  %v1221 = vmul.f32 %v1217, 0.5
  %v1222 = vtanh.pop %v1221
  %v1223 = vadd.f32 %v1222, 1.0
  %v1224 = vmul.f32 %v1223, 0.5
  %v1225 = vmul.f32 %v1218, 0.5
  %v1226 = vtanh.pop %v1225
  %v1227 = vadd.f32 %v1226, 1.0
  %v1228 = vmul.f32 %v1227, 0.5
  %v1229 = vtanh.pop %v1219
  %v1230 = vmul.f32 %v1220, 0.5
  %v1231 = vtanh.pop %v1230
  %v1232 = vadd.f32 %v1231, 1.0
  %v1233 = vmul.f32 %v1232, 0.5
  %v1234 = vmul.f32 %v1228, %v1133
  %v1235 = vmul.f32 %v1224, %v1229
  %v1236 = vadd.f32 %v1234, %v1235
  %v1237 = vtanh.pop %v1236
  %v1238 = vmul.f32 %v1233, %v1237
  %1239 = vst [vmem:[#allocation2] sm:$0xff] %v1238
  %1240 = vst [vmem:[#allocation3] sm:$0xff] %v1236
  %s1241 = scalar_lea.vmem %s48, 128
  %v1242 = vld [vmem:[%s1241] sm:$0xff]
  %v1243 = vld [vmem:[%s1241 + $0x8] sm:$0xff]
  %v1244 = vld [vmem:[%s1241 + $0x10] sm:$0xff]
  %v1245 = vld [vmem:[%s1241 + $0x18] sm:$0xff]
  %v1246 = vld [vmem:[#allocation4] sm:$0xff]
  %v1247 = vld [vmem:[#allocation5] sm:$0xff]
  %v1248 = vpack.c.bf16 %v1246, %v1246
  %1249 = vmatprep.subr.bf16.mxu0 %v502
  %1250 = vmatpush1.bf16.msra.mxu0 %v501
  %1251 = vmatprep.subr.bf16.mxu0 %v506
  %1252 = vmatpush1.bf16.msra.mxu0 %v505
  %1253 = vmatprep.subr.bf16.mxu0 %v510
  %1254 = vmatpush1.bf16.msra.mxu0 %v509
  %1255 = vmatprep.subr.bf16.mxu0 %v514
  %1256 = vmatpush1.bf16.msra.mxu0 %v513
  %1257 = vmatprep.subr.bf16.mxu0 %v518
  %1258 = vmatpush1.bf16.msra.mxu0 %v517
  %1259 = vmatprep.subr.bf16.mxu0 %v522
  %1260 = vmatpush1.bf16.msra.mxu0 %v521
  %1261 = vmatprep.subr.bf16.mxu0 %v526
  %1262 = vmatpush1.bf16.msra.mxu0 %v525
  %1263 = vmatprep.subr.bf16.mxu0 %v530
  %1264 = vmatpush1.bf16.msra.mxu0 %v529
  %1265 = vmatprep.subr.bf16.mxu0 0
  %1266 = vmatpush1.bf16.msra.mxu0 0
  %1267 = vmatprep.subr.bf16.mxu0 0
  %1268 = vmatpush1.bf16.msra.mxu0 0
  %1269 = vmatprep.subr.bf16.mxu0 0
  %1270 = vmatpush1.bf16.msra.mxu0 0
  %1271 = vmatprep.subr.bf16.mxu0 0
  %1272 = vmatpush1.bf16.msra.mxu0 0
  %1273 = vmatprep.subr.bf16.mxu0 0
  %1274 = vmatpush1.bf16.msra.mxu0 0
  %1275 = vmatprep.subr.bf16.mxu0 0
  %1276 = vmatpush1.bf16.msra.mxu0 0
  %1277 = vmatprep.subr.bf16.mxu0 0
  %1278 = vmatpush1.bf16.msra.mxu0 0
  %1279 = vmatprep.subr.bf16.mxu0 0
  %1280 = vmatpush1.bf16.msra.mxu0 0
  %1281 = vmatprep.mubr.bf16.mxu0 0
  %1282 = vmatmul.mubr.bf16.gmra.mrb[0].mxu0 %v1248
  %v1283 = vpop.f32.mrb[0].mxu0
  %v1284 = vadd.f32 0.0, %v1283
  %v1285 = vpop.f32.mrb[0].mxu0
  %v1286 = vadd.f32 0.0, %v1285
  %v1287 = vpop.f32.mrb[0].mxu0
  %v1288 = vpop.f32.mrb[0].mxu0
  %1289 = vdwg.mxu0
  %1290 = vmatprep.subr.bf16.mxu0 %v504
  %1291 = vmatpush1.bf16.msra.mxu0 %v503
  %1292 = vmatprep.subr.bf16.mxu0 %v508
  %1293 = vmatpush1.bf16.msra.mxu0 %v507
  %1294 = vmatprep.subr.bf16.mxu0 %v512
  %1295 = vmatpush1.bf16.msra.mxu0 %v511
  %1296 = vmatprep.subr.bf16.mxu0 %v516
  %1297 = vmatpush1.bf16.msra.mxu0 %v515
  %1298 = vmatprep.subr.bf16.mxu0 %v520
  %1299 = vmatpush1.bf16.msra.mxu0 %v519
  %1300 = vmatprep.subr.bf16.mxu0 %v524
  %1301 = vmatpush1.bf16.msra.mxu0 %v523
  %1302 = vmatprep.subr.bf16.mxu0 %v528
  %1303 = vmatpush1.bf16.msra.mxu0 %v527
  %1304 = vmatprep.subr.bf16.mxu0 %v532
  %1305 = vmatpush1.bf16.msra.mxu0 %v531
  %1306 = vmatprep.subr.bf16.mxu0 0
  %1307 = vmatpush1.bf16.msra.mxu0 0
  %1308 = vmatprep.subr.bf16.mxu0 0
  %1309 = vmatpush1.bf16.msra.mxu0 0
  %1310 = vmatprep.subr.bf16.mxu0 0
  %1311 = vmatpush1.bf16.msra.mxu0 0
  %1312 = vmatprep.subr.bf16.mxu0 0
  %1313 = vmatpush1.bf16.msra.mxu0 0
  %1314 = vmatprep.subr.bf16.mxu0 0
  %1315 = vmatpush1.bf16.msra.mxu0 0
  %1316 = vmatprep.subr.bf16.mxu0 0
  %1317 = vmatpush1.bf16.msra.mxu0 0
  %1318 = vmatprep.subr.bf16.mxu0 0
  %1319 = vmatpush1.bf16.msra.mxu0 0
  %1320 = vmatprep.subr.bf16.mxu0 0
  %1321 = vmatpush1.bf16.msra.mxu0 0
  %1322 = vmatprep.mubr.bf16.mxu0 0
  %1323 = vmatmul.mubr.bf16.gmra.mrb[0].mxu0 %v1248
  %v1324 = vpop.f32.mrb[0].mxu0
  %v1325 = vadd.f32 0.0, %v1324
  %v1326 = vpop.f32.mrb[0].mxu0
  %v1327 = vadd.f32 0.0, %v1326
  %v1328 = vpop.f32.mrb[0].mxu0
  %v1329 = vpop.f32.mrb[0].mxu0
  %1330 = vdwg.mxu0
  %v1331 = vadd.f32 %v1242, %v1284
  %v1332 = vadd.f32 %v1243, %v1286
  %v1333 = vadd.f32 %v1244, %v1325
  %v1334 = vadd.f32 %v1245, %v1327
  %v1335 = vmul.f32 %v1331, 0.5
  %v1336 = vtanh.pop %v1335
  %v1337 = vadd.f32 %v1336, 1.0
  %v1338 = vmul.f32 %v1337, 0.5
  %v1339 = vmul.f32 %v1332, 0.5
  %v1340 = vtanh.pop %v1339
  %v1341 = vadd.f32 %v1340, 1.0
  %v1342 = vmul.f32 %v1341, 0.5
  %v1343 = vtanh.pop %v1333
  %v1344 = vmul.f32 %v1334, 0.5
  %v1345 = vtanh.pop %v1344
  %v1346 = vadd.f32 %v1345, 1.0
  %v1347 = vmul.f32 %v1346, 0.5
  %v1348 = vmul.f32 %v1342, %v1247
  %v1349 = vmul.f32 %v1338, %v1343
  %v1350 = vadd.f32 %v1348, %v1349
  %v1351 = vtanh.pop %v1350
  %v1352 = vmul.f32 %v1347, %v1351
  %1353 = vst [vmem:[#allocation4] sm:$0xff] %v1352
  %1354 = vst [vmem:[#allocation5] sm:$0xff] %v1350
  %s1355 = scalar_lea.vmem %s0, 128
  %v1356 = vld [vmem:[%s1355] sm:$0xff]
  %v1357 = vld [vmem:[%s1355 + $0x8] sm:$0xff]
  %v1358 = vld [vmem:[%s1355 + $0x10] sm:$0xff]
  %v1359 = vld [vmem:[%s1355 + $0x18] sm:$0xff]
  %v1360 = vld [vmem:[#allocation2] sm:$0xff]
  %v1361 = vld [vmem:[#allocation3] sm:$0xff]
  %v1362 = vpack.c.bf16 %v1360, %v1360
  %1363 = vmatprep.subr.bf16.mxu0 %v228
  %1364 = vmatpush1.bf16.msra.mxu0 %v227
  %1365 = vmatprep.subr.bf16.mxu0 %v232
  %1366 = vmatpush1.bf16.msra.mxu0 %v231
  %1367 = vmatprep.subr.bf16.mxu0 %v236
  %1368 = vmatpush1.bf16.msra.mxu0 %v235
  %1369 = vmatprep.subr.bf16.mxu0 %v240
  %1370 = vmatpush1.bf16.msra.mxu0 %v239
  %1371 = vmatprep.subr.bf16.mxu0 %v244
  %1372 = vmatpush1.bf16.msra.mxu0 %v243
  %1373 = vmatprep.subr.bf16.mxu0 %v248
  %1374 = vmatpush1.bf16.msra.mxu0 %v247
  %1375 = vmatprep.subr.bf16.mxu0 %v252
  %1376 = vmatpush1.bf16.msra.mxu0 %v251
  %1377 = vmatprep.subr.bf16.mxu0 %v256
  %1378 = vmatpush1.bf16.msra.mxu0 %v255
  %1379 = vmatprep.subr.bf16.mxu0 0
  %1380 = vmatpush1.bf16.msra.mxu0 0
  %1381 = vmatprep.subr.bf16.mxu0 0
  %1382 = vmatpush1.bf16.msra.mxu0 0
  %1383 = vmatprep.subr.bf16.mxu0 0
  %1384 = vmatpush1.bf16.msra.mxu0 0
  %1385 = vmatprep.subr.bf16.mxu0 0
  %1386 = vmatpush1.bf16.msra.mxu0 0
  %1387 = vmatprep.subr.bf16.mxu0 0
  %1388 = vmatpush1.bf16.msra.mxu0 0
  %1389 = vmatprep.subr.bf16.mxu0 0
  %1390 = vmatpush1.bf16.msra.mxu0 0
  %1391 = vmatprep.subr.bf16.mxu0 0
  %1392 = vmatpush1.bf16.msra.mxu0 0
  %1393 = vmatprep.subr.bf16.mxu0 0
  %1394 = vmatpush1.bf16.msra.mxu0 0
  %1395 = vmatprep.mubr.bf16.mxu0 0
  %1396 = vmatmul.mubr.bf16.gmra.mrb[0].mxu0 %v1362
  %v1397 = vpop.f32.mrb[0].mxu0
  %v1398 = vadd.f32 0.0, %v1397
  %v1399 = vpop.f32.mrb[0].mxu0
  %v1400 = vadd.f32 0.0, %v1399
  %v1401 = vpop.f32.mrb[0].mxu0
  %v1402 = vpop.f32.mrb[0].mxu0
  %1403 = vdwg.mxu0
  %1404 = vmatprep.subr.bf16.mxu0 %v230
  %1405 = vmatpush1.bf16.msra.mxu0 %v229
  %1406 = vmatprep.subr.bf16.mxu0 %v234
  %1407 = vmatpush1.bf16.msra.mxu0 %v233
  %1408 = vmatprep.subr.bf16.mxu0 %v238
  %1409 = vmatpush1.bf16.msra.mxu0 %v237
  %1410 = vmatprep.subr.bf16.mxu0 %v242
  %1411 = vmatpush1.bf16.msra.mxu0 %v241
  %1412 = vmatprep.subr.bf16.mxu0 %v246
  %1413 = vmatpush1.bf16.msra.mxu0 %v245
  %1414 = vmatprep.subr.bf16.mxu0 %v250
  %1415 = vmatpush1.bf16.msra.mxu0 %v249
  %1416 = vmatprep.subr.bf16.mxu0 %v254
  %1417 = vmatpush1.bf16.msra.mxu0 %v253
  %1418 = vmatprep.subr.bf16.mxu0 %v258
  %1419 = vmatpush1.bf16.msra.mxu0 %v257
  %1420 = vmatprep.subr.bf16.mxu0 0
  %1421 = vmatpush1.bf16.msra.mxu0 0
  %1422 = vmatprep.subr.bf16.mxu0 0
  %1423 = vmatpush1.bf16.msra.mxu0 0
  %1424 = vmatprep.subr.bf16.mxu0 0
  %1425 = vmatpush1.bf16.msra.mxu0 0
  %1426 = vmatprep.subr.bf16.mxu0 0
  %1427 = vmatpush1.bf16.msra.mxu0 0
  %1428 = vmatprep.subr.bf16.mxu0 0
  %1429 = vmatpush1.bf16.msra.mxu0 0
  %1430 = vmatprep.subr.bf16.mxu0 0
  %1431 = vmatpush1.bf16.msra.mxu0 0
  %1432 = vmatprep.subr.bf16.mxu0 0
  %1433 = vmatpush1.bf16.msra.mxu0 0
  %1434 = vmatprep.subr.bf16.mxu0 0
  %1435 = vmatpush1.bf16.msra.mxu0 0
  %1436 = vmatprep.mubr.bf16.mxu0 0
  %1437 = vmatmul.mubr.bf16.gmra.mrb[0].mxu0 %v1362
  %v1438 = vpop.f32.mrb[0].mxu0
  %v1439 = vadd.f32 0.0, %v1438
  %v1440 = vpop.f32.mrb[0].mxu0
  %v1441 = vadd.f32 0.0, %v1440
  %v1442 = vpop.f32.mrb[0].mxu0
  %v1443 = vpop.f32.mrb[0].mxu0
  %1444 = vdwg.mxu0
  %v1445 = vadd.f32 %v1356, %v1398
  %v1446 = vadd.f32 %v1357, %v1400
  %v1447 = vadd.f32 %v1358, %v1439
  %v1448 = vadd.f32 %v1359, %v1441
  %v1449 = vmul.f32 %v1445, 0.5
  %v1450 = vtanh.pop %v1449
  %v1451 = vadd.f32 %v1450, 1.0
  %v1452 = vmul.f32 %v1451, 0.5
  %v1453 = vmul.f32 %v1446, 0.5
  %v1454 = vtanh.pop %v1453
  %v1455 = vadd.f32 %v1454, 1.0
  %v1456 = vmul.f32 %v1455, 0.5
  %v1457 = vtanh.pop %v1447
  %v1458 = vmul.f32 %v1448, 0.5
  %v1459 = vtanh.pop %v1458
  %v1460 = vadd.f32 %v1459, 1.0
  %v1461 = vmul.f32 %v1460, 0.5
  %v1462 = vmul.f32 %v1456, %v1361
  %v1463 = vmul.f32 %v1452, %v1457
  %v1464 = vadd.f32 %v1462, %v1463
  %v1465 = vtanh.pop %v1464
  %v1466 = vmul.f32 %v1461, %v1465
  %1467 = vst [vmem:[#allocation2] sm:$0xff] %v1466
  %1468 = vst [vmem:[#allocation3] sm:$0xff] %v1464
  %s1469 = scalar_lea.vmem %s48, 96
  %v1470 = vld [vmem:[%s1469] sm:$0xff]
  %v1471 = vld [vmem:[%s1469 + $0x8] sm:$0xff]
  %v1472 = vld [vmem:[%s1469 + $0x10] sm:$0xff]
  %v1473 = vld [vmem:[%s1469 + $0x18] sm:$0xff]
  %v1474 = vld [vmem:[#allocation4] sm:$0xff]
  %v1475 = vld [vmem:[#allocation5] sm:$0xff]
  %v1476 = vpack.c.bf16 %v1474, %v1474
  %1477 = vmatprep.subr.bf16.mxu0 %v502
  %1478 = vmatpush1.bf16.msra.mxu0 %v501
  %1479 = vmatprep.subr.bf16.mxu0 %v506
  %1480 = vmatpush1.bf16.msra.mxu0 %v505
  %1481 = vmatprep.subr.bf16.mxu0 %v510
  %1482 = vmatpush1.bf16.msra.mxu0 %v509
  %1483 = vmatprep.subr.bf16.mxu0 %v514
  %1484 = vmatpush1.bf16.msra.mxu0 %v513
  %1485 = vmatprep.subr.bf16.mxu0 %v518
  %1486 = vmatpush1.bf16.msra.mxu0 %v517
  %1487 = vmatprep.subr.bf16.mxu0 %v522
  %1488 = vmatpush1.bf16.msra.mxu0 %v521
  %1489 = vmatprep.subr.bf16.mxu0 %v526
  %1490 = vmatpush1.bf16.msra.mxu0 %v525
  %1491 = vmatprep.subr.bf16.mxu0 %v530
  %1492 = vmatpush1.bf16.msra.mxu0 %v529
  %1493 = vmatprep.subr.bf16.mxu0 0
  %1494 = vmatpush1.bf16.msra.mxu0 0
  %1495 = vmatprep.subr.bf16.mxu0 0
  %1496 = vmatpush1.bf16.msra.mxu0 0
  %1497 = vmatprep.subr.bf16.mxu0 0
  %1498 = vmatpush1.bf16.msra.mxu0 0
  %1499 = vmatprep.subr.bf16.mxu0 0
  %1500 = vmatpush1.bf16.msra.mxu0 0
  %1501 = vmatprep.subr.bf16.mxu0 0
  %1502 = vmatpush1.bf16.msra.mxu0 0
  %1503 = vmatprep.subr.bf16.mxu0 0
  %1504 = vmatpush1.bf16.msra.mxu0 0
  %1505 = vmatprep.subr.bf16.mxu0 0
  %1506 = vmatpush1.bf16.msra.mxu0 0
  %1507 = vmatprep.subr.bf16.mxu0 0
  %1508 = vmatpush1.bf16.msra.mxu0 0
  %1509 = vmatprep.mubr.bf16.mxu0 0
  %1510 = vmatmul.mubr.bf16.gmra.mrb[0].mxu0 %v1476
  %v1511 = vpop.f32.mrb[0].mxu0
  %v1512 = vadd.f32 0.0, %v1511
  %v1513 = vpop.f32.mrb[0].mxu0
  %v1514 = vadd.f32 0.0, %v1513
  %v1515 = vpop.f32.mrb[0].mxu0
  %v1516 = vpop.f32.mrb[0].mxu0
  %1517 = vdwg.mxu0
  %1518 = vmatprep.subr.bf16.mxu0 %v504
  %1519 = vmatpush1.bf16.msra.mxu0 %v503
  %1520 = vmatprep.subr.bf16.mxu0 %v508
  %1521 = vmatpush1.bf16.msra.mxu0 %v507
  %1522 = vmatprep.subr.bf16.mxu0 %v512
  %1523 = vmatpush1.bf16.msra.mxu0 %v511
  %1524 = vmatprep.subr.bf16.mxu0 %v516
  %1525 = vmatpush1.bf16.msra.mxu0 %v515
  %1526 = vmatprep.subr.bf16.mxu0 %v520
  %1527 = vmatpush1.bf16.msra.mxu0 %v519
  %1528 = vmatprep.subr.bf16.mxu0 %v524
  %1529 = vmatpush1.bf16.msra.mxu0 %v523
  %1530 = vmatprep.subr.bf16.mxu0 %v528
  %1531 = vmatpush1.bf16.msra.mxu0 %v527
  %1532 = vmatprep.subr.bf16.mxu0 %v532
  %1533 = vmatpush1.bf16.msra.mxu0 %v531
  %1534 = vmatprep.subr.bf16.mxu0 0
  %1535 = vmatpush1.bf16.msra.mxu0 0
  %1536 = vmatprep.subr.bf16.mxu0 0
  %1537 = vmatpush1.bf16.msra.mxu0 0
  %1538 = vmatprep.subr.bf16.mxu0 0
  %1539 = vmatpush1.bf16.msra.mxu0 0
  %1540 = vmatprep.subr.bf16.mxu0 0
  %1541 = vmatpush1.bf16.msra.mxu0 0
  %1542 = vmatprep.subr.bf16.mxu0 0
  %1543 = vmatpush1.bf16.msra.mxu0 0
  %1544 = vmatprep.subr.bf16.mxu0 0
  %1545 = vmatpush1.bf16.msra.mxu0 0
  %1546 = vmatprep.subr.bf16.mxu0 0
  %1547 = vmatpush1.bf16.msra.mxu0 0
  %1548 = vmatprep.subr.bf16.mxu0 0
  %1549 = vmatpush1.bf16.msra.mxu0 0
  %1550 = vmatprep.mubr.bf16.mxu0 0
  %1551 = vmatmul.mubr.bf16.gmra.mrb[0].mxu0 %v1476
  %v1552 = vpop.f32.mrb[0].mxu0
  %v1553 = vadd.f32 0.0, %v1552
  %v1554 = vpop.f32.mrb[0].mxu0
  %v1555 = vadd.f32 0.0, %v1554
  %v1556 = vpop.f32.mrb[0].mxu0
  %v1557 = vpop.f32.mrb[0].mxu0
  %1558 = vdwg.mxu0
  %v1559 = vadd.f32 %v1470, %v1512
  %v1560 = vadd.f32 %v1471, %v1514
  %v1561 = vadd.f32 %v1472, %v1553
  %v1562 = vadd.f32 %v1473, %v1555
  %v1563 = vmul.f32 %v1559, 0.5
  %v1564 = vtanh.pop %v1563
  %v1565 = vadd.f32 %v1564, 1.0
  %v1566 = vmul.f32 %v1565, 0.5
  %v1567 = vmul.f32 %v1560, 0.5
  %v1568 = vtanh.pop %v1567
  %v1569 = vadd.f32 %v1568, 1.0
  %v1570 = vmul.f32 %v1569, 0.5
  %v1571 = vtanh.pop %v1561
  %v1572 = vmul.f32 %v1562, 0.5
  %v1573 = vtanh.pop %v1572
  %v1574 = vadd.f32 %v1573, 1.0
  %v1575 = vmul.f32 %v1574, 0.5
  %v1576 = vmul.f32 %v1570, %v1475
  %v1577 = vmul.f32 %v1566, %v1571
  %v1578 = vadd.f32 %v1576, %v1577
  %v1579 = vtanh.pop %v1578
  %v1580 = vmul.f32 %v1575, %v1579
  %1581 = vst [vmem:[#allocation4] sm:$0xff] %v1580
  %1582 = vst [vmem:[#allocation5] sm:$0xff] %v1578
  %s1583 = scalar_lea.vmem %s0, 160
  %v1584 = vld [vmem:[%s1583] sm:$0xff]
  %v1585 = vld [vmem:[%s1583 + $0x8] sm:$0xff]
  %v1586 = vld [vmem:[%s1583 + $0x10] sm:$0xff]
  %v1587 = vld [vmem:[%s1583 + $0x18] sm:$0xff]
  %v1588 = vld [vmem:[#allocation2] sm:$0xff]
  %v1589 = vld [vmem:[#allocation3] sm:$0xff]
  %v1590 = vpack.c.bf16 %v1588, %v1588
  %1591 = vmatprep.subr.bf16.mxu0 %v228
  %1592 = vmatpush1.bf16.msra.mxu0 %v227
  %1593 = vmatprep.subr.bf16.mxu0 %v232
  %1594 = vmatpush1.bf16.msra.mxu0 %v231
  %1595 = vmatprep.subr.bf16.mxu0 %v236
  %1596 = vmatpush1.bf16.msra.mxu0 %v235
  %1597 = vmatprep.subr.bf16.mxu0 %v240
  %1598 = vmatpush1.bf16.msra.mxu0 %v239
  %1599 = vmatprep.subr.bf16.mxu0 %v244
  %1600 = vmatpush1.bf16.msra.mxu0 %v243
  %1601 = vmatprep.subr.bf16.mxu0 %v248
  %1602 = vmatpush1.bf16.msra.mxu0 %v247
  %1603 = vmatprep.subr.bf16.mxu0 %v252
  %1604 = vmatpush1.bf16.msra.mxu0 %v251
  %1605 = vmatprep.subr.bf16.mxu0 %v256
  %1606 = vmatpush1.bf16.msra.mxu0 %v255
  %1607 = vmatprep.subr.bf16.mxu0 0
  %1608 = vmatpush1.bf16.msra.mxu0 0
  %1609 = vmatprep.subr.bf16.mxu0 0
  %1610 = vmatpush1.bf16.msra.mxu0 0
  %1611 = vmatprep.subr.bf16.mxu0 0
  %1612 = vmatpush1.bf16.msra.mxu0 0
  %1613 = vmatprep.subr.bf16.mxu0 0
  %1614 = vmatpush1.bf16.msra.mxu0 0
  %1615 = vmatprep.subr.bf16.mxu0 0
  %1616 = vmatpush1.bf16.msra.mxu0 0
  %1617 = vmatprep.subr.bf16.mxu0 0
  %1618 = vmatpush1.bf16.msra.mxu0 0
  %1619 = vmatprep.subr.bf16.mxu0 0
  %1620 = vmatpush1.bf16.msra.mxu0 0
  %1621 = vmatprep.subr.bf16.mxu0 0
  %1622 = vmatpush1.bf16.msra.mxu0 0
  %1623 = vmatprep.mubr.bf16.mxu0 0
  %1624 = vmatmul.mubr.bf16.gmra.mrb[0].mxu0 %v1590
  %v1625 = vpop.f32.mrb[0].mxu0
  %v1626 = vadd.f32 0.0, %v1625
  %v1627 = vpop.f32.mrb[0].mxu0
  %v1628 = vadd.f32 0.0, %v1627
  %v1629 = vpop.f32.mrb[0].mxu0
  %v1630 = vpop.f32.mrb[0].mxu0
  %1631 = vdwg.mxu0
  %1632 = vmatprep.subr.bf16.mxu0 %v230
  %1633 = vmatpush1.bf16.msra.mxu0 %v229
  %1634 = vmatprep.subr.bf16.mxu0 %v234
  %1635 = vmatpush1.bf16.msra.mxu0 %v233
  %1636 = vmatprep.subr.bf16.mxu0 %v238
  %1637 = vmatpush1.bf16.msra.mxu0 %v237
  %1638 = vmatprep.subr.bf16.mxu0 %v242
  %1639 = vmatpush1.bf16.msra.mxu0 %v241
  %1640 = vmatprep.subr.bf16.mxu0 %v246
  %1641 = vmatpush1.bf16.msra.mxu0 %v245
  %1642 = vmatprep.subr.bf16.mxu0 %v250
  %1643 = vmatpush1.bf16.msra.mxu0 %v249
  %1644 = vmatprep.subr.bf16.mxu0 %v254
  %1645 = vmatpush1.bf16.msra.mxu0 %v253
  %1646 = vmatprep.subr.bf16.mxu0 %v258
  %1647 = vmatpush1.bf16.msra.mxu0 %v257
  %1648 = vmatprep.subr.bf16.mxu0 0
  %1649 = vmatpush1.bf16.msra.mxu0 0
  %1650 = vmatprep.subr.bf16.mxu0 0
  %1651 = vmatpush1.bf16.msra.mxu0 0
  %1652 = vmatprep.subr.bf16.mxu0 0
  %1653 = vmatpush1.bf16.msra.mxu0 0
  %1654 = vmatprep.subr.bf16.mxu0 0
  %1655 = vmatpush1.bf16.msra.mxu0 0
  %1656 = vmatprep.subr.bf16.mxu0 0
  %1657 = vmatpush1.bf16.msra.mxu0 0
  %1658 = vmatprep.subr.bf16.mxu0 0
  %1659 = vmatpush1.bf16.msra.mxu0 0
  %1660 = vmatprep.subr.bf16.mxu0 0
  %1661 = vmatpush1.bf16.msra.mxu0 0
  %1662 = vmatprep.subr.bf16.mxu0 0
  %1663 = vmatpush1.bf16.msra.mxu0 0
  %1664 = vmatprep.mubr.bf16.mxu0 0
  %1665 = vmatmul.mubr.bf16.gmra.mrb[0].mxu0 %v1590
  %v1666 = vpop.f32.mrb[0].mxu0
  %v1667 = vadd.f32 0.0, %v1666
  %v1668 = vpop.f32.mrb[0].mxu0
  %v1669 = vadd.f32 0.0, %v1668
  %v1670 = vpop.f32.mrb[0].mxu0
  %v1671 = vpop.f32.mrb[0].mxu0
  %1672 = vdwg.mxu0
  %v1673 = vadd.f32 %v1584, %v1626
  %v1674 = vadd.f32 %v1585, %v1628
  %v1675 = vadd.f32 %v1586, %v1667
  %v1676 = vadd.f32 %v1587, %v1669
  %v1677 = vmul.f32 %v1673, 0.5
  %v1678 = vtanh.pop %v1677
  %v1679 = vadd.f32 %v1678, 1.0
  %v1680 = vmul.f32 %v1679, 0.5
  %v1681 = vmul.f32 %v1674, 0.5
  %v1682 = vtanh.pop %v1681
  %v1683 = vadd.f32 %v1682, 1.0
  %v1684 = vmul.f32 %v1683, 0.5
  %v1685 = vtanh.pop %v1675
  %v1686 = vmul.f32 %v1676, 0.5
  %v1687 = vtanh.pop %v1686
  %v1688 = vadd.f32 %v1687, 1.0
  %v1689 = vmul.f32 %v1688, 0.5
  %v1690 = vmul.f32 %v1684, %v1589
  %v1691 = vmul.f32 %v1680, %v1685
  %v1692 = vadd.f32 %v1690, %v1691
  %v1693 = vtanh.pop %v1692
  %v1694 = vmul.f32 %v1689, %v1693
  %1695 = vst [vmem:[#allocation2] sm:$0xff] %v1694
  %1696 = vst [vmem:[#allocation3] sm:$0xff] %v1692
  %s1697 = scalar_lea.vmem %s48, 64
  %v1698 = vld [vmem:[%s1697] sm:$0xff]
  %v1699 = vld [vmem:[%s1697 + $0x8] sm:$0xff]
  %v1700 = vld [vmem:[%s1697 + $0x10] sm:$0xff]
  %v1701 = vld [vmem:[%s1697 + $0x18] sm:$0xff]
  %v1702 = vld [vmem:[#allocation4] sm:$0xff]
  %v1703 = vld [vmem:[#allocation5] sm:$0xff]
  %v1704 = vpack.c.bf16 %v1702, %v1702
  %1705 = vmatprep.subr.bf16.mxu0 %v502
  %1706 = vmatpush1.bf16.msra.mxu0 %v501
  %1707 = vmatprep.subr.bf16.mxu0 %v506
  %1708 = vmatpush1.bf16.msra.mxu0 %v505
  %1709 = vmatprep.subr.bf16.mxu0 %v510
  %1710 = vmatpush1.bf16.msra.mxu0 %v509
  %1711 = vmatprep.subr.bf16.mxu0 %v514
  %1712 = vmatpush1.bf16.msra.mxu0 %v513
  %1713 = vmatprep.subr.bf16.mxu0 %v518
  %1714 = vmatpush1.bf16.msra.mxu0 %v517
  %1715 = vmatprep.subr.bf16.mxu0 %v522
  %1716 = vmatpush1.bf16.msra.mxu0 %v521
  %1717 = vmatprep.subr.bf16.mxu0 %v526
  %1718 = vmatpush1.bf16.msra.mxu0 %v525
  %1719 = vmatprep.subr.bf16.mxu0 %v530
  %1720 = vmatpush1.bf16.msra.mxu0 %v529
  %1721 = vmatprep.subr.bf16.mxu0 0
  %1722 = vmatpush1.bf16.msra.mxu0 0
  %1723 = vmatprep.subr.bf16.mxu0 0
  %1724 = vmatpush1.bf16.msra.mxu0 0
  %1725 = vmatprep.subr.bf16.mxu0 0
  %1726 = vmatpush1.bf16.msra.mxu0 0
  %1727 = vmatprep.subr.bf16.mxu0 0
  %1728 = vmatpush1.bf16.msra.mxu0 0
  %1729 = vmatprep.subr.bf16.mxu0 0
  %1730 = vmatpush1.bf16.msra.mxu0 0
  %1731 = vmatprep.subr.bf16.mxu0 0
  %1732 = vmatpush1.bf16.msra.mxu0 0
  %1733 = vmatprep.subr.bf16.mxu0 0
  %1734 = vmatpush1.bf16.msra.mxu0 0
  %1735 = vmatprep.subr.bf16.mxu0 0
  %1736 = vmatpush1.bf16.msra.mxu0 0
  %1737 = vmatprep.mubr.bf16.mxu0 0
  %1738 = vmatmul.mubr.bf16.gmra.mrb[0].mxu0 %v1704
  %v1739 = vpop.f32.mrb[0].mxu0
  %v1740 = vadd.f32 0.0, %v1739
  %v1741 = vpop.f32.mrb[0].mxu0
  %v1742 = vadd.f32 0.0, %v1741
  %v1743 = vpop.f32.mrb[0].mxu0
  %v1744 = vpop.f32.mrb[0].mxu0
  %1745 = vdwg.mxu0
  %1746 = vmatprep.subr.bf16.mxu0 %v504
  %1747 = vmatpush1.bf16.msra.mxu0 %v503
  %1748 = vmatprep.subr.bf16.mxu0 %v508
  %1749 = vmatpush1.bf16.msra.mxu0 %v507
  %1750 = vmatprep.subr.bf16.mxu0 %v512
  %1751 = vmatpush1.bf16.msra.mxu0 %v511
  %1752 = vmatprep.subr.bf16.mxu0 %v516
  %1753 = vmatpush1.bf16.msra.mxu0 %v515
  %1754 = vmatprep.subr.bf16.mxu0 %v520
  %1755 = vmatpush1.bf16.msra.mxu0 %v519
  %1756 = vmatprep.subr.bf16.mxu0 %v524
  %1757 = vmatpush1.bf16.msra.mxu0 %v523
  %1758 = vmatprep.subr.bf16.mxu0 %v528
  %1759 = vmatpush1.bf16.msra.mxu0 %v527
  %1760 = vmatprep.subr.bf16.mxu0 %v532
  %1761 = vmatpush1.bf16.msra.mxu0 %v531
  %1762 = vmatprep.subr.bf16.mxu0 0
  %1763 = vmatpush1.bf16.msra.mxu0 0
  %1764 = vmatprep.subr.bf16.mxu0 0
  %1765 = vmatpush1.bf16.msra.mxu0 0
  %1766 = vmatprep.subr.bf16.mxu0 0
  %1767 = vmatpush1.bf16.msra.mxu0 0
  %1768 = vmatprep.subr.bf16.mxu0 0
  %1769 = vmatpush1.bf16.msra.mxu0 0
  %1770 = vmatprep.subr.bf16.mxu0 0
  %1771 = vmatpush1.bf16.msra.mxu0 0
  %1772 = vmatprep.subr.bf16.mxu0 0
  %1773 = vmatpush1.bf16.msra.mxu0 0
  %1774 = vmatprep.subr.bf16.mxu0 0
  %1775 = vmatpush1.bf16.msra.mxu0 0
  %1776 = vmatprep.subr.bf16.mxu0 0
  %1777 = vmatpush1.bf16.msra.mxu0 0
  %1778 = vmatprep.mubr.bf16.mxu0 0
  %1779 = vmatmul.mubr.bf16.gmra.mrb[0].mxu0 %v1704
  %v1780 = vpop.f32.mrb[0].mxu0
  %v1781 = vadd.f32 0.0, %v1780
  %v1782 = vpop.f32.mrb[0].mxu0
  %v1783 = vadd.f32 0.0, %v1782
  %v1784 = vpop.f32.mrb[0].mxu0
  %v1785 = vpop.f32.mrb[0].mxu0
  %1786 = vdwg.mxu0
  %v1787 = vadd.f32 %v1698, %v1740
  %v1788 = vadd.f32 %v1699, %v1742
  %v1789 = vadd.f32 %v1700, %v1781
  %v1790 = vadd.f32 %v1701, %v1783
  %v1791 = vmul.f32 %v1787, 0.5
  %v1792 = vtanh.pop %v1791
  %v1793 = vadd.f32 %v1792, 1.0
  %v1794 = vmul.f32 %v1793, 0.5
  %v1795 = vmul.f32 %v1788, 0.5
  %v1796 = vtanh.pop %v1795
  %v1797 = vadd.f32 %v1796, 1.0
  %v1798 = vmul.f32 %v1797, 0.5
  %v1799 = vtanh.pop %v1789
  %v1800 = vmul.f32 %v1790, 0.5
  %v1801 = vtanh.pop %v1800
  %v1802 = vadd.f32 %v1801, 1.0
  %v1803 = vmul.f32 %v1802, 0.5
  %v1804 = vmul.f32 %v1798, %v1703
  %v1805 = vmul.f32 %v1794, %v1799
  %v1806 = vadd.f32 %v1804, %v1805
  %v1807 = vtanh.pop %v1806
  %v1808 = vmul.f32 %v1803, %v1807
  %1809 = vst [vmem:[#allocation4] sm:$0xff] %v1808
  %1810 = vst [vmem:[#allocation5] sm:$0xff] %v1806
  %s1811 = scalar_lea.vmem %s0, 192
  %v1812 = vld [vmem:[%s1811] sm:$0xff]
  %v1813 = vld [vmem:[%s1811 + $0x8] sm:$0xff]
  %v1814 = vld [vmem:[%s1811 + $0x10] sm:$0xff]
  %v1815 = vld [vmem:[%s1811 + $0x18] sm:$0xff]
  %v1816 = vld [vmem:[#allocation2] sm:$0xff]
  %v1817 = vld [vmem:[#allocation3] sm:$0xff]
  %v1818 = vpack.c.bf16 %v1816, %v1816
  %1819 = vmatprep.subr.bf16.mxu0 %v228
  %1820 = vmatpush1.bf16.msra.mxu0 %v227
  %1821 = vmatprep.subr.bf16.mxu0 %v232
  %1822 = vmatpush1.bf16.msra.mxu0 %v231
  %1823 = vmatprep.subr.bf16.mxu0 %v236
  %1824 = vmatpush1.bf16.msra.mxu0 %v235
  %1825 = vmatprep.subr.bf16.mxu0 %v240
  %1826 = vmatpush1.bf16.msra.mxu0 %v239
  %1827 = vmatprep.subr.bf16.mxu0 %v244
  %1828 = vmatpush1.bf16.msra.mxu0 %v243
  %1829 = vmatprep.subr.bf16.mxu0 %v248
  %1830 = vmatpush1.bf16.msra.mxu0 %v247
  %1831 = vmatprep.subr.bf16.mxu0 %v252
  %1832 = vmatpush1.bf16.msra.mxu0 %v251
  %1833 = vmatprep.subr.bf16.mxu0 %v256
  %1834 = vmatpush1.bf16.msra.mxu0 %v255
  %1835 = vmatprep.subr.bf16.mxu0 0
  %1836 = vmatpush1.bf16.msra.mxu0 0
  %1837 = vmatprep.subr.bf16.mxu0 0
  %1838 = vmatpush1.bf16.msra.mxu0 0
  %1839 = vmatprep.subr.bf16.mxu0 0
  %1840 = vmatpush1.bf16.msra.mxu0 0
  %1841 = vmatprep.subr.bf16.mxu0 0
  %1842 = vmatpush1.bf16.msra.mxu0 0
  %1843 = vmatprep.subr.bf16.mxu0 0
  %1844 = vmatpush1.bf16.msra.mxu0 0
  %1845 = vmatprep.subr.bf16.mxu0 0
  %1846 = vmatpush1.bf16.msra.mxu0 0
  %1847 = vmatprep.subr.bf16.mxu0 0
  %1848 = vmatpush1.bf16.msra.mxu0 0
  %1849 = vmatprep.subr.bf16.mxu0 0
  %1850 = vmatpush1.bf16.msra.mxu0 0
  %1851 = vmatprep.mubr.bf16.mxu0 0
  %1852 = vmatmul.mubr.bf16.gmra.mrb[0].mxu0 %v1818
  %v1853 = vpop.f32.mrb[0].mxu0
  %v1854 = vadd.f32 0.0, %v1853
  %v1855 = vpop.f32.mrb[0].mxu0
  %v1856 = vadd.f32 0.0, %v1855
  %v1857 = vpop.f32.mrb[0].mxu0
  %v1858 = vpop.f32.mrb[0].mxu0
  %1859 = vdwg.mxu0
  %1860 = vmatprep.subr.bf16.mxu0 %v230
  %1861 = vmatpush1.bf16.msra.mxu0 %v229
  %1862 = vmatprep.subr.bf16.mxu0 %v234
  %1863 = vmatpush1.bf16.msra.mxu0 %v233
  %1864 = vmatprep.subr.bf16.mxu0 %v238
  %1865 = vmatpush1.bf16.msra.mxu0 %v237
  %1866 = vmatprep.subr.bf16.mxu0 %v242
  %1867 = vmatpush1.bf16.msra.mxu0 %v241
  %1868 = vmatprep.subr.bf16.mxu0 %v246
  %1869 = vmatpush1.bf16.msra.mxu0 %v245
  %1870 = vmatprep.subr.bf16.mxu0 %v250
  %1871 = vmatpush1.bf16.msra.mxu0 %v249
  %1872 = vmatprep.subr.bf16.mxu0 %v254
  %1873 = vmatpush1.bf16.msra.mxu0 %v253
  %1874 = vmatprep.subr.bf16.mxu0 %v258
  %1875 = vmatpush1.bf16.msra.mxu0 %v257
  %1876 = vmatprep.subr.bf16.mxu0 0
  %1877 = vmatpush1.bf16.msra.mxu0 0
  %1878 = vmatprep.subr.bf16.mxu0 0
  %1879 = vmatpush1.bf16.msra.mxu0 0
  %1880 = vmatprep.subr.bf16.mxu0 0
  %1881 = vmatpush1.bf16.msra.mxu0 0
  %1882 = vmatprep.subr.bf16.mxu0 0
  %1883 = vmatpush1.bf16.msra.mxu0 0
  %1884 = vmatprep.subr.bf16.mxu0 0
  %1885 = vmatpush1.bf16.msra.mxu0 0
  %1886 = vmatprep.subr.bf16.mxu0 0
  %1887 = vmatpush1.bf16.msra.mxu0 0
  %1888 = vmatprep.subr.bf16.mxu0 0
  %1889 = vmatpush1.bf16.msra.mxu0 0
  %1890 = vmatprep.subr.bf16.mxu0 0
  %1891 = vmatpush1.bf16.msra.mxu0 0
  %1892 = vmatprep.mubr.bf16.mxu0 0
  %1893 = vmatmul.mubr.bf16.gmra.mrb[0].mxu0 %v1818
  %v1894 = vpop.f32.mrb[0].mxu0
  %v1895 = vadd.f32 0.0, %v1894
  %v1896 = vpop.f32.mrb[0].mxu0
  %v1897 = vadd.f32 0.0, %v1896
  %v1898 = vpop.f32.mrb[0].mxu0
  %v1899 = vpop.f32.mrb[0].mxu0
  %1900 = vdwg.mxu0
  %v1901 = vadd.f32 %v1812, %v1854
  %v1902 = vadd.f32 %v1813, %v1856
  %v1903 = vadd.f32 %v1814, %v1895
  %v1904 = vadd.f32 %v1815, %v1897
  %v1905 = vmul.f32 %v1901, 0.5
  %v1906 = vtanh.pop %v1905
  %v1907 = vadd.f32 %v1906, 1.0
  %v1908 = vmul.f32 %v1907, 0.5
  %v1909 = vmul.f32 %v1902, 0.5
  %v1910 = vtanh.pop %v1909
  %v1911 = vadd.f32 %v1910, 1.0
  %v1912 = vmul.f32 %v1911, 0.5
  %v1913 = vtanh.pop %v1903
  %v1914 = vmul.f32 %v1904, 0.5
  %v1915 = vtanh.pop %v1914
  %v1916 = vadd.f32 %v1915, 1.0
  %v1917 = vmul.f32 %v1916, 0.5
  %v1918 = vmul.f32 %v1912, %v1817
  %v1919 = vmul.f32 %v1908, %v1913
  %v1920 = vadd.f32 %v1918, %v1919
  %v1921 = vtanh.pop %v1920
  %v1922 = vmul.f32 %v1917, %v1921
  %1923 = vst [vmem:[#allocation2] sm:$0xff] %v1922
  %1924 = vst [vmem:[#allocation3] sm:$0xff] %v1920
  %s1925 = scalar_lea.vmem %s48, 32
  %v1926 = vld [vmem:[%s1925] sm:$0xff]
  %v1927 = vld [vmem:[%s1925 + $0x8] sm:$0xff]
  %v1928 = vld [vmem:[%s1925 + $0x10] sm:$0xff]
  %v1929 = vld [vmem:[%s1925 + $0x18] sm:$0xff]
  %v1930 = vld [vmem:[#allocation4] sm:$0xff]
  %v1931 = vld [vmem:[#allocation5] sm:$0xff]
  %v1932 = vpack.c.bf16 %v1930, %v1930
  %1933 = vmatprep.subr.bf16.mxu0 %v502
  %1934 = vmatpush1.bf16.msra.mxu0 %v501
  %1935 = vmatprep.subr.bf16.mxu0 %v506
  %1936 = vmatpush1.bf16.msra.mxu0 %v505
  %1937 = vmatprep.subr.bf16.mxu0 %v510
  %1938 = vmatpush1.bf16.msra.mxu0 %v509
  %1939 = vmatprep.subr.bf16.mxu0 %v514
  %1940 = vmatpush1.bf16.msra.mxu0 %v513
  %1941 = vmatprep.subr.bf16.mxu0 %v518
  %1942 = vmatpush1.bf16.msra.mxu0 %v517
  %1943 = vmatprep.subr.bf16.mxu0 %v522
  %1944 = vmatpush1.bf16.msra.mxu0 %v521
  %1945 = vmatprep.subr.bf16.mxu0 %v526
  %1946 = vmatpush1.bf16.msra.mxu0 %v525
  %1947 = vmatprep.subr.bf16.mxu0 %v530
  %1948 = vmatpush1.bf16.msra.mxu0 %v529
  %1949 = vmatprep.subr.bf16.mxu0 0
  %1950 = vmatpush1.bf16.msra.mxu0 0
  %1951 = vmatprep.subr.bf16.mxu0 0
  %1952 = vmatpush1.bf16.msra.mxu0 0
  %1953 = vmatprep.subr.bf16.mxu0 0
  %1954 = vmatpush1.bf16.msra.mxu0 0
  %1955 = vmatprep.subr.bf16.mxu0 0
  %1956 = vmatpush1.bf16.msra.mxu0 0
  %1957 = vmatprep.subr.bf16.mxu0 0
  %1958 = vmatpush1.bf16.msra.mxu0 0
  %1959 = vmatprep.subr.bf16.mxu0 0
  %1960 = vmatpush1.bf16.msra.mxu0 0
  %1961 = vmatprep.subr.bf16.mxu0 0
  %1962 = vmatpush1.bf16.msra.mxu0 0
  %1963 = vmatprep.subr.bf16.mxu0 0
  %1964 = vmatpush1.bf16.msra.mxu0 0
  %1965 = vmatprep.mubr.bf16.mxu0 0
  %1966 = vmatmul.mubr.bf16.gmra.mrb[0].mxu0 %v1932
  %v1967 = vpop.f32.mrb[0].mxu0
  %v1968 = vadd.f32 0.0, %v1967
  %v1969 = vpop.f32.mrb[0].mxu0
  %v1970 = vadd.f32 0.0, %v1969
  %v1971 = vpop.f32.mrb[0].mxu0
  %v1972 = vpop.f32.mrb[0].mxu0
  %1973 = vdwg.mxu0
  %1974 = vmatprep.subr.bf16.mxu0 %v504
  %1975 = vmatpush1.bf16.msra.mxu0 %v503
  %1976 = vmatprep.subr.bf16.mxu0 %v508
  %1977 = vmatpush1.bf16.msra.mxu0 %v507
  %1978 = vmatprep.subr.bf16.mxu0 %v512
  %1979 = vmatpush1.bf16.msra.mxu0 %v511
  %1980 = vmatprep.subr.bf16.mxu0 %v516
  %1981 = vmatpush1.bf16.msra.mxu0 %v515
  %1982 = vmatprep.subr.bf16.mxu0 %v520
  %1983 = vmatpush1.bf16.msra.mxu0 %v519
  %1984 = vmatprep.subr.bf16.mxu0 %v524
  %1985 = vmatpush1.bf16.msra.mxu0 %v523
  %1986 = vmatprep.subr.bf16.mxu0 %v528
  %1987 = vmatpush1.bf16.msra.mxu0 %v527
  %1988 = vmatprep.subr.bf16.mxu0 %v532
  %1989 = vmatpush1.bf16.msra.mxu0 %v531
  %1990 = vmatprep.subr.bf16.mxu0 0
  %1991 = vmatpush1.bf16.msra.mxu0 0
  %1992 = vmatprep.subr.bf16.mxu0 0
  %1993 = vmatpush1.bf16.msra.mxu0 0
  %1994 = vmatprep.subr.bf16.mxu0 0
  %1995 = vmatpush1.bf16.msra.mxu0 0
  %1996 = vmatprep.subr.bf16.mxu0 0
  %1997 = vmatpush1.bf16.msra.mxu0 0
  %1998 = vmatprep.subr.bf16.mxu0 0
  %1999 = vmatpush1.bf16.msra.mxu0 0
  %2000 = vmatprep.subr.bf16.mxu0 0
  %2001 = vmatpush1.bf16.msra.mxu0 0
  %2002 = vmatprep.subr.bf16.mxu0 0
  %2003 = vmatpush1.bf16.msra.mxu0 0
  %2004 = vmatprep.subr.bf16.mxu0 0
  %2005 = vmatpush1.bf16.msra.mxu0 0
  %2006 = vmatprep.mubr.bf16.mxu0 0
  %2007 = vmatmul.mubr.bf16.gmra.mrb[0].mxu0 %v1932
  %v2008 = vpop.f32.mrb[0].mxu0
  %v2009 = vadd.f32 0.0, %v2008
  %v2010 = vpop.f32.mrb[0].mxu0
  %v2011 = vadd.f32 0.0, %v2010
  %v2012 = vpop.f32.mrb[0].mxu0
  %v2013 = vpop.f32.mrb[0].mxu0
  %2014 = vdwg.mxu0
  %v2015 = vadd.f32 %v1926, %v1968
  %v2016 = vadd.f32 %v1927, %v1970
  %v2017 = vadd.f32 %v1928, %v2009
  %v2018 = vadd.f32 %v1929, %v2011
  %v2019 = vmul.f32 %v2015, 0.5
  %v2020 = vtanh.pop %v2019
  %v2021 = vadd.f32 %v2020, 1.0
  %v2022 = vmul.f32 %v2021, 0.5
  %v2023 = vmul.f32 %v2016, 0.5
  %v2024 = vtanh.pop %v2023
  %v2025 = vadd.f32 %v2024, 1.0
  %v2026 = vmul.f32 %v2025, 0.5
  %v2027 = vtanh.pop %v2017
  %v2028 = vmul.f32 %v2018, 0.5
  %v2029 = vtanh.pop %v2028
  %v2030 = vadd.f32 %v2029, 1.0
  %v2031 = vmul.f32 %v2030, 0.5
  %v2032 = vmul.f32 %v2026, %v1931
  %v2033 = vmul.f32 %v2022, %v2027
  %v2034 = vadd.f32 %v2032, %v2033
  %v2035 = vtanh.pop %v2034
  %v2036 = vmul.f32 %v2031, %v2035
  %2037 = vst [vmem:[#allocation4] sm:$0xff] %v2036
  %2038 = vst [vmem:[#allocation5] sm:$0xff] %v2034
  %s2039 = scalar_lea.vmem %s0, 224
  %v2040 = vld [vmem:[%s2039] sm:$0xff]
  %v2041 = vld [vmem:[%s2039 + $0x8] sm:$0xff]
  %v2042 = vld [vmem:[%s2039 + $0x10] sm:$0xff]
  %v2043 = vld [vmem:[%s2039 + $0x18] sm:$0xff]
  %v2044 = vld [vmem:[#allocation2] sm:$0xff]
  %v2045 = vld [vmem:[#allocation3] sm:$0xff]
  %v2046 = vpack.c.bf16 %v2044, %v2044
  %2047 = vmatprep.subr.bf16.mxu0 %v228
  %2048 = vmatpush1.bf16.msra.mxu0 %v227
  %2049 = vmatprep.subr.bf16.mxu0 %v232
  %2050 = vmatpush1.bf16.msra.mxu0 %v231
  %2051 = vmatprep.subr.bf16.mxu0 %v236
  %2052 = vmatpush1.bf16.msra.mxu0 %v235
  %2053 = vmatprep.subr.bf16.mxu0 %v240
  %2054 = vmatpush1.bf16.msra.mxu0 %v239
  %2055 = vmatprep.subr.bf16.mxu0 %v244
  %2056 = vmatpush1.bf16.msra.mxu0 %v243
  %2057 = vmatprep.subr.bf16.mxu0 %v248
  %2058 = vmatpush1.bf16.msra.mxu0 %v247
  %2059 = vmatprep.subr.bf16.mxu0 %v252
  %2060 = vmatpush1.bf16.msra.mxu0 %v251
  %2061 = vmatprep.subr.bf16.mxu0 %v256
  %2062 = vmatpush1.bf16.msra.mxu0 %v255
  %2063 = vmatprep.subr.bf16.mxu0 0
  %2064 = vmatpush1.bf16.msra.mxu0 0
  %2065 = vmatprep.subr.bf16.mxu0 0
  %2066 = vmatpush1.bf16.msra.mxu0 0
  %2067 = vmatprep.subr.bf16.mxu0 0
  %2068 = vmatpush1.bf16.msra.mxu0 0
  %2069 = vmatprep.subr.bf16.mxu0 0
  %2070 = vmatpush1.bf16.msra.mxu0 0
  %2071 = vmatprep.subr.bf16.mxu0 0
  %2072 = vmatpush1.bf16.msra.mxu0 0
  %2073 = vmatprep.subr.bf16.mxu0 0
  %2074 = vmatpush1.bf16.msra.mxu0 0
  %2075 = vmatprep.subr.bf16.mxu0 0
  %2076 = vmatpush1.bf16.msra.mxu0 0
  %2077 = vmatprep.subr.bf16.mxu0 0
  %2078 = vmatpush1.bf16.msra.mxu0 0
  %2079 = vmatprep.mubr.bf16.mxu0 0
  %2080 = vmatmul.mubr.bf16.gmra.mrb[0].mxu0 %v2046
  %v2081 = vpop.f32.mrb[0].mxu0
  %v2082 = vadd.f32 0.0, %v2081
  %v2083 = vpop.f32.mrb[0].mxu0
  %v2084 = vadd.f32 0.0, %v2083
  %v2085 = vpop.f32.mrb[0].mxu0
  %v2086 = vpop.f32.mrb[0].mxu0
  %2087 = vdwg.mxu0
  %2088 = vmatprep.subr.bf16.mxu0 %v230
  %2089 = vmatpush1.bf16.msra.mxu0 %v229
  %2090 = vmatprep.subr.bf16.mxu0 %v234
  %2091 = vmatpush1.bf16.msra.mxu0 %v233
  %2092 = vmatprep.subr.bf16.mxu0 %v238
  %2093 = vmatpush1.bf16.msra.mxu0 %v237
  %2094 = vmatprep.subr.bf16.mxu0 %v242
  %2095 = vmatpush1.bf16.msra.mxu0 %v241
  %2096 = vmatprep.subr.bf16.mxu0 %v246
  %2097 = vmatpush1.bf16.msra.mxu0 %v245
  %2098 = vmatprep.subr.bf16.mxu0 %v250
  %2099 = vmatpush1.bf16.msra.mxu0 %v249
  %2100 = vmatprep.subr.bf16.mxu0 %v254
  %2101 = vmatpush1.bf16.msra.mxu0 %v253
  %2102 = vmatprep.subr.bf16.mxu0 %v258
  %2103 = vmatpush1.bf16.msra.mxu0 %v257
  %2104 = vmatprep.subr.bf16.mxu0 0
  %2105 = vmatpush1.bf16.msra.mxu0 0
  %2106 = vmatprep.subr.bf16.mxu0 0
  %2107 = vmatpush1.bf16.msra.mxu0 0
  %2108 = vmatprep.subr.bf16.mxu0 0
  %2109 = vmatpush1.bf16.msra.mxu0 0
  %2110 = vmatprep.subr.bf16.mxu0 0
  %2111 = vmatpush1.bf16.msra.mxu0 0
  %2112 = vmatprep.subr.bf16.mxu0 0
  %2113 = vmatpush1.bf16.msra.mxu0 0
  %2114 = vmatprep.subr.bf16.mxu0 0
  %2115 = vmatpush1.bf16.msra.mxu0 0
  %2116 = vmatprep.subr.bf16.mxu0 0
  %2117 = vmatpush1.bf16.msra.mxu0 0
  %2118 = vmatprep.subr.bf16.mxu0 0
  %2119 = vmatpush1.bf16.msra.mxu0 0
  %2120 = vmatprep.mubr.bf16.mxu0 0
  %2121 = vmatmul.mubr.bf16.gmra.mrb[0].mxu0 %v2046
  %v2122 = vpop.f32.mrb[0].mxu0
  %v2123 = vadd.f32 0.0, %v2122
  %v2124 = vpop.f32.mrb[0].mxu0
  %v2125 = vadd.f32 0.0, %v2124
  %v2126 = vpop.f32.mrb[0].mxu0
  %v2127 = vpop.f32.mrb[0].mxu0
  %2128 = vdwg.mxu0
  %v2129 = vadd.f32 %v2040, %v2082
  %v2130 = vadd.f32 %v2041, %v2084
  %v2131 = vadd.f32 %v2042, %v2123
  %v2132 = vadd.f32 %v2043, %v2125
  %v2133 = vmul.f32 %v2129, 0.5
  %v2134 = vtanh.pop %v2133
  %v2135 = vadd.f32 %v2134, 1.0
  %v2136 = vmul.f32 %v2135, 0.5
  %v2137 = vmul.f32 %v2130, 0.5
  %v2138 = vtanh.pop %v2137
  %v2139 = vadd.f32 %v2138, 1.0
  %v2140 = vmul.f32 %v2139, 0.5
  %v2141 = vtanh.pop %v2131
  %v2142 = vmul.f32 %v2132, 0.5
  %v2143 = vtanh.pop %v2142
  %v2144 = vadd.f32 %v2143, 1.0
  %v2145 = vmul.f32 %v2144, 0.5
  %v2146 = vmul.f32 %v2140, %v2045
  %v2147 = vmul.f32 %v2136, %v2141
  %v2148 = vadd.f32 %v2146, %v2147
  %v2149 = vtanh.pop %v2148
  %v2150 = vmul.f32 %v2145, %v2149
  %2151 = vst [vmem:[#allocation2] sm:$0xff] %v2150
  %2152 = vst [vmem:[#allocation3] sm:$0xff] %v2148
  %v2153 = vld [vmem:[%s48] sm:$0xff]
  %v2154 = vld [vmem:[%s48 + $0x8] sm:$0xff]
  %v2155 = vld [vmem:[%s48 + $0x10] sm:$0xff]
  %v2156 = vld [vmem:[%s48 + $0x18] sm:$0xff]
  %v2157 = vld [vmem:[#allocation4] sm:$0xff]
  %v2158 = vld [vmem:[#allocation5] sm:$0xff]
  %v2159 = vpack.c.bf16 %v2157, %v2157
  %2160 = vmatprep.subr.bf16.mxu0 %v502
  %2161 = vmatpush1.bf16.msra.mxu0 %v501
  %2162 = vmatprep.subr.bf16.mxu0 %v506
  %2163 = vmatpush1.bf16.msra.mxu0 %v505
  %2164 = vmatprep.subr.bf16.mxu0 %v510
  %2165 = vmatpush1.bf16.msra.mxu0 %v509
  %2166 = vmatprep.subr.bf16.mxu0 %v514
  %2167 = vmatpush1.bf16.msra.mxu0 %v513
  %2168 = vmatprep.subr.bf16.mxu0 %v518
  %2169 = vmatpush1.bf16.msra.mxu0 %v517
  %2170 = vmatprep.subr.bf16.mxu0 %v522
  %2171 = vmatpush1.bf16.msra.mxu0 %v521
  %2172 = vmatprep.subr.bf16.mxu0 %v526
  %2173 = vmatpush1.bf16.msra.mxu0 %v525
  %2174 = vmatprep.subr.bf16.mxu0 %v530
  %2175 = vmatpush1.bf16.msra.mxu0 %v529
  %2176 = vmatprep.subr.bf16.mxu0 0
  %2177 = vmatpush1.bf16.msra.mxu0 0
  %2178 = vmatprep.subr.bf16.mxu0 0
  %2179 = vmatpush1.bf16.msra.mxu0 0
  %2180 = vmatprep.subr.bf16.mxu0 0
  %2181 = vmatpush1.bf16.msra.mxu0 0
  %2182 = vmatprep.subr.bf16.mxu0 0
  %2183 = vmatpush1.bf16.msra.mxu0 0
  %2184 = vmatprep.subr.bf16.mxu0 0
  %2185 = vmatpush1.bf16.msra.mxu0 0
  %2186 = vmatprep.subr.bf16.mxu0 0
  %2187 = vmatpush1.bf16.msra.mxu0 0
  %2188 = vmatprep.subr.bf16.mxu0 0
  %2189 = vmatpush1.bf16.msra.mxu0 0
  %2190 = vmatprep.subr.bf16.mxu0 0
  %2191 = vmatpush1.bf16.msra.mxu0 0
  %2192 = vmatprep.mubr.bf16.mxu0 0
  %2193 = vmatmul.mubr.bf16.gmra.mrb[0].mxu0 %v2159
  %v2194 = vpop.f32.mrb[0].mxu0
  %v2195 = vadd.f32 0.0, %v2194
  %v2196 = vpop.f32.mrb[0].mxu0
  %v2197 = vadd.f32 0.0, %v2196
  %v2198 = vpop.f32.mrb[0].mxu0
  %v2199 = vpop.f32.mrb[0].mxu0
  %2200 = vdwg.mxu0
  %2201 = vmatprep.subr.bf16.mxu0 %v504
  %2202 = vmatpush1.bf16.msra.mxu0 %v503
  %2203 = vmatprep.subr.bf16.mxu0 %v508
  %2204 = vmatpush1.bf16.msra.mxu0 %v507
  %2205 = vmatprep.subr.bf16.mxu0 %v512
  %2206 = vmatpush1.bf16.msra.mxu0 %v511
  %2207 = vmatprep.subr.bf16.mxu0 %v516
  %2208 = vmatpush1.bf16.msra.mxu0 %v515
  %2209 = vmatprep.subr.bf16.mxu0 %v520
  %2210 = vmatpush1.bf16.msra.mxu0 %v519
  %2211 = vmatprep.subr.bf16.mxu0 %v524
  %2212 = vmatpush1.bf16.msra.mxu0 %v523
  %2213 = vmatprep.subr.bf16.mxu0 %v528
  %2214 = vmatpush1.bf16.msra.mxu0 %v527
  %2215 = vmatprep.subr.bf16.mxu0 %v532
  %2216 = vmatpush1.bf16.msra.mxu0 %v531
  %2217 = vmatprep.subr.bf16.mxu0 0
  %2218 = vmatpush1.bf16.msra.mxu0 0
  %2219 = vmatprep.subr.bf16.mxu0 0
  %2220 = vmatpush1.bf16.msra.mxu0 0
  %2221 = vmatprep.subr.bf16.mxu0 0
  %2222 = vmatpush1.bf16.msra.mxu0 0
  %2223 = vmatprep.subr.bf16.mxu0 0
  %2224 = vmatpush1.bf16.msra.mxu0 0
  %2225 = vmatprep.subr.bf16.mxu0 0
  %2226 = vmatpush1.bf16.msra.mxu0 0
  %2227 = vmatprep.subr.bf16.mxu0 0
  %2228 = vmatpush1.bf16.msra.mxu0 0
  %2229 = vmatprep.subr.bf16.mxu0 0
  %2230 = vmatpush1.bf16.msra.mxu0 0
  %2231 = vmatprep.subr.bf16.mxu0 0
  %2232 = vmatpush1.bf16.msra.mxu0 0
  %2233 = vmatprep.mubr.bf16.mxu0 0
  %2234 = vmatmul.mubr.bf16.gmra.mrb[0].mxu0 %v2159
  %v2235 = vpop.f32.mrb[0].mxu0
  %v2236 = vadd.f32 0.0, %v2235
  %v2237 = vpop.f32.mrb[0].mxu0
  %v2238 = vadd.f32 0.0, %v2237
  %v2239 = vpop.f32.mrb[0].mxu0
  %v2240 = vpop.f32.mrb[0].mxu0
  %2241 = vdwg.mxu0
  %v2242 = vadd.f32 %v2153, %v2195
  %v2243 = vadd.f32 %v2154, %v2197
  %v2244 = vadd.f32 %v2155, %v2236
  %v2245 = vadd.f32 %v2156, %v2238
  %v2246 = vmul.f32 %v2242, 0.5
  %v2247 = vtanh.pop %v2246
  %v2248 = vadd.f32 %v2247, 1.0
  %v2249 = vmul.f32 %v2248, 0.5
  %v2250 = vmul.f32 %v2243, 0.5
  %v2251 = vtanh.pop %v2250
  %v2252 = vadd.f32 %v2251, 1.0
  %v2253 = vmul.f32 %v2252, 0.5
  %v2254 = vtanh.pop %v2244
  %v2255 = vmul.f32 %v2245, 0.5
  %v2256 = vtanh.pop %v2255
  %v2257 = vadd.f32 %v2256, 1.0
  %v2258 = vmul.f32 %v2257, 0.5
  %v2259 = vmul.f32 %v2253, %v2158
  %v2260 = vmul.f32 %v2249, %v2254
  %v2261 = vadd.f32 %v2259, %v2260
  %v2262 = vtanh.pop %v2261
  %v2263 = vmul.f32 %v2258, %v2262
  %2264 = vst [vmem:[#allocation4] sm:$0xff] %v2263
  %2265 = vst [vmem:[#allocation5] sm:$0xff] %v2261
  // Predicated region
  $region34: #{bilstm_forward.1} parent=0 // pred_check
    %p2266 = pneg %p52
  $region35: #{bilstm_forward.1} parent=0 // pred_check_branch
    %2268 = sbr.rel (%p2266) target = $region37
  $region36: #{bilstm_forward.1} parent=0 // pred_region
    %v2269 = vld [vmem:[#allocation4] sm:$0xff]
    %v2270 = vpack.c.bf16 %v2269, %v2269
    %v2271 = vld [vmem:[%s4] sm:$0xf]
    %v2272 = vld [vmem:[%s4 + $0x4] sm:$0xf]
    %v2273 = vld [vmem:[%s4 + $0x8] sm:$0xf]
    %v2274 = vld [vmem:[%s4 + $0xc] sm:$0xf]
    %v2275 = vld [vmem:[%s4 + $0x10] sm:$0xf]
    %v2276 = vld [vmem:[%s4 + $0x14] sm:$0xf]
    %v2277 = vld [vmem:[%s4 + $0x18] sm:$0xf]
    %v2278 = vld [vmem:[%s4 + $0x1c] sm:$0xf]
    %v2279 = vld [vmem:[%s4 + $0x20] sm:$0xf]
    %v2280 = vld [vmem:[%s4 + $0x24] sm:$0xf]
    %v2281 = vld [vmem:[%s4 + $0x28] sm:$0xf]
    %v2282 = vld [vmem:[%s4 + $0x2c] sm:$0xf]
    %v2283 = vld [vmem:[%s4 + $0x30] sm:$0xf]
    %v2284 = vld [vmem:[%s4 + $0x34] sm:$0xf]
    %v2285 = vld [vmem:[%s4 + $0x38] sm:$0xf]
    %v2286 = vld [vmem:[%s4 + $0x3c] sm:$0xf]
    %v2287 = vld [vmem:[#allocation2] sm:$0xff]
    %v2288 = vpack.c.bf16 %v2287, %v2287
    %v2289 = vld [vmem:[%s5] sm:$0xf]
    %v2290 = vld [vmem:[%s5 + $0x4] sm:$0xf]
    %v2291 = vld [vmem:[%s5 + $0x8] sm:$0xf]
    %v2292 = vld [vmem:[%s5 + $0xc] sm:$0xf]
    %v2293 = vld [vmem:[%s5 + $0x10] sm:$0xf]
    %v2294 = vld [vmem:[%s5 + $0x14] sm:$0xf]
    %v2295 = vld [vmem:[%s5 + $0x18] sm:$0xf]
    %v2296 = vld [vmem:[%s5 + $0x1c] sm:$0xf]
    %v2297 = vld [vmem:[%s5 + $0x20] sm:$0xf]
    %v2298 = vld [vmem:[%s5 + $0x24] sm:$0xf]
    %v2299 = vld [vmem:[%s5 + $0x28] sm:$0xf]
    %v2300 = vld [vmem:[%s5 + $0x2c] sm:$0xf]
    %v2301 = vld [vmem:[%s5 + $0x30] sm:$0xf]
    %v2302 = vld [vmem:[%s5 + $0x34] sm:$0xf]
    %v2303 = vld [vmem:[%s5 + $0x38] sm:$0xf]
    %v2304 = vld [vmem:[%s5 + $0x3c] sm:$0xf]
    %v2321 = vunpack.c.l.b16 %v2289
    %v2322 = vunpack.c.l.b16 %v2290
    %v2323 = vunpack.c.l.b16 %v2291
    %v2324 = vunpack.c.l.b16 %v2292
    %v2325 = vunpack.c.l.b16 %v2293
    %v2326 = vunpack.c.l.b16 %v2294
    %v2327 = vunpack.c.l.b16 %v2295
    %v2328 = vunpack.c.l.b16 %v2296
    %v2329 = vunpack.c.l.b16 %v2297
    %v2330 = vunpack.c.l.b16 %v2298
    %v2331 = vunpack.c.l.b16 %v2299
    %v2332 = vunpack.c.l.b16 %v2300
    %v2333 = vunpack.c.l.b16 %v2301
    %v2334 = vunpack.c.l.b16 %v2302
    %v2335 = vunpack.c.l.b16 %v2303
    %v2336 = vunpack.c.l.b16 %v2304
    %v2337 = vpack.c.b16 %v2322, %v2321
    %v2338 = vpack.c.b16 %v2324, %v2323
    %v2339 = vpack.c.b16 %v2326, %v2325
    %v2340 = vpack.c.b16 %v2328, %v2327
    %v2341 = vpack.c.b16 %v2330, %v2329
    %v2342 = vpack.c.b16 %v2332, %v2331
    %v2343 = vpack.c.b16 %v2334, %v2333
    %v2344 = vpack.c.b16 %v2336, %v2335
    %2353 = vmatprep.subr.bf16.mxu0 0
    %2354 = vmatpush1.bf16.msra.mxu0 %v2337
    %2355 = vmatprep.subr.bf16.mxu0 0
    %2356 = vmatpush1.bf16.msra.mxu0 %v2338
    %2357 = vmatprep.subr.bf16.mxu0 0
    %2358 = vmatpush1.bf16.msra.mxu0 %v2339
    %2359 = vmatprep.subr.bf16.mxu0 0
    %2360 = vmatpush1.bf16.msra.mxu0 %v2340
    %2361 = vmatprep.subr.bf16.mxu0 0
    %2362 = vmatpush1.bf16.msra.mxu0 %v2341
    %2363 = vmatprep.subr.bf16.mxu0 0
    %2364 = vmatpush1.bf16.msra.mxu0 %v2342
    %2365 = vmatprep.subr.bf16.mxu0 0
    %2366 = vmatpush1.bf16.msra.mxu0 %v2343
    %2367 = vmatprep.subr.bf16.mxu0 0
    %2368 = vmatpush1.bf16.msra.mxu0 %v2344
    %2369 = vmatprep.subr.bf16.mxu0 0
    %2370 = vmatpush1.bf16.msra.mxu0 0
    %2371 = vmatprep.subr.bf16.mxu0 0
    %2372 = vmatpush1.bf16.msra.mxu0 0
    %2373 = vmatprep.subr.bf16.mxu0 0
    %2374 = vmatpush1.bf16.msra.mxu0 0
    %2375 = vmatprep.subr.bf16.mxu0 0
    %2376 = vmatpush1.bf16.msra.mxu0 0
    %2377 = vmatprep.subr.bf16.mxu0 0
    %2378 = vmatpush1.bf16.msra.mxu0 0
    %2379 = vmatprep.subr.bf16.mxu0 0
    %2380 = vmatpush1.bf16.msra.mxu0 0
    %2381 = vmatprep.subr.bf16.mxu0 0
    %2382 = vmatpush1.bf16.msra.mxu0 0
    %2383 = vmatprep.subr.bf16.mxu0 0
    %2384 = vmatpush1.bf16.msra.mxu0 0
    %2385 = vmatprep.mubr.bf16.mxu0 0
    %2386 = vmatmul.mubr.bf16.gmra.mrb[0].mxu0 %v2288
    %v2387 = vpop.f32.mrb[0].mxu0
    %v2388 = vadd.f32 0.0, %v2387
    %v2389 = vpop.f32.mrb[0].mxu0
    %v2390 = vpop.f32.mrb[0].mxu0
    %v2391 = vpop.f32.mrb[0].mxu0
    %2392 = vdwg.mxu0
    %v2409 = vunpack.c.l.b16 %v2271
    %v2410 = vunpack.c.l.b16 %v2272
    %v2411 = vunpack.c.l.b16 %v2273
    %v2412 = vunpack.c.l.b16 %v2274
    %v2413 = vunpack.c.l.b16 %v2275
    %v2414 = vunpack.c.l.b16 %v2276
    %v2415 = vunpack.c.l.b16 %v2277
    %v2416 = vunpack.c.l.b16 %v2278
    %v2417 = vunpack.c.l.b16 %v2279
    %v2418 = vunpack.c.l.b16 %v2280
    %v2419 = vunpack.c.l.b16 %v2281
    %v2420 = vunpack.c.l.b16 %v2282
    %v2421 = vunpack.c.l.b16 %v2283
    %v2422 = vunpack.c.l.b16 %v2284
    %v2423 = vunpack.c.l.b16 %v2285
    %v2424 = vunpack.c.l.b16 %v2286
    %v2425 = vpack.c.b16 %v2410, %v2409
    %v2426 = vpack.c.b16 %v2412, %v2411
    %v2427 = vpack.c.b16 %v2414, %v2413
    %v2428 = vpack.c.b16 %v2416, %v2415
    %v2429 = vpack.c.b16 %v2418, %v2417
    %v2430 = vpack.c.b16 %v2420, %v2419
    %v2431 = vpack.c.b16 %v2422, %v2421
    %v2432 = vpack.c.b16 %v2424, %v2423
    %2441 = vmatprep.subr.bf16.mxu0 0
    %2442 = vmatpush1.bf16.msra.mxu0 %v2425
    %2443 = vmatprep.subr.bf16.mxu0 0
    %2444 = vmatpush1.bf16.msra.mxu0 %v2426
    %2445 = vmatprep.subr.bf16.mxu0 0
    %2446 = vmatpush1.bf16.msra.mxu0 %v2427
    %2447 = vmatprep.subr.bf16.mxu0 0
    %2448 = vmatpush1.bf16.msra.mxu0 %v2428
    %2449 = vmatprep.subr.bf16.mxu0 0
    %2450 = vmatpush1.bf16.msra.mxu0 %v2429
    %2451 = vmatprep.subr.bf16.mxu0 0
    %2452 = vmatpush1.bf16.msra.mxu0 %v2430
    %2453 = vmatprep.subr.bf16.mxu0 0
    %2454 = vmatpush1.bf16.msra.mxu0 %v2431
    %2455 = vmatprep.subr.bf16.mxu0 0
    %2456 = vmatpush1.bf16.msra.mxu0 %v2432
    %2457 = vmatprep.subr.bf16.mxu0 0
    %2458 = vmatpush1.bf16.msra.mxu0 0
    %2459 = vmatprep.subr.bf16.mxu0 0
    %2460 = vmatpush1.bf16.msra.mxu0 0
    %2461 = vmatprep.subr.bf16.mxu0 0
    %2462 = vmatpush1.bf16.msra.mxu0 0
    %2463 = vmatprep.subr.bf16.mxu0 0
    %2464 = vmatpush1.bf16.msra.mxu0 0
    %2465 = vmatprep.subr.bf16.mxu0 0
    %2466 = vmatpush1.bf16.msra.mxu0 0
    %2467 = vmatprep.subr.bf16.mxu0 0
    %2468 = vmatpush1.bf16.msra.mxu0 0
    %2469 = vmatprep.subr.bf16.mxu0 0
    %2470 = vmatpush1.bf16.msra.mxu0 0
    %2471 = vmatprep.subr.bf16.mxu0 0
    %2472 = vmatpush1.bf16.msra.mxu0 0
    %2473 = vmatprep.mubr.bf16.mxu0 0
    %2474 = vmatmul.mubr.bf16.gmra.mrb[0].mxu0 %v2270
    %v2475 = vpop.f32.mrb[0].mxu0
    %v2476 = vadd.f32 %v2388, %v2475
    %v2477 = vpop.f32.mrb[0].mxu0
    %v2478 = vpop.f32.mrb[0].mxu0
    %v2479 = vpop.f32.mrb[0].mxu0
    %2480 = vdwg.mxu0
    %v2481 = vld [vmem:[%s6] sm:$0xff]
    %v2482 = vadd.f32 %v2476, %v2481
    %2483 = vst [vmem:[%s7] sm:$0xff] %v2482
  $region37: #{bilstm_forward.1} parent=0 // pred_fallthru
    _
  // Predicated region
  $region38: #{bilstm_forward.1} parent=0 // pred_check
    _
  $region39: #{bilstm_forward.1} parent=0 // pred_check_branch
    %2485 = sbr.rel (0) target = $region41
  $region40: #{bilstm_forward.1} parent=0 // pred_region
    _
  $region41: #{bilstm_forward.1} parent=0 // pred_fallthru
    _
  // Predicated region
  $region42: #{bilstm_forward.1} parent=0 // pred_check
    _
  $region43: #{bilstm_forward.1} parent=0 // pred_check_branch
    %2487 = sbr.rel (0) target = $region45
  $region44: #{bilstm_forward.1} parent=0 // pred_region
    _
  $region45: #{bilstm_forward.1} parent=0 // pred_fallthru
    _

</llo_original>
